<compile_context>
chip_gen: v7x
topology: tpu7x:2x2x1
jax: 0.10.0
libtpu: 0.0.40
codegen_flags: <defaults>
</compile_context>

<pallas_src>
import functools

import jax
import jax.numpy as jnp
import numpy as np
from jax.experimental import pallas as pl
from jax.experimental.pallas import tpu as pltpu


def _hfa_kernel(x_ref, *rest, C, TH, W, tiled):
    # x_ref : (1, C, TH, W)  current row tile (all input channels)
    # tiled : top_ref, bot_ref -> (1, C, 8, W) 8-row blocks just above / below the tile
    # w_ref : (C*C*9,) f32 in SMEM, flattened OIHW conv weights
    # b_ref : (C,)     f32 in SMEM
    # o_ref : (1, C, TH, W)
    # xpad  : (C, TH+2, W+2) f32 VMEM scratch (zero-padded tile)
    if tiled:
        top_ref, bot_ref, w_ref, b_ref, o_ref, xpad_ref = rest
    else:
        w_ref, b_ref, o_ref, xpad_ref = rest

    # ---- build the zero-padded tile in VMEM (no HBM pad pass, input DMA'd once) ----
    xpad_ref[...] = jnp.zeros_like(xpad_ref)
    xpad_ref[:, 1:TH + 1, 1:W + 1] = x_ref[0].astype(jnp.float32)

    if tiled:
        t = pl.program_id(1)
        nt = pl.num_programs(1)

        @pl.when(t > 0)
        def _():
            # last row of the 8-row block directly above this tile
            xpad_ref[:, 0:1, 1:W + 1] = top_ref[0, :, 7:8, :].astype(jnp.float32)

        @pl.when(t < nt - 1)
        def _():
            # first row of the 8-row block directly below this tile
            xpad_ref[:, TH + 1:TH + 2, 1:W + 1] = bot_ref[0, :, 0:1, :].astype(jnp.float32)

    # ---- 9 shifted (C, TH, W) views, materialised once and reused for all channels ----
    taps = [(kh, kw) for kh in range(3) for kw in range(3)]
    patches = [xpad_ref[:, kh:kh + TH, kw:kw + W] for kh, kw in taps]
    center = patches[4]                      # the (1,1) tap == x in f32

    # ---- conv as per-output-channel VPU FMAs + fused hf / sigmoid / residual ----
    for co in range(C):
        acc = jnp.full((TH, W), b_ref[co], dtype=jnp.float32)
        for p, (kh, kw) in enumerate(taps):
            patch = patches[p]
            for ci in range(C):
                w_s = w_ref[((co * C + ci) * 3 + kh) * 3 + kw]   # SMEM scalar
                acc = acc + w_s * patch[ci]
        xc = center[co]
        hf = acc - xc
        o_ref[0, co] = (xc + jax.nn.sigmoid(hf) * hf).astype(o_ref.dtype)


def _pick_row_tile(H, W, C, itemsize, max_step_bytes):
    """Largest row tile (multiple of 8 dividing H, or H itself) fitting the VMEM budget."""
    def step_bytes(th):
        tiles = 4 * C * th * W * itemsize                 # in + out, double-buffered
        pad = C * (th + 2) * (W + 2) * 4                  # padded scratch
        work = 9 * C * th * W * 4                         # shifted f32 views
        return tiles + pad + work

    if step_bytes(H) <= max_step_bytes:
        return H, False                                   # whole image per step, no halos
    if H % 8 == 0:
        fits = [th for th in range(8, H, 8) if H % th == 0 and step_bytes(th) <= max_step_bytes]
        if fits:
            return max(fits), True
    # TODO(synk): no fitting 8-aligned row tile (odd H or extreme W*C); fall back to
    # whole-image blocks and rely on vmem_limit_bytes (could additionally tile W).
    return H, False


def high_frequency_attention(x_nchw, weight_oihw, bias, *, row_tile=None,
                             max_step_bytes=8 * 1024 * 1024):
    """x_nchw: (N, C, H, W); weight_oihw: (C, C, 3, 3); bias: (C,). Returns NCHW."""
    N, C, H, W = x_nchw.shape
    itemsize = jnp.dtype(x_nchw.dtype).itemsize

    if row_tile is None:
        TH, tiled = _pick_row_tile(H, W, C, itemsize, max_step_bytes)
    else:
        assert H % row_tile == 0 and (row_tile == H or row_tile % 8 == 0)
        TH, tiled = row_tile, row_tile < H
    HT = H // TH

    w_flat = weight_oihw.astype(jnp.float32).reshape(-1)   # [co, ci, kh, kw] row-major
    b_flat = bias.astype(jnp.float32).reshape(-1)

    in_specs = [pl.BlockSpec((1, C, TH, W), lambda n, t: (n, 0, t, 0))]
    operands = [x_nchw]
    if tiled:
        hb = TH // 8          # 8-row blocks per tile
        nhb = H // 8          # total 8-row blocks in the image
        in_specs += [
            # 8-row block whose LAST row is the halo row above the tile (masked at t==0)
            pl.BlockSpec((1, C, 8, W),
                         lambda n, t: (n, 0, jnp.maximum(t * hb - 1, 0), 0)),
            # 8-row block whose FIRST row is the halo row below the tile (masked at t==last)
            pl.BlockSpec((1, C, 8, W),
                         lambda n, t: (n, 0, jnp.minimum((t + 1) * hb, nhb - 1), 0)),
        ]
        operands += [x_nchw, x_nchw]
    in_specs += [
        pl.BlockSpec(memory_space=pltpu.MemorySpace.SMEM),   # conv weights (scalars)
        pl.BlockSpec(memory_space=pltpu.MemorySpace.SMEM),   # bias
    ]
    operands += [w_flat, b_flat]

    kernel = functools.partial(_hfa_kernel, C=C, TH=TH, W=W, tiled=tiled)

    return pl.pallas_call(
        kernel,
        out_shape=jax.ShapeDtypeStruct((N, C, H, W), x_nchw.dtype),
        grid_spec=pltpu.PrefetchScalarGridSpec(
            num_scalar_prefetch=0,
            grid=(N, HT),
            in_specs=in_specs,
            out_specs=pl.BlockSpec((1, C, TH, W), lambda n, t: (n, 0, t, 0)),
            scratch_shapes=[pltpu.VMEM((C, TH + 2, W + 2), jnp.float32)],
        ),
        compiler_params=pltpu.CompilerParams(
            dimension_semantics=("parallel", "parallel"),
            vmem_limit_bytes=32 * 1024 * 1024,
        ),
    )(*operands)


def _reference(x_nchw, weight_oihw, bias):
    """Plain-JAX reference matching PyTorch Conv2d(C, C, 3, padding=1) + HFA epilogue."""
    conv = jax.lax.conv_general_dilated(
        x_nchw, weight_oihw,
        window_strides=(1, 1), padding=((1, 1), (1, 1)),
        dimension_numbers=("NCHW", "OIHW", "NCHW"),
    ) + bias.reshape(1, -1, 1, 1)
    hf = conv - x_nchw
    return x_nchw + jax.nn.sigmoid(hf) * hf


if __name__ == "__main__":
    key = jax.random.PRNGKey(0)
    kx, kw, kb, kx2 = jax.random.split(key, 4)

    N, C, H, W = 2, 4, 16, 16
    x = jax.random.normal(kx, (N, C, H, W), dtype=jnp.float32)

    # Deterministic Conv2d-style init: uniform(-1/sqrt(fan_in), 1/sqrt(fan_in))
    fan_in = C * 3 * 3
    bound = 1.0 / np.sqrt(fan_in)
    weight = jax.random.uniform(kw, (C, C, 3, 3), jnp.float32, -bound, bound)
    bias = jax.random.uniform(kb, (C,), jnp.float32, -bound, bound)

    out = jax.block_until_ready(high_frequency_attention(x, weight, bias))
    assert out.shape == (N, C, H, W)
    np.testing.assert_allclose(np.asarray(out), np.asarray(_reference(x, weight, bias)),
                               rtol=1e-5, atol=1e-5)

    # Also exercise the halo'd row-tiled path (selected automatically for large images).
    x2 = jax.random.normal(kx2, (1, C, 32, 16), dtype=jnp.float32)
    out2 = jax.block_until_ready(high_frequency_attention(x2, weight, bias, row_tile=8))
    np.testing.assert_allclose(np.asarray(out2), np.asarray(_reference(x2, weight, bias)),
                               rtol=1e-5, atol=1e-5)

    print("KERNEL_OK")
</pallas_src>

<mosaic_0001>
module attributes {stable_mosaic.version = 11 : i64} {
  func.func @_hfa_kernel(%arg0: i32, %arg1: i32, %arg2: memref<1x4x16x16xf32, #tpu.memory_space<vmem>>, %arg3: memref<144xf32, #tpu.memory_space<smem>>, %arg4: memref<4xf32, #tpu.memory_space<smem>>, %arg5: memref<1x4x16x16xf32, #tpu.memory_space<vmem>>, %arg6: memref<4x18x18xf32, #tpu.memory_space<vmem>>) attributes {dimension_semantics = [#tpu.dimension_semantics<parallel>, #tpu.dimension_semantics<parallel>], iteration_bounds = array<i64: 2, 1>, scalar_prefetch = 0 : i64, scratch_operands = 1 : i64, tpu.core_type = #tpu.core_type<tc>, window_params = [{transform_indices = @transform_0, window_bounds = array<i64: 1, 4, 16, 16>}, {transform_indices = @transform_1, window_bounds = array<i64: 144>}, {transform_indices = @transform_2, window_bounds = array<i64: 4>}, {transform_indices = @transform_3, window_bounds = array<i64: 1, 4, 16, 16>}]} {
    %cst = arith.constant 0.000000e+00 : f32
    %0 = vector.broadcast %cst : f32 to vector<4x18x18xf32>
    %c0 = arith.constant 0 : index
    %c0_0 = arith.constant 0 : index
    %c0_1 = arith.constant 0 : index
    %1 = vector.load %arg6[%c0, %c0_0, %c0_1] : memref<4x18x18xf32, #tpu.memory_space<vmem>>, vector<4x18x18xf32>
    tpu.vector_store %arg6[%c0, %c0_0, %c0_1], %0 {strides = array<i32>} : memref<4x18x18xf32, #tpu.memory_space<vmem>>, vector<4x18x18xf32>,
    %c0_2 = arith.constant 0 : index
    %c0_3 = arith.constant 0 : index
    %c0_4 = arith.constant 0 : index
    %c0_5 = arith.constant 0 : index
    %2 = vector.load %arg2[%c0_2, %c0_3, %c0_4, %c0_5] : memref<1x4x16x16xf32, #tpu.memory_space<vmem>>, vector<1x4x16x16xf32>
    %3 = vector.shape_cast %2 : vector<1x4x16x16xf32> to vector<4x16x16xf32>
    %c0_6 = arith.constant 0 : index
    %c1 = arith.constant 1 : index
    %c1_7 = arith.constant 1 : index
    %4 = vector.load %arg6[%c0_6, %c1, %c1_7] : memref<4x18x18xf32, #tpu.memory_space<vmem>>, vector<4x16x16xf32>
    tpu.vector_store %arg6[%c0_6, %c1, %c1_7], %3 {strides = array<i32>} : memref<4x18x18xf32, #tpu.memory_space<vmem>>, vector<4x16x16xf32>,
    %c0_8 = arith.constant 0 : index
    %c0_9 = arith.constant 0 : index
    %c0_10 = arith.constant 0 : index
    %5 = vector.load %arg6[%c0_8, %c0_9, %c0_10] : memref<4x18x18xf32, #tpu.memory_space<vmem>>, vector<4x16x16xf32>
    %c0_11 = arith.constant 0 : index
    %c0_12 = arith.constant 0 : index
    %c1_13 = arith.constant 1 : index
    %6 = vector.load %arg6[%c0_11, %c0_12, %c1_13] : memref<4x18x18xf32, #tpu.memory_space<vmem>>, vector<4x16x16xf32>
    %c0_14 = arith.constant 0 : index
    %c0_15 = arith.constant 0 : index
    %c2 = arith.constant 2 : index
    %7 = vector.load %arg6[%c0_14, %c0_15, %c2] : memref<4x18x18xf32, #tpu.memory_space<vmem>>, vector<4x16x16xf32>
    %c0_16 = arith.constant 0 : index
    %c1_17 = arith.constant 1 : index
    %c0_18 = arith.constant 0 : index
    %8 = vector.load %arg6[%c0_16, %c1_17, %c0_18] : memref<4x18x18xf32, #tpu.memory_space<vmem>>, vector<4x16x16xf32>
    %c0_19 = arith.constant 0 : index
    %c1_20 = arith.constant 1 : index
    %c1_21 = arith.constant 1 : index
    %9 = vector.load %arg6[%c0_19, %c1_20, %c1_21] : memref<4x18x18xf32, #tpu.memory_space<vmem>>, vector<4x16x16xf32>
    %c0_22 = arith.constant 0 : index
    %c1_23 = arith.constant 1 : index
    %c2_24 = arith.constant 2 : index
    %10 = vector.load %arg6[%c0_22, %c1_23, %c2_24] : memref<4x18x18xf32, #tpu.memory_space<vmem>>, vector<4x16x16xf32>
    %c0_25 = arith.constant 0 : index
    %c2_26 = arith.constant 2 : index
    %c0_27 = arith.constant 0 : index
    %11 = vector.load %arg6[%c0_25, %c2_26, %c0_27] : memref<4x18x18xf32, #tpu.memory_space<vmem>>, vector<4x16x16xf32>
    %c0_28 = arith.constant 0 : index
    %c2_29 = arith.constant 2 : index
    %c1_30 = arith.constant 1 : index
    %12 = vector.load %arg6[%c0_28, %c2_29, %c1_30] : memref<4x18x18xf32, #tpu.memory_space<vmem>>, vector<4x16x16xf32>
    %c0_31 = arith.constant 0 : index
    %c2_32 = arith.constant 2 : index
    %c2_33 = arith.constant 2 : index
    %13 = vector.load %arg6[%c0_31, %c2_32, %c2_33] : memref<4x18x18xf32, #tpu.memory_space<vmem>>, vector<4x16x16xf32>
    %c0_34 = arith.constant 0 : index
    %14 = memref.load %arg4[%c0_34] : memref<4xf32, #tpu.memory_space<smem>>
    %15 = vector.broadcast %14 : f32 to vector<16x16xf32>
    %c0_35 = arith.constant 0 : index
    %16 = memref.load %arg3[%c0_35] : memref<144xf32, #tpu.memory_space<smem>>
    %17 = vector.extract_strided_slice %5 {offsets = [0, 0, 0], sizes = [1, 16, 16], strides = [1, 1, 1]} : vector<4x16x16xf32> to vector<1x16x16xf32>
    %18 = vector.shape_cast %17 : vector<1x16x16xf32> to vector<16x16xf32>
    %19 = vector.broadcast %16 : f32 to vector<16x16xf32>
    %20 = arith.mulf %19, %18 : vector<16x16xf32>
    %21 = arith.addf %15, %20 : vector<16x16xf32>
    %c9 = arith.constant 9 : index
    %22 = memref.load %arg3[%c9] : memref<144xf32, #tpu.memory_space<smem>>
    %23 = vector.extract_strided_slice %5 {offsets = [1, 0, 0], sizes = [1, 16, 16], strides = [1, 1, 1]} : vector<4x16x16xf32> to vector<1x16x16xf32>
    %24 = vector.shape_cast %23 : vector<1x16x16xf32> to vector<16x16xf32>
    %25 = vector.broadcast %22 : f32 to vector<16x16xf32>
    %26 = arith.mulf %25, %24 : vector<16x16xf32>
    %27 = arith.addf %21, %26 : vector<16x16xf32>
    %c18 = arith.constant 18 : index
    %28 = memref.load %arg3[%c18] : memref<144xf32, #tpu.memory_space<smem>>
    %29 = vector.extract_strided_slice %5 {offsets = [2, 0, 0], sizes = [1, 16, 16], strides = [1, 1, 1]} : vector<4x16x16xf32> to vector<1x16x16xf32>
    %30 = vector.shape_cast %29 : vector<1x16x16xf32> to vector<16x16xf32>
    %31 = vector.broadcast %28 : f32 to vector<16x16xf32>
    %32 = arith.mulf %31, %30 : vector<16x16xf32>
    %33 = arith.addf %27, %32 : vector<16x16xf32>
    %c27 = arith.constant 27 : index
    %34 = memref.load %arg3[%c27] : memref<144xf32, #tpu.memory_space<smem>>
    %35 = vector.extract_strided_slice %5 {offsets = [3, 0, 0], sizes = [1, 16, 16], strides = [1, 1, 1]} : vector<4x16x16xf32> to vector<1x16x16xf32>
    %36 = vector.shape_cast %35 : vector<1x16x16xf32> to vector<16x16xf32>
    %37 = vector.broadcast %34 : f32 to vector<16x16xf32>
    %38 = arith.mulf %37, %36 : vector<16x16xf32>
    %39 = arith.addf %33, %38 : vector<16x16xf32>
    %c1_36 = arith.constant 1 : index
    %40 = memref.load %arg3[%c1_36] : memref<144xf32, #tpu.memory_space<smem>>
    %41 = vector.extract_strided_slice %6 {offsets = [0, 0, 0], sizes = [1, 16, 16], strides = [1, 1, 1]} : vector<4x16x16xf32> to vector<1x16x16xf32>
    %42 = vector.shape_cast %41 : vector<1x16x16xf32> to vector<16x16xf32>
    %43 = vector.broadcast %40 : f32 to vector<16x16xf32>
    %44 = arith.mulf %43, %42 : vector<16x16xf32>
    %45 = arith.addf %39, %44 : vector<16x16xf32>
    %c10 = arith.constant 10 : index
    %46 = memref.load %arg3[%c10] : memref<144xf32, #tpu.memory_space<smem>>
    %47 = vector.extract_strided_slice %6 {offsets = [1, 0, 0], sizes = [1, 16, 16], strides = [1, 1, 1]} : vector<4x16x16xf32> to vector<1x16x16xf32>
    %48 = vector.shape_cast %47 : vector<1x16x16xf32> to vector<16x16xf32>
    %49 = vector.broadcast %46 : f32 to vector<16x16xf32>
    %50 = arith.mulf %49, %48 : vector<16x16xf32>
    %51 = arith.addf %45, %50 : vector<16x16xf32>
    %c19 = arith.constant 19 : index
    %52 = memref.load %arg3[%c19] : memref<144xf32, #tpu.memory_space<smem>>
    %53 = vector.extract_strided_slice %6 {offsets = [2, 0, 0], sizes = [1, 16, 16], strides = [1, 1, 1]} : vector<4x16x16xf32> to vector<1x16x16xf32>
    %54 = vector.shape_cast %53 : vector<1x16x16xf32> to vector<16x16xf32>
    %55 = vector.broadcast %52 : f32 to vector<16x16xf32>
    %56 = arith.mulf %55, %54 : vector<16x16xf32>
    %57 = arith.addf %51, %56 : vector<16x16xf32>
    %c28 = arith.constant 28 : index
    %58 = memref.load %arg3[%c28] : memref<144xf32, #tpu.memory_space<smem>>
    %59 = vector.extract_strided_slice %6 {offsets = [3, 0, 0], sizes = [1, 16, 16], strides = [1, 1, 1]} : vector<4x16x16xf32> to vector<1x16x16xf32>
    %60 = vector.shape_cast %59 : vector<1x16x16xf32> to vector<16x16xf32>
    %61 = vector.broadcast %58 : f32 to vector<16x16xf32>
    %62 = arith.mulf %61, %60 : vector<16x16xf32>
    %63 = arith.addf %57, %62 : vector<16x16xf32>
    %c2_37 = arith.constant 2 : index
    %64 = memref.load %arg3[%c2_37] : memref<144xf32, #tpu.memory_space<smem>>
    %65 = vector.extract_strided_slice %7 {offsets = [0, 0, 0], sizes = [1, 16, 16], strides = [1, 1, 1]} : vector<4x16x16xf32> to vector<1x16x16xf32>
    %66 = vector.shape_cast %65 : vector<1x16x16xf32> to vector<16x16xf32>
    %67 = vector.broadcast %64 : f32 to vector<16x16xf32>
    %68 = arith.mulf %67, %66 : vector<16x16xf32>
    %69 = arith.addf %63, %68 : vector<16x16xf32>
    %c11 = arith.constant 11 : index
    %70 = memref.load %arg3[%c11] : memref<144xf32, #tpu.memory_space<smem>>
    %71 = vector.extract_strided_slice %7 {offsets = [1, 0, 0], sizes = [1, 16, 16], strides = [1, 1, 1]} : vector<4x16x16xf32> to vector<1x16x16xf32>
    %72 = vector.shape_cast %71 : vector<1x16x16xf32> to vector<16x16xf32>
    %73 = vector.broadcast %70 : f32 to vector<16x16xf32>
    %74 = arith.mulf %73, %72 : vector<16x16xf32>
    %75 = arith.addf %69, %74 : vector<16x16xf32>
    %c20 = arith.constant 20 : index
    %76 = memref.load %arg3[%c20] : memref<144xf32, #tpu.memory_space<smem>>
    %77 = vector.extract_strided_slice %7 {offsets = [2, 0, 0], sizes = [1, 16, 16], strides = [1, 1, 1]} : vector<4x16x16xf32> to vector<1x16x16xf32>
    %78 = vector.shape_cast %77 : vector<1x16x16xf32> to vector<16x16xf32>
    %79 = vector.broadcast %76 : f32 to vector<16x16xf32>
    %80 = arith.mulf %79, %78 : vector<16x16xf32>
    %81 = arith.addf %75, %80 : vector<16x16xf32>
    %c29 = arith.constant 29 : index
    %82 = memref.load %arg3[%c29] : memref<144xf32, #tpu.memory_space<smem>>
    %83 = vector.extract_strided_slice %7 {offsets = [3, 0, 0], sizes = [1, 16, 16], strides = [1, 1, 1]} : vector<4x16x16xf32> to vector<1x16x16xf32>
    %84 = vector.shape_cast %83 : vector<1x16x16xf32> to vector<16x16xf32>
    %85 = vector.broadcast %82 : f32 to vector<16x16xf32>
    %86 = arith.mulf %85, %84 : vector<16x16xf32>
    %87 = arith.addf %81, %86 : vector<16x16xf32>
    %c3 = arith.constant 3 : index
    %88 = memref.load %arg3[%c3] : memref<144xf32, #tpu.memory_space<smem>>
    %89 = vector.extract_strided_slice %8 {offsets = [0, 0, 0], sizes = [1, 16, 16], strides = [1, 1, 1]} : vector<4x16x16xf32> to vector<1x16x16xf32>
    %90 = vector.shape_cast %89 : vector<1x16x16xf32> to vector<16x16xf32>
    %91 = vector.broadcast %88 : f32 to vector<16x16xf32>
    %92 = arith.mulf %91, %90 : vector<16x16xf32>
    %93 = arith.addf %87, %92 : vector<16x16xf32>
    %c12 = arith.constant 12 : index
    %94 = memref.load %arg3[%c12] : memref<144xf32, #tpu.memory_space<smem>>
    %95 = vector.extract_strided_slice %8 {offsets = [1, 0, 0], sizes = [1, 16, 16], strides = [1, 1, 1]} : vector<4x16x16xf32> to vector<1x16x16xf32>
    %96 = vector.shape_cast %95 : vector<1x16x16xf32> to vector<16x16xf32>
    %97 = vector.broadcast %94 : f32 to vector<16x16xf32>
    %98 = arith.mulf %97, %96 : vector<16x16xf32>
    %99 = arith.addf %93, %98 : vector<16x16xf32>
    %c21 = arith.constant 21 : index
    %100 = memref.load %arg3[%c21] : memref<144xf32, #tpu.memory_space<smem>>
    %101 = vector.extract_strided_slice %8 {offsets = [2, 0, 0], sizes = [1, 16, 16], strides = [1, 1, 1]} : vector<4x16x16xf32> to vector<1x16x16xf32>
    %102 = vector.shape_cast %101 : vector<1x16x16xf32> to vector<16x16xf32>
    %103 = vector.broadcast %100 : f32 to vector<16x16xf32>
    %104 = arith.mulf %103, %102 : vector<16x16xf32>
    %105 = arith.addf %99, %104 : vector<16x16xf32>
    %c30 = arith.constant 30 : index
    %106 = memref.load %arg3[%c30] : memref<144xf32, #tpu.memory_space<smem>>
    %107 = vector.extract_strided_slice %8 {offsets = [3, 0, 0], sizes = [1, 16, 16], strides = [1, 1, 1]} : vector<4x16x16xf32> to vector<1x16x16xf32>
    %108 = vector.shape_cast %107 : vector<1x16x16xf32> to vector<16x16xf32>
    %109 = vector.broadcast %106 : f32 to vector<16x16xf32>
    %110 = arith.mulf %109, %108 : vector<16x16xf32>
    %111 = arith.addf %105, %110 : vector<16x16xf32>
    %c4 = arith.constant 4 : index
    %112 = memref.load %arg3[%c4] : memref<144xf32, #tpu.memory_space<smem>>
    %113 = vector.extract_strided_slice %9 {offsets = [0, 0, 0], sizes = [1, 16, 16], strides = [1, 1, 1]} : vector<4x16x16xf32> to vector<1x16x16xf32>
    %114 = vector.shape_cast %113 : vector<1x16x16xf32> to vector<16x16xf32>
    %115 = vector.broadcast %112 : f32 to vector<16x16xf32>
    %116 = arith.mulf %115, %114 : vector<16x16xf32>
    %117 = arith.addf %111, %116 : vector<16x16xf32>
    %c13 = arith.constant 13 : index
    %118 = memref.load %arg3[%c13] : memref<144xf32, #tpu.memory_space<smem>>
    %119 = vector.extract_strided_slice %9 {offsets = [1, 0, 0], sizes = [1, 16, 16], strides = [1, 1, 1]} : vector<4x16x16xf32> to vector<1x16x16xf32>
    %120 = vector.shape_cast %119 : vector<1x16x16xf32> to vector<16x16xf32>
    %121 = vector.broadcast %118 : f32 to vector<16x16xf32>
    %122 = arith.mulf %121, %120 : vector<16x16xf32>
    %123 = arith.addf %117, %122 : vector<16x16xf32>
    %c22 = arith.constant 22 : index
    %124 = memref.load %arg3[%c22] : memref<144xf32, #tpu.memory_space<smem>>
    %125 = vector.extract_strided_slice %9 {offsets = [2, 0, 0], sizes = [1, 16, 16], strides = [1, 1, 1]} : vector<4x16x16xf32> to vector<1x16x16xf32>
    %126 = vector.shape_cast %125 : vector<1x16x16xf32> to vector<16x16xf32>
    %127 = vector.broadcast %124 : f32 to vector<16x16xf32>
    %128 = arith.mulf %127, %126 : vector<16x16xf32>
    %129 = arith.addf %123, %128 : vector<16x16xf32>
    %c31 = arith.constant 31 : index
    %130 = memref.load %arg3[%c31] : memref<144xf32, #tpu.memory_space<smem>>
    %131 = vector.extract_strided_slice %9 {offsets = [3, 0, 0], sizes = [1, 16, 16], strides = [1, 1, 1]} : vector<4x16x16xf32> to vector<1x16x16xf32>
    %132 = vector.shape_cast %131 : vector<1x16x16xf32> to vector<16x16xf32>
    %133 = vector.broadcast %130 : f32 to vector<16x16xf32>
    %134 = arith.mulf %133, %132 : vector<16x16xf32>
    %135 = arith.addf %129, %134 : vector<16x16xf32>
    %c5 = arith.constant 5 : index
    %136 = memref.load %arg3[%c5] : memref<144xf32, #tpu.memory_space<smem>>
    %137 = vector.extract_strided_slice %10 {offsets = [0, 0, 0], sizes = [1, 16, 16], strides = [1, 1, 1]} : vector<4x16x16xf32> to vector<1x16x16xf32>
    %138 = vector.shape_cast %137 : vector<1x16x16xf32> to vector<16x16xf32>
    %139 = vector.broadcast %136 : f32 to vector<16x16xf32>
    %140 = arith.mulf %139, %138 : vector<16x16xf32>
    %141 = arith.addf %135, %140 : vector<16x16xf32>
    %c14 = arith.constant 14 : index
    %142 = memref.load %arg3[%c14] : memref<144xf32, #tpu.memory_space<smem>>
    %143 = vector.extract_strided_slice %10 {offsets = [1, 0, 0], sizes = [1, 16, 16], strides = [1, 1, 1]} : vector<4x16x16xf32> to vector<1x16x16xf32>
    %144 = vector.shape_cast %143 : vector<1x16x16xf32> to vector<16x16xf32>
    %145 = vector.broadcast %142 : f32 to vector<16x16xf32>
    %146 = arith.mulf %145, %144 : vector<16x16xf32>
    %147 = arith.addf %141, %146 : vector<16x16xf32>
    %c23 = arith.constant 23 : index
    %148 = memref.load %arg3[%c23] : memref<144xf32, #tpu.memory_space<smem>>
    %149 = vector.extract_strided_slice %10 {offsets = [2, 0, 0], sizes = [1, 16, 16], strides = [1, 1, 1]} : vector<4x16x16xf32> to vector<1x16x16xf32>
    %150 = vector.shape_cast %149 : vector<1x16x16xf32> to vector<16x16xf32>
    %151 = vector.broadcast %148 : f32 to vector<16x16xf32>
    %152 = arith.mulf %151, %150 : vector<16x16xf32>
    %153 = arith.addf %147, %152 : vector<16x16xf32>
    %c32 = arith.constant 32 : index
    %154 = memref.load %arg3[%c32] : memref<144xf32, #tpu.memory_space<smem>>
    %155 = vector.extract_strided_slice %10 {offsets = [3, 0, 0], sizes = [1, 16, 16], strides = [1, 1, 1]} : vector<4x16x16xf32> to vector<1x16x16xf32>
    %156 = vector.shape_cast %155 : vector<1x16x16xf32> to vector<16x16xf32>
    %157 = vector.broadcast %154 : f32 to vector<16x16xf32>
    %158 = arith.mulf %157, %156 : vector<16x16xf32>
    %159 = arith.addf %153, %158 : vector<16x16xf32>
    %c6 = arith.constant 6 : index
    %160 = memref.load %arg3[%c6] : memref<144xf32, #tpu.memory_space<smem>>
    %161 = vector.extract_strided_slice %11 {offsets = [0, 0, 0], sizes = [1, 16, 16], strides = [1, 1, 1]} : vector<4x16x16xf32> to vector<1x16x16xf32>
    %162 = vector.shape_cast %161 : vector<1x16x16xf32> to vector<16x16xf32>
    %163 = vector.broadcast %160 : f32 to vector<16x16xf32>
    %164 = arith.mulf %163, %162 : vector<16x16xf32>
    %165 = arith.addf %159, %164 : vector<16x16xf32>
    %c15 = arith.constant 15 : index
    %166 = memref.load %arg3[%c15] : memref<144xf32, #tpu.memory_space<smem>>
    %167 = vector.extract_strided_slice %11 {offsets = [1, 0, 0], sizes = [1, 16, 16], strides = [1, 1, 1]} : vector<4x16x16xf32> to vector<1x16x16xf32>
    %168 = vector.shape_cast %167 : vector<1x16x16xf32> to vector<16x16xf32>
    %169 = vector.broadcast %166 : f32 to vector<16x16xf32>
    %170 = arith.mulf %169, %168 : vector<16x16xf32>
    %171 = arith.addf %165, %170 : vector<16x16xf32>
    %c24 = arith.constant 24 : index
    %172 = memref.load %arg3[%c24] : memref<144xf32, #tpu.memory_space<smem>>
    %173 = vector.extract_strided_slice %11 {offsets = [2, 0, 0], sizes = [1, 16, 16], strides = [1, 1, 1]} : vector<4x16x16xf32> to vector<1x16x16xf32>
    %174 = vector.shape_cast %173 : vector<1x16x16xf32> to vector<16x16xf32>
    %175 = vector.broadcast %172 : f32 to vector<16x16xf32>
    %176 = arith.mulf %175, %174 : vector<16x16xf32>
    %177 = arith.addf %171, %176 : vector<16x16xf32>
    %c33 = arith.constant 33 : index
    %178 = memref.load %arg3[%c33] : memref<144xf32, #tpu.memory_space<smem>>
    %179 = vector.extract_strided_slice %11 {offsets = [3, 0, 0], sizes = [1, 16, 16], strides = [1, 1, 1]} : vector<4x16x16xf32> to vector<1x16x16xf32>
    %180 = vector.shape_cast %179 : vector<1x16x16xf32> to vector<16x16xf32>
    %181 = vector.broadcast %178 : f32 to vector<16x16xf32>
    %182 = arith.mulf %181, %180 : vector<16x16xf32>
    %183 = arith.addf %177, %182 : vector<16x16xf32>
    %c7 = arith.constant 7 : index
    %184 = memref.load %arg3[%c7] : memref<144xf32, #tpu.memory_space<smem>>
    %185 = vector.extract_strided_slice %12 {offsets = [0, 0, 0], sizes = [1, 16, 16], strides = [1, 1, 1]} : vector<4x16x16xf32> to vector<1x16x16xf32>
    %186 = vector.shape_cast %185 : vector<1x16x16xf32> to vector<16x16xf32>
    %187 = vector.broadcast %184 : f32 to vector<16x16xf32>
    %188 = arith.mulf %187, %186 : vector<16x16xf32>
    %189 = arith.addf %183, %188 : vector<16x16xf32>
    %c16 = arith.constant 16 : index
    %190 = memref.load %arg3[%c16] : memref<144xf32, #tpu.memory_space<smem>>
    %191 = vector.extract_strided_slice %12 {offsets = [1, 0, 0], sizes = [1, 16, 16], strides = [1, 1, 1]} : vector<4x16x16xf32> to vector<1x16x16xf32>
    %192 = vector.shape_cast %191 : vector<1x16x16xf32> to vector<16x16xf32>
    %193 = vector.broadcast %190 : f32 to vector<16x16xf32>
    %194 = arith.mulf %193, %192 : vector<16x16xf32>
    %195 = arith.addf %189, %194 : vector<16x16xf32>
    %c25 = arith.constant 25 : index
    %196 = memref.load %arg3[%c25] : memref<144xf32, #tpu.memory_space<smem>>
    %197 = vector.extract_strided_slice %12 {offsets = [2, 0, 0], sizes = [1, 16, 16], strides = [1, 1, 1]} : vector<4x16x16xf32> to vector<1x16x16xf32>
    %198 = vector.shape_cast %197 : vector<1x16x16xf32> to vector<16x16xf32>
    %199 = vector.broadcast %196 : f32 to vector<16x16xf32>
    %200 = arith.mulf %199, %198 : vector<16x16xf32>
    %201 = arith.addf %195, %200 : vector<16x16xf32>
    %c34 = arith.constant 34 : index
    %202 = memref.load %arg3[%c34] : memref<144xf32, #tpu.memory_space<smem>>
    %203 = vector.extract_strided_slice %12 {offsets = [3, 0, 0], sizes = [1, 16, 16], strides = [1, 1, 1]} : vector<4x16x16xf32> to vector<1x16x16xf32>
    %204 = vector.shape_cast %203 : vector<1x16x16xf32> to vector<16x16xf32>
    %205 = vector.broadcast %202 : f32 to vector<16x16xf32>
    %206 = arith.mulf %205, %204 : vector<16x16xf32>
    %207 = arith.addf %201, %206 : vector<16x16xf32>
    %c8 = arith.constant 8 : index
    %208 = memref.load %arg3[%c8] : memref<144xf32, #tpu.memory_space<smem>>
    %209 = vector.extract_strided_slice %13 {offsets = [0, 0, 0], sizes = [1, 16, 16], strides = [1, 1, 1]} : vector<4x16x16xf32> to vector<1x16x16xf32>
    %210 = vector.shape_cast %209 : vector<1x16x16xf32> to vector<16x16xf32>
    %211 = vector.broadcast %208 : f32 to vector<16x16xf32>
    %212 = arith.mulf %211, %210 : vector<16x16xf32>
    %213 = arith.addf %207, %212 : vector<16x16xf32>
    %c17 = arith.constant 17 : index
    %214 = memref.load %arg3[%c17] : memref<144xf32, #tpu.memory_space<smem>>
    %215 = vector.extract_strided_slice %13 {offsets = [1, 0, 0], sizes = [1, 16, 16], strides = [1, 1, 1]} : vector<4x16x16xf32> to vector<1x16x16xf32>
    %216 = vector.shape_cast %215 : vector<1x16x16xf32> to vector<16x16xf32>
    %217 = vector.broadcast %214 : f32 to vector<16x16xf32>
    %218 = arith.mulf %217, %216 : vector<16x16xf32>
    %219 = arith.addf %213, %218 : vector<16x16xf32>
    %c26 = arith.constant 26 : index
    %220 = memref.load %arg3[%c26] : memref<144xf32, #tpu.memory_space<smem>>
    %221 = vector.extract_strided_slice %13 {offsets = [2, 0, 0], sizes = [1, 16, 16], strides = [1, 1, 1]} : vector<4x16x16xf32> to vector<1x16x16xf32>
    %222 = vector.shape_cast %221 : vector<1x16x16xf32> to vector<16x16xf32>
    %223 = vector.broadcast %220 : f32 to vector<16x16xf32>
    %224 = arith.mulf %223, %222 : vector<16x16xf32>
    %225 = arith.addf %219, %224 : vector<16x16xf32>
    %c35 = arith.constant 35 : index
    %226 = memref.load %arg3[%c35] : memref<144xf32, #tpu.memory_space<smem>>
    %227 = vector.extract_strided_slice %13 {offsets = [3, 0, 0], sizes = [1, 16, 16], strides = [1, 1, 1]} : vector<4x16x16xf32> to vector<1x16x16xf32>
    %228 = vector.shape_cast %227 : vector<1x16x16xf32> to vector<16x16xf32>
    %229 = vector.broadcast %226 : f32 to vector<16x16xf32>
    %230 = arith.mulf %229, %228 : vector<16x16xf32>
    %231 = arith.addf %225, %230 : vector<16x16xf32>
    %232 = vector.extract_strided_slice %9 {offsets = [0, 0, 0], sizes = [1, 16, 16], strides = [1, 1, 1]} : vector<4x16x16xf32> to vector<1x16x16xf32>
    %233 = vector.shape_cast %232 : vector<1x16x16xf32> to vector<16x16xf32>
    %234 = arith.subf %231, %233 : vector<16x16xf32>
    %235 = arith.negf %234 : vector<16x16xf32>
    %236 = math.exp %235 : vector<16x16xf32>
    %cst_38 = arith.constant 1.000000e+00 : f32
    %237 = vector.broadcast %cst_38 : f32 to vector<16x16xf32>
    %238 = arith.addf %237, %236 : vector<16x16xf32>
    %239 = arith.divf %237, %238 : vector<16x16xf32>
    %240 = arith.mulf %239, %234 : vector<16x16xf32>
    %241 = arith.addf %233, %240 : vector<16x16xf32>
    %c0_39 = arith.constant 0 : index
    %c0_40 = arith.constant 0 : index
    %c0_41 = arith.constant 0 : index
    %c0_42 = arith.constant 0 : index
    %242 = vector.load %arg5[%c0_39, %c0_40, %c0_41, %c0_42] : memref<1x4x16x16xf32, #tpu.memory_space<vmem>>, vector<1x1x16x16xf32>
    %243 = vector.shape_cast %242 : vector<1x1x16x16xf32> to vector<16x16xf32>
    %244 = vector.shape_cast %241 : vector<16x16xf32> to vector<1x1x16x16xf32>
    tpu.vector_store %arg5[%c0_39, %c0_40, %c0_41, %c0_42], %244 {strides = array<i32>} : memref<1x4x16x16xf32, #tpu.memory_space<vmem>>, vector<1x1x16x16xf32>,
    %c1_43 = arith.constant 1 : index
    %245 = memref.load %arg4[%c1_43] : memref<4xf32, #tpu.memory_space<smem>>
    %246 = vector.broadcast %245 : f32 to vector<16x16xf32>
    %c36 = arith.constant 36 : index
    %247 = memref.load %arg3[%c36] : memref<144xf32, #tpu.memory_space<smem>>
    %248 = vector.extract_strided_slice %5 {offsets = [0, 0, 0], sizes = [1, 16, 16], strides = [1, 1, 1]} : vector<4x16x16xf32> to vector<1x16x16xf32>
    %249 = vector.shape_cast %248 : vector<1x16x16xf32> to vector<16x16xf32>
    %250 = vector.broadcast %247 : f32 to vector<16x16xf32>
    %251 = arith.mulf %250, %249 : vector<16x16xf32>
    %252 = arith.addf %246, %251 : vector<16x16xf32>
    %c45 = arith.constant 45 : index
    %253 = memref.load %arg3[%c45] : memref<144xf32, #tpu.memory_space<smem>>
    %254 = vector.extract_strided_slice %5 {offsets = [1, 0, 0], sizes = [1, 16, 16], strides = [1, 1, 1]} : vector<4x16x16xf32> to vector<1x16x16xf32>
    %255 = vector.shape_cast %254 : vector<1x16x16xf32> to vector<16x16xf32>
    %256 = vector.broadcast %253 : f32 to vector<16x16xf32>
    %257 = arith.mulf %256, %255 : vector<16x16xf32>
    %258 = arith.addf %252, %257 : vector<16x16xf32>
    %c54 = arith.constant 54 : index
    %259 = memref.load %arg3[%c54] : memref<144xf32, #tpu.memory_space<smem>>
    %260 = vector.extract_strided_slice %5 {offsets = [2, 0, 0], sizes = [1, 16, 16], strides = [1, 1, 1]} : vector<4x16x16xf32> to vector<1x16x16xf32>
    %261 = vector.shape_cast %260 : vector<1x16x16xf32> to vector<16x16xf32>
    %262 = vector.broadcast %259 : f32 to vector<16x16xf32>
    %263 = arith.mulf %262, %261 : vector<16x16xf32>
    %264 = arith.addf %258, %263 : vector<16x16xf32>
    %c63 = arith.constant 63 : index
    %265 = memref.load %arg3[%c63] : memref<144xf32, #tpu.memory_space<smem>>
    %266 = vector.extract_strided_slice %5 {offsets = [3, 0, 0], sizes = [1, 16, 16], strides = [1, 1, 1]} : vector<4x16x16xf32> to vector<1x16x16xf32>
    %267 = vector.shape_cast %266 : vector<1x16x16xf32> to vector<16x16xf32>
    %268 = vector.broadcast %265 : f32 to vector<16x16xf32>
    %269 = arith.mulf %268, %267 : vector<16x16xf32>
    %270 = arith.addf %264, %269 : vector<16x16xf32>
    %c37 = arith.constant 37 : index
    %271 = memref.load %arg3[%c37] : memref<144xf32, #tpu.memory_space<smem>>
    %272 = vector.extract_strided_slice %6 {offsets = [0, 0, 0], sizes = [1, 16, 16], strides = [1, 1, 1]} : vector<4x16x16xf32> to vector<1x16x16xf32>
    %273 = vector.shape_cast %272 : vector<1x16x16xf32> to vector<16x16xf32>
    %274 = vector.broadcast %271 : f32 to vector<16x16xf32>
    %275 = arith.mulf %274, %273 : vector<16x16xf32>
    %276 = arith.addf %270, %275 : vector<16x16xf32>
    %c46 = arith.constant 46 : index
    %277 = memref.load %arg3[%c46] : memref<144xf32, #tpu.memory_space<smem>>
    %278 = vector.extract_strided_slice %6 {offsets = [1, 0, 0], sizes = [1, 16, 16], strides = [1, 1, 1]} : vector<4x16x16xf32> to vector<1x16x16xf32>
    %279 = vector.shape_cast %278 : vector<1x16x16xf32> to vector<16x16xf32>
    %280 = vector.broadcast %277 : f32 to vector<16x16xf32>
    %281 = arith.mulf %280, %279 : vector<16x16xf32>
    %282 = arith.addf %276, %281 : vector<16x16xf32>
    %c55 = arith.constant 55 : index
    %283 = memref.load %arg3[%c55] : memref<144xf32, #tpu.memory_space<smem>>
    %284 = vector.extract_strided_slice %6 {offsets = [2, 0, 0], sizes = [1, 16, 16], strides = [1, 1, 1]} : vector<4x16x16xf32> to vector<1x16x16xf32>
    %285 = vector.shape_cast %284 : vector<1x16x16xf32> to vector<16x16xf32>
    %286 = vector.broadcast %283 : f32 to vector<16x16xf32>
    %287 = arith.mulf %286, %285 : vector<16x16xf32>
    %288 = arith.addf %282, %287 : vector<16x16xf32>
    %c64 = arith.constant 64 : index
    %289 = memref.load %arg3[%c64] : memref<144xf32, #tpu.memory_space<smem>>
    %290 = vector.extract_strided_slice %6 {offsets = [3, 0, 0], sizes = [1, 16, 16], strides = [1, 1, 1]} : vector<4x16x16xf32> to vector<1x16x16xf32>
    %291 = vector.shape_cast %290 : vector<1x16x16xf32> to vector<16x16xf32>
    %292 = vector.broadcast %289 : f32 to vector<16x16xf32>
    %293 = arith.mulf %292, %291 : vector<16x16xf32>
    %294 = arith.addf %288, %293 : vector<16x16xf32>
    %c38 = arith.constant 38 : index
    %295 = memref.load %arg3[%c38] : memref<144xf32, #tpu.memory_space<smem>>
    %296 = vector.extract_strided_slice %7 {offsets = [0, 0, 0], sizes = [1, 16, 16], strides = [1, 1, 1]} : vector<4x16x16xf32> to vector<1x16x16xf32>
    %297 = vector.shape_cast %296 : vector<1x16x16xf32> to vector<16x16xf32>
    %298 = vector.broadcast %295 : f32 to vector<16x16xf32>
    %299 = arith.mulf %298, %297 : vector<16x16xf32>
    %300 = arith.addf %294, %299 : vector<16x16xf32>
    %c47 = arith.constant 47 : index
    %301 = memref.load %arg3[%c47] : memref<144xf32, #tpu.memory_space<smem>>
    %302 = vector.extract_strided_slice %7 {offsets = [1, 0, 0], sizes = [1, 16, 16], strides = [1, 1, 1]} : vector<4x16x16xf32> to vector<1x16x16xf32>
    %303 = vector.shape_cast %302 : vector<1x16x16xf32> to vector<16x16xf32>
    %304 = vector.broadcast %301 : f32 to vector<16x16xf32>
    %305 = arith.mulf %304, %303 : vector<16x16xf32>
    %306 = arith.addf %300, %305 : vector<16x16xf32>
    %c56 = arith.constant 56 : index
    %307 = memref.load %arg3[%c56] : memref<144xf32, #tpu.memory_space<smem>>
    %308 = vector.extract_strided_slice %7 {offsets = [2, 0, 0], sizes = [1, 16, 16], strides = [1, 1, 1]} : vector<4x16x16xf32> to vector<1x16x16xf32>
    %309 = vector.shape_cast %308 : vector<1x16x16xf32> to vector<16x16xf32>
    %310 = vector.broadcast %307 : f32 to vector<16x16xf32>
    %311 = arith.mulf %310, %309 : vector<16x16xf32>
    %312 = arith.addf %306, %311 : vector<16x16xf32>
    %c65 = arith.constant 65 : index
    %313 = memref.load %arg3[%c65] : memref<144xf32, #tpu.memory_space<smem>>
    %314 = vector.extract_strided_slice %7 {offsets = [3, 0, 0], sizes = [1, 16, 16], strides = [1, 1, 1]} : vector<4x16x16xf32> to vector<1x16x16xf32>
    %315 = vector.shape_cast %314 : vector<1x16x16xf32> to vector<16x16xf32>
    %316 = vector.broadcast %313 : f32 to vector<16x16xf32>
    %317 = arith.mulf %316, %315 : vector<16x16xf32>
    %318 = arith.addf %312, %317 : vector<16x16xf32>
    %c39 = arith.constant 39 : index
    %319 = memref.load %arg3[%c39] : memref<144xf32, #tpu.memory_space<smem>>
    %320 = vector.extract_strided_slice %8 {offsets = [0, 0, 0], sizes = [1, 16, 16], strides = [1, 1, 1]} : vector<4x16x16xf32> to vector<1x16x16xf32>
    %321 = vector.shape_cast %320 : vector<1x16x16xf32> to vector<16x16xf32>
    %322 = vector.broadcast %319 : f32 to vector<16x16xf32>
    %323 = arith.mulf %322, %321 : vector<16x16xf32>
    %324 = arith.addf %318, %323 : vector<16x16xf32>
    %c48 = arith.constant 48 : index
    %325 = memref.load %arg3[%c48] : memref<144xf32, #tpu.memory_space<smem>>
    %326 = vector.extract_strided_slice %8 {offsets = [1, 0, 0], sizes = [1, 16, 16], strides = [1, 1, 1]} : vector<4x16x16xf32> to vector<1x16x16xf32>
    %327 = vector.shape_cast %326 : vector<1x16x16xf32> to vector<16x16xf32>
    %328 = vector.broadcast %325 : f32 to vector<16x16xf32>
    %329 = arith.mulf %328, %327 : vector<16x16xf32>
    %330 = arith.addf %324, %329 : vector<16x16xf32>
    %c57 = arith.constant 57 : index
    %331 = memref.load %arg3[%c57] : memref<144xf32, #tpu.memory_space<smem>>
    %332 = vector.extract_strided_slice %8 {offsets = [2, 0, 0], sizes = [1, 16, 16], strides = [1, 1, 1]} : vector<4x16x16xf32> to vector<1x16x16xf32>
    %333 = vector.shape_cast %332 : vector<1x16x16xf32> to vector<16x16xf32>
    %334 = vector.broadcast %331 : f32 to vector<16x16xf32>
    %335 = arith.mulf %334, %333 : vector<16x16xf32>
    %336 = arith.addf %330, %335 : vector<16x16xf32>
    %c66 = arith.constant 66 : index
    %337 = memref.load %arg3[%c66] : memref<144xf32, #tpu.memory_space<smem>>
    %338 = vector.extract_strided_slice %8 {offsets = [3, 0, 0], sizes = [1, 16, 16], strides = [1, 1, 1]} : vector<4x16x16xf32> to vector<1x16x16xf32>
    %339 = vector.shape_cast %338 : vector<1x16x16xf32> to vector<16x16xf32>
    %340 = vector.broadcast %337 : f32 to vector<16x16xf32>
    %341 = arith.mulf %340, %339 : vector<16x16xf32>
    %342 = arith.addf %336, %341 : vector<16x16xf32>
    %c40 = arith.constant 40 : index
    %343 = memref.load %arg3[%c40] : memref<144xf32, #tpu.memory_space<smem>>
    %344 = vector.extract_strided_slice %9 {offsets = [0, 0, 0], sizes = [1, 16, 16], strides = [1, 1, 1]} : vector<4x16x16xf32> to vector<1x16x16xf32>
    %345 = vector.shape_cast %344 : vector<1x16x16xf32> to vector<16x16xf32>
    %346 = vector.broadcast %343 : f32 to vector<16x16xf32>
    %347 = arith.mulf %346, %345 : vector<16x16xf32>
    %348 = arith.addf %342, %347 : vector<16x16xf32>
    %c49 = arith.constant 49 : index
    %349 = memref.load %arg3[%c49] : memref<144xf32, #tpu.memory_space<smem>>
    %350 = vector.extract_strided_slice %9 {offsets = [1, 0, 0], sizes = [1, 16, 16], strides = [1, 1, 1]} : vector<4x16x16xf32> to vector<1x16x16xf32>
    %351 = vector.shape_cast %350 : vector<1x16x16xf32> to vector<16x16xf32>
    %352 = vector.broadcast %349 : f32 to vector<16x16xf32>
    %353 = arith.mulf %352, %351 : vector<16x16xf32>
    %354 = arith.addf %348, %353 : vector<16x16xf32>
    %c58 = arith.constant 58 : index
    %355 = memref.load %arg3[%c58] : memref<144xf32, #tpu.memory_space<smem>>
    %356 = vector.extract_strided_slice %9 {offsets = [2, 0, 0], sizes = [1, 16, 16], strides = [1, 1, 1]} : vector<4x16x16xf32> to vector<1x16x16xf32>
    %357 = vector.shape_cast %356 : vector<1x16x16xf32> to vector<16x16xf32>
    %358 = vector.broadcast %355 : f32 to vector<16x16xf32>
    %359 = arith.mulf %358, %357 : vector<16x16xf32>
    %360 = arith.addf %354, %359 : vector<16x16xf32>
    %c67 = arith.constant 67 : index
    %361 = memref.load %arg3[%c67] : memref<144xf32, #tpu.memory_space<smem>>
    %362 = vector.extract_strided_slice %9 {offsets = [3, 0, 0], sizes = [1, 16, 16], strides = [1, 1, 1]} : vector<4x16x16xf32> to vector<1x16x16xf32>
    %363 = vector.shape_cast %362 : vector<1x16x16xf32> to vector<16x16xf32>
    %364 = vector.broadcast %361 : f32 to vector<16x16xf32>
    %365 = arith.mulf %364, %363 : vector<16x16xf32>
    %366 = arith.addf %360, %365 : vector<16x16xf32>
    %c41 = arith.constant 41 : index
    %367 = memref.load %arg3[%c41] : memref<144xf32, #tpu.memory_space<smem>>
    %368 = vector.extract_strided_slice %10 {offsets = [0, 0, 0], sizes = [1, 16, 16], strides = [1, 1, 1]} : vector<4x16x16xf32> to vector<1x16x16xf32>
    %369 = vector.shape_cast %368 : vector<1x16x16xf32> to vector<16x16xf32>
    %370 = vector.broadcast %367 : f32 to vector<16x16xf32>
    %371 = arith.mulf %370, %369 : vector<16x16xf32>
    %372 = arith.addf %366, %371 : vector<16x16xf32>
    %c50 = arith.constant 50 : index
    %373 = memref.load %arg3[%c50] : memref<144xf32, #tpu.memory_space<smem>>
    %374 = vector.extract_strided_slice %10 {offsets = [1, 0, 0], sizes = [1, 16, 16], strides = [1, 1, 1]} : vector<4x16x16xf32> to vector<1x16x16xf32>
    %375 = vector.shape_cast %374 : vector<1x16x16xf32> to vector<16x16xf32>
    %376 = vector.broadcast %373 : f32 to vector<16x16xf32>
    %377 = arith.mulf %376, %375 : vector<16x16xf32>
    %378 = arith.addf %372, %377 : vector<16x16xf32>
    %c59 = arith.constant 59 : index
    %379 = memref.load %arg3[%c59] : memref<144xf32, #tpu.memory_space<smem>>
    %380 = vector.extract_strided_slice %10 {offsets = [2, 0, 0], sizes = [1, 16, 16], strides = [1, 1, 1]} : vector<4x16x16xf32> to vector<1x16x16xf32>
    %381 = vector.shape_cast %380 : vector<1x16x16xf32> to vector<16x16xf32>
    %382 = vector.broadcast %379 : f32 to vector<16x16xf32>
    %383 = arith.mulf %382, %381 : vector<16x16xf32>
    %384 = arith.addf %378, %383 : vector<16x16xf32>
    %c68 = arith.constant 68 : index
    %385 = memref.load %arg3[%c68] : memref<144xf32, #tpu.memory_space<smem>>
    %386 = vector.extract_strided_slice %10 {offsets = [3, 0, 0], sizes = [1, 16, 16], strides = [1, 1, 1]} : vector<4x16x16xf32> to vector<1x16x16xf32>
    %387 = vector.shape_cast %386 : vector<1x16x16xf32> to vector<16x16xf32>
    %388 = vector.broadcast %385 : f32 to vector<16x16xf32>
    %389 = arith.mulf %388, %387 : vector<16x16xf32>
    %390 = arith.addf %384, %389 : vector<16x16xf32>
    %c42 = arith.constant 42 : index
    %391 = memref.load %arg3[%c42] : memref<144xf32, #tpu.memory_space<smem>>
    %392 = vector.extract_strided_slice %11 {offsets = [0, 0, 0], sizes = [1, 16, 16], strides = [1, 1, 1]} : vector<4x16x16xf32> to vector<1x16x16xf32>
    %393 = vector.shape_cast %392 : vector<1x16x16xf32> to vector<16x16xf32>
    %394 = vector.broadcast %391 : f32 to vector<16x16xf32>
    %395 = arith.mulf %394, %393 : vector<16x16xf32>
    %396 = arith.addf %390, %395 : vector<16x16xf32>
    %c51 = arith.constant 51 : index
    %397 = memref.load %arg3[%c51] : memref<144xf32, #tpu.memory_space<smem>>
    %398 = vector.extract_strided_slice %11 {offsets = [1, 0, 0], sizes = [1, 16, 16], strides = [1, 1, 1]} : vector<4x16x16xf32> to vector<1x16x16xf32>
    %399 = vector.shape_cast %398 : vector<1x16x16xf32> to vector<16x16xf32>
    %400 = vector.broadcast %397 : f32 to vector<16x16xf32>
    %401 = arith.mulf %400, %399 : vector<16x16xf32>
    %402 = arith.addf %396, %401 : vector<16x16xf32>
    %c60 = arith.constant 60 : index
    %403 = memref.load %arg3[%c60] : memref<144xf32, #tpu.memory_space<smem>>
    %404 = vector.extract_strided_slice %11 {offsets = [2, 0, 0], sizes = [1, 16, 16], strides = [1, 1, 1]} : vector<4x16x16xf32> to vector<1x16x16xf32>
    %405 = vector.shape_cast %404 : vector<1x16x16xf32> to vector<16x16xf32>
    %406 = vector.broadcast %403 : f32 to vector<16x16xf32>
    %407 = arith.mulf %406, %405 : vector<16x16xf32>
    %408 = arith.addf %402, %407 : vector<16x16xf32>
    %c69 = arith.constant 69 : index
    %409 = memref.load %arg3[%c69] : memref<144xf32, #tpu.memory_space<smem>>
    %410 = vector.extract_strided_slice %11 {offsets = [3, 0, 0], sizes = [1, 16, 16], strides = [1, 1, 1]} : vector<4x16x16xf32> to vector<1x16x16xf32>
    %411 = vector.shape_cast %410 : vector<1x16x16xf32> to vector<16x16xf32>
    %412 = vector.broadcast %409 : f32 to vector<16x16xf32>
    %413 = arith.mulf %412, %411 : vector<16x16xf32>
    %414 = arith.addf %408, %413 : vector<16x16xf32>
    %c43 = arith.constant 43 : index
    %415 = memref.load %arg3[%c43] : memref<144xf32, #tpu.memory_space<smem>>
    %416 = vector.extract_strided_slice %12 {offsets = [0, 0, 0], sizes = [1, 16, 16], strides = [1, 1, 1]} : vector<4x16x16xf32> to vector<1x16x16xf32>
    %417 = vector.shape_cast %416 : vector<1x16x16xf32> to vector<16x16xf32>
    %418 = vector.broadcast %415 : f32 to vector<16x16xf32>
    %419 = arith.mulf %418, %417 : vector<16x16xf32>
    %420 = arith.addf %414, %419 : vector<16x16xf32>
    %c52 = arith.constant 52 : index
    %421 = memref.load %arg3[%c52] : memref<144xf32, #tpu.memory_space<smem>>
    %422 = vector.extract_strided_slice %12 {offsets = [1, 0, 0], sizes = [1, 16, 16], strides = [1, 1, 1]} : vector<4x16x16xf32> to vector<1x16x16xf32>
    %423 = vector.shape_cast %422 : vector<1x16x16xf32> to vector<16x16xf32>
    %424 = vector.broadcast %421 : f32 to vector<16x16xf32>
    %425 = arith.mulf %424, %423 : vector<16x16xf32>
    %426 = arith.addf %420, %425 : vector<16x16xf32>
    %c61 = arith.constant 61 : index
    %427 = memref.load %arg3[%c61] : memref<144xf32, #tpu.memory_space<smem>>
    %428 = vector.extract_strided_slice %12 {offsets = [2, 0, 0], sizes = [1, 16, 16], strides = [1, 1, 1]} : vector<4x16x16xf32> to vector<1x16x16xf32>
    %429 = vector.shape_cast %428 : vector<1x16x16xf32> to vector<16x16xf32>
    %430 = vector.broadcast %427 : f32 to vector<16x16xf32>
    %431 = arith.mulf %430, %429 : vector<16x16xf32>
    %432 = arith.addf %426, %431 : vector<16x16xf32>
    %c70 = arith.constant 70 : index
    %433 = memref.load %arg3[%c70] : memref<144xf32, #tpu.memory_space<smem>>
    %434 = vector.extract_strided_slice %12 {offsets = [3, 0, 0], sizes = [1, 16, 16], strides = [1, 1, 1]} : vector<4x16x16xf32> to vector<1x16x16xf32>
    %435 = vector.shape_cast %434 : vector<1x16x16xf32> to vector<16x16xf32>
    %436 = vector.broadcast %433 : f32 to vector<16x16xf32>
    %437 = arith.mulf %436, %435 : vector<16x16xf32>
    %438 = arith.addf %432, %437 : vector<16x16xf32>
    %c44 = arith.constant 44 : index
    %439 = memref.load %arg3[%c44] : memref<144xf32, #tpu.memory_space<smem>>
    %440 = vector.extract_strided_slice %13 {offsets = [0, 0, 0], sizes = [1, 16, 16], strides = [1, 1, 1]} : vector<4x16x16xf32> to vector<1x16x16xf32>
    %441 = vector.shape_cast %440 : vector<1x16x16xf32> to vector<16x16xf32>
    %442 = vector.broadcast %439 : f32 to vector<16x16xf32>
    %443 = arith.mulf %442, %441 : vector<16x16xf32>
    %444 = arith.addf %438, %443 : vector<16x16xf32>
    %c53 = arith.constant 53 : index
    %445 = memref.load %arg3[%c53] : memref<144xf32, #tpu.memory_space<smem>>
    %446 = vector.extract_strided_slice %13 {offsets = [1, 0, 0], sizes = [1, 16, 16], strides = [1, 1, 1]} : vector<4x16x16xf32> to vector<1x16x16xf32>
    %447 = vector.shape_cast %446 : vector<1x16x16xf32> to vector<16x16xf32>
    %448 = vector.broadcast %445 : f32 to vector<16x16xf32>
    %449 = arith.mulf %448, %447 : vector<16x16xf32>
    %450 = arith.addf %444, %449 : vector<16x16xf32>
    %c62 = arith.constant 62 : index
    %451 = memref.load %arg3[%c62] : memref<144xf32, #tpu.memory_space<smem>>
    %452 = vector.extract_strided_slice %13 {offsets = [2, 0, 0], sizes = [1, 16, 16], strides = [1, 1, 1]} : vector<4x16x16xf32> to vector<1x16x16xf32>
    %453 = vector.shape_cast %452 : vector<1x16x16xf32> to vector<16x16xf32>
    %454 = vector.broadcast %451 : f32 to vector<16x16xf32>
    %455 = arith.mulf %454, %453 : vector<16x16xf32>
    %456 = arith.addf %450, %455 : vector<16x16xf32>
    %c71 = arith.constant 71 : index
    %457 = memref.load %arg3[%c71] : memref<144xf32, #tpu.memory_space<smem>>
    %458 = vector.extract_strided_slice %13 {offsets = [3, 0, 0], sizes = [1, 16, 16], strides = [1, 1, 1]} : vector<4x16x16xf32> to vector<1x16x16xf32>
    %459 = vector.shape_cast %458 : vector<1x16x16xf32> to vector<16x16xf32>
    %460 = vector.broadcast %457 : f32 to vector<16x16xf32>
    %461 = arith.mulf %460, %459 : vector<16x16xf32>
    %462 = arith.addf %456, %461 : vector<16x16xf32>
    %463 = vector.extract_strided_slice %9 {offsets = [1, 0, 0], sizes = [1, 16, 16], strides = [1, 1, 1]} : vector<4x16x16xf32> to vector<1x16x16xf32>
    %464 = vector.shape_cast %463 : vector<1x16x16xf32> to vector<16x16xf32>
    %465 = arith.subf %462, %464 : vector<16x16xf32>
    %466 = arith.negf %465 : vector<16x16xf32>
    %467 = math.exp %466 : vector<16x16xf32>
    %cst_44 = arith.constant 1.000000e+00 : f32
    %468 = vector.broadcast %cst_44 : f32 to vector<16x16xf32>
    %469 = arith.addf %468, %467 : vector<16x16xf32>
    %470 = arith.divf %468, %469 : vector<16x16xf32>
    %471 = arith.mulf %470, %465 : vector<16x16xf32>
    %472 = arith.addf %464, %471 : vector<16x16xf32>
    %c0_45 = arith.constant 0 : index
    %c1_46 = arith.constant 1 : index
    %c0_47 = arith.constant 0 : index
    %c0_48 = arith.constant 0 : index
    %473 = vector.load %arg5[%c0_45, %c1_46, %c0_47, %c0_48] : memref<1x4x16x16xf32, #tpu.memory_space<vmem>>, vector<1x1x16x16xf32>
    %474 = vector.shape_cast %473 : vector<1x1x16x16xf32> to vector<16x16xf32>
    %475 = vector.shape_cast %472 : vector<16x16xf32> to vector<1x1x16x16xf32>
    tpu.vector_store %arg5[%c0_45, %c1_46, %c0_47, %c0_48], %475 {strides = array<i32>} : memref<1x4x16x16xf32, #tpu.memory_space<vmem>>, vector<1x1x16x16xf32>,
    %c2_49 = arith.constant 2 : index
    %476 = memref.load %arg4[%c2_49] : memref<4xf32, #tpu.memory_space<smem>>
    %477 = vector.broadcast %476 : f32 to vector<16x16xf32>
    %c72 = arith.constant 72 : index
    %478 = memref.load %arg3[%c72] : memref<144xf32, #tpu.memory_space<smem>>
    %479 = vector.extract_strided_slice %5 {offsets = [0, 0, 0], sizes = [1, 16, 16], strides = [1, 1, 1]} : vector<4x16x16xf32> to vector<1x16x16xf32>
    %480 = vector.shape_cast %479 : vector<1x16x16xf32> to vector<16x16xf32>
    %481 = vector.broadcast %478 : f32 to vector<16x16xf32>
    %482 = arith.mulf %481, %480 : vector<16x16xf32>
    %483 = arith.addf %477, %482 : vector<16x16xf32>
    %c81 = arith.constant 81 : index
    %484 = memref.load %arg3[%c81] : memref<144xf32, #tpu.memory_space<smem>>
    %485 = vector.extract_strided_slice %5 {offsets = [1, 0, 0], sizes = [1, 16, 16], strides = [1, 1, 1]} : vector<4x16x16xf32> to vector<1x16x16xf32>
    %486 = vector.shape_cast %485 : vector<1x16x16xf32> to vector<16x16xf32>
    %487 = vector.broadcast %484 : f32 to vector<16x16xf32>
    %488 = arith.mulf %487, %486 : vector<16x16xf32>
    %489 = arith.addf %483, %488 : vector<16x16xf32>
    %c90 = arith.constant 90 : index
    %490 = memref.load %arg3[%c90] : memref<144xf32, #tpu.memory_space<smem>>
    %491 = vector.extract_strided_slice %5 {offsets = [2, 0, 0], sizes = [1, 16, 16], strides = [1, 1, 1]} : vector<4x16x16xf32> to vector<1x16x16xf32>
    %492 = vector.shape_cast %491 : vector<1x16x16xf32> to vector<16x16xf32>
    %493 = vector.broadcast %490 : f32 to vector<16x16xf32>
    %494 = arith.mulf %493, %492 : vector<16x16xf32>
    %495 = arith.addf %489, %494 : vector<16x16xf32>
    %c99 = arith.constant 99 : index
    %496 = memref.load %arg3[%c99] : memref<144xf32, #tpu.memory_space<smem>>
    %497 = vector.extract_strided_slice %5 {offsets = [3, 0, 0], sizes = [1, 16, 16], strides = [1, 1, 1]} : vector<4x16x16xf32> to vector<1x16x16xf32>
    %498 = vector.shape_cast %497 : vector<1x16x16xf32> to vector<16x16xf32>
    %499 = vector.broadcast %496 : f32 to vector<16x16xf32>
    %500 = arith.mulf %499, %498 : vector<16x16xf32>
    %501 = arith.addf %495, %500 : vector<16x16xf32>
    %c73 = arith.constant 73 : index
    %502 = memref.load %arg3[%c73] : memref<144xf32, #tpu.memory_space<smem>>
    %503 = vector.extract_strided_slice %6 {offsets = [0, 0, 0], sizes = [1, 16, 16], strides = [1, 1, 1]} : vector<4x16x16xf32> to vector<1x16x16xf32>
    %504 = vector.shape_cast %503 : vector<1x16x16xf32> to vector<16x16xf32>
    %505 = vector.broadcast %502 : f32 to vector<16x16xf32>
    %506 = arith.mulf %505, %504 : vector<16x16xf32>
    %507 = arith.addf %501, %506 : vector<16x16xf32>
    %c82 = arith.constant 82 : index
    %508 = memref.load %arg3[%c82] : memref<144xf32, #tpu.memory_space<smem>>
    %509 = vector.extract_strided_slice %6 {offsets = [1, 0, 0], sizes = [1, 16, 16], strides = [1, 1, 1]} : vector<4x16x16xf32> to vector<1x16x16xf32>
    %510 = vector.shape_cast %509 : vector<1x16x16xf32> to vector<16x16xf32>
    %511 = vector.broadcast %508 : f32 to vector<16x16xf32>
    %512 = arith.mulf %511, %510 : vector<16x16xf32>
    %513 = arith.addf %507, %512 : vector<16x16xf32>
    %c91 = arith.constant 91 : index
    %514 = memref.load %arg3[%c91] : memref<144xf32, #tpu.memory_space<smem>>
    %515 = vector.extract_strided_slice %6 {offsets = [2, 0, 0], sizes = [1, 16, 16], strides = [1, 1, 1]} : vector<4x16x16xf32> to vector<1x16x16xf32>
    %516 = vector.shape_cast %515 : vector<1x16x16xf32> to vector<16x16xf32>
    %517 = vector.broadcast %514 : f32 to vector<16x16xf32>
    %518 = arith.mulf %517, %516 : vector<16x16xf32>
    %519 = arith.addf %513, %518 : vector<16x16xf32>
    %c100 = arith.constant 100 : index
    %520 = memref.load %arg3[%c100] : memref<144xf32, #tpu.memory_space<smem>>
    %521 = vector.extract_strided_slice %6 {offsets = [3, 0, 0], sizes = [1, 16, 16], strides = [1, 1, 1]} : vector<4x16x16xf32> to vector<1x16x16xf32>
    %522 = vector.shape_cast %521 : vector<1x16x16xf32> to vector<16x16xf32>
    %523 = vector.broadcast %520 : f32 to vector<16x16xf32>
    %524 = arith.mulf %523, %522 : vector<16x16xf32>
    %525 = arith.addf %519, %524 : vector<16x16xf32>
    %c74 = arith.constant 74 : index
    %526 = memref.load %arg3[%c74] : memref<144xf32, #tpu.memory_space<smem>>
    %527 = vector.extract_strided_slice %7 {offsets = [0, 0, 0], sizes = [1, 16, 16], strides = [1, 1, 1]} : vector<4x16x16xf32> to vector<1x16x16xf32>
    %528 = vector.shape_cast %527 : vector<1x16x16xf32> to vector<16x16xf32>
    %529 = vector.broadcast %526 : f32 to vector<16x16xf32>
    %530 = arith.mulf %529, %528 : vector<16x16xf32>
    %531 = arith.addf %525, %530 : vector<16x16xf32>
    %c83 = arith.constant 83 : index
    %532 = memref.load %arg3[%c83] : memref<144xf32, #tpu.memory_space<smem>>
    %533 = vector.extract_strided_slice %7 {offsets = [1, 0, 0], sizes = [1, 16, 16], strides = [1, 1, 1]} : vector<4x16x16xf32> to vector<1x16x16xf32>
    %534 = vector.shape_cast %533 : vector<1x16x16xf32> to vector<16x16xf32>
    %535 = vector.broadcast %532 : f32 to vector<16x16xf32>
    %536 = arith.mulf %535, %534 : vector<16x16xf32>
    %537 = arith.addf %531, %536 : vector<16x16xf32>
    %c92 = arith.constant 92 : index
    %538 = memref.load %arg3[%c92] : memref<144xf32, #tpu.memory_space<smem>>
    %539 = vector.extract_strided_slice %7 {offsets = [2, 0, 0], sizes = [1, 16, 16], strides = [1, 1, 1]} : vector<4x16x16xf32> to vector<1x16x16xf32>
    %540 = vector.shape_cast %539 : vector<1x16x16xf32> to vector<16x16xf32>
    %541 = vector.broadcast %538 : f32 to vector<16x16xf32>
    %542 = arith.mulf %541, %540 : vector<16x16xf32>
    %543 = arith.addf %537, %542 : vector<16x16xf32>
    %c101 = arith.constant 101 : index
    %544 = memref.load %arg3[%c101] : memref<144xf32, #tpu.memory_space<smem>>
    %545 = vector.extract_strided_slice %7 {offsets = [3, 0, 0], sizes = [1, 16, 16], strides = [1, 1, 1]} : vector<4x16x16xf32> to vector<1x16x16xf32>
    %546 = vector.shape_cast %545 : vector<1x16x16xf32> to vector<16x16xf32>
    %547 = vector.broadcast %544 : f32 to vector<16x16xf32>
    %548 = arith.mulf %547, %546 : vector<16x16xf32>
    %549 = arith.addf %543, %548 : vector<16x16xf32>
    %c75 = arith.constant 75 : index
    %550 = memref.load %arg3[%c75] : memref<144xf32, #tpu.memory_space<smem>>
    %551 = vector.extract_strided_slice %8 {offsets = [0, 0, 0], sizes = [1, 16, 16], strides = [1, 1, 1]} : vector<4x16x16xf32> to vector<1x16x16xf32>
    %552 = vector.shape_cast %551 : vector<1x16x16xf32> to vector<16x16xf32>
    %553 = vector.broadcast %550 : f32 to vector<16x16xf32>
    %554 = arith.mulf %553, %552 : vector<16x16xf32>
    %555 = arith.addf %549, %554 : vector<16x16xf32>
    %c84 = arith.constant 84 : index
    %556 = memref.load %arg3[%c84] : memref<144xf32, #tpu.memory_space<smem>>
    %557 = vector.extract_strided_slice %8 {offsets = [1, 0, 0], sizes = [1, 16, 16], strides = [1, 1, 1]} : vector<4x16x16xf32> to vector<1x16x16xf32>
    %558 = vector.shape_cast %557 : vector<1x16x16xf32> to vector<16x16xf32>
    %559 = vector.broadcast %556 : f32 to vector<16x16xf32>
    %560 = arith.mulf %559, %558 : vector<16x16xf32>
    %561 = arith.addf %555, %560 : vector<16x16xf32>
    %c93 = arith.constant 93 : index
    %562 = memref.load %arg3[%c93] : memref<144xf32, #tpu.memory_space<smem>>
    %563 = vector.extract_strided_slice %8 {offsets = [2, 0, 0], sizes = [1, 16, 16], strides = [1, 1, 1]} : vector<4x16x16xf32> to vector<1x16x16xf32>
    %564 = vector.shape_cast %563 : vector<1x16x16xf32> to vector<16x16xf32>
    %565 = vector.broadcast %562 : f32 to vector<16x16xf32>
    %566 = arith.mulf %565, %564 : vector<16x16xf32>
    %567 = arith.addf %561, %566 : vector<16x16xf32>
    %c102 = arith.constant 102 : index
    %568 = memref.load %arg3[%c102] : memref<144xf32, #tpu.memory_space<smem>>
    %569 = vector.extract_strided_slice %8 {offsets = [3, 0, 0], sizes = [1, 16, 16], strides = [1, 1, 1]} : vector<4x16x16xf32> to vector<1x16x16xf32>
    %570 = vector.shape_cast %569 : vector<1x16x16xf32> to vector<16x16xf32>
    %571 = vector.broadcast %568 : f32 to vector<16x16xf32>
    %572 = arith.mulf %571, %570 : vector<16x16xf32>
    %573 = arith.addf %567, %572 : vector<16x16xf32>
    %c76 = arith.constant 76 : index
    %574 = memref.load %arg3[%c76] : memref<144xf32, #tpu.memory_space<smem>>
    %575 = vector.extract_strided_slice %9 {offsets = [0, 0, 0], sizes = [1, 16, 16], strides = [1, 1, 1]} : vector<4x16x16xf32> to vector<1x16x16xf32>
    %576 = vector.shape_cast %575 : vector<1x16x16xf32> to vector<16x16xf32>
    %577 = vector.broadcast %574 : f32 to vector<16x16xf32>
    %578 = arith.mulf %577, %576 : vector<16x16xf32>
    %579 = arith.addf %573, %578 : vector<16x16xf32>
    %c85 = arith.constant 85 : index
    %580 = memref.load %arg3[%c85] : memref<144xf32, #tpu.memory_space<smem>>
    %581 = vector.extract_strided_slice %9 {offsets = [1, 0, 0], sizes = [1, 16, 16], strides = [1, 1, 1]} : vector<4x16x16xf32> to vector<1x16x16xf32>
    %582 = vector.shape_cast %581 : vector<1x16x16xf32> to vector<16x16xf32>
    %583 = vector.broadcast %580 : f32 to vector<16x16xf32>
    %584 = arith.mulf %583, %582 : vector<16x16xf32>
    %585 = arith.addf %579, %584 : vector<16x16xf32>
    %c94 = arith.constant 94 : index
    %586 = memref.load %arg3[%c94] : memref<144xf32, #tpu.memory_space<smem>>
    %587 = vector.extract_strided_slice %9 {offsets = [2, 0, 0], sizes = [1, 16, 16], strides = [1, 1, 1]} : vector<4x16x16xf32> to vector<1x16x16xf32>
    %588 = vector.shape_cast %587 : vector<1x16x16xf32> to vector<16x16xf32>
    %589 = vector.broadcast %586 : f32 to vector<16x16xf32>
    %590 = arith.mulf %589, %588 : vector<16x16xf32>
    %591 = arith.addf %585, %590 : vector<16x16xf32>
    %c103 = arith.constant 103 : index
    %592 = memref.load %arg3[%c103] : memref<144xf32, #tpu.memory_space<smem>>
    %593 = vector.extract_strided_slice %9 {offsets = [3, 0, 0], sizes = [1, 16, 16], strides = [1, 1, 1]} : vector<4x16x16xf32> to vector<1x16x16xf32>
    %594 = vector.shape_cast %593 : vector<1x16x16xf32> to vector<16x16xf32>
    %595 = vector.broadcast %592 : f32 to vector<16x16xf32>
    %596 = arith.mulf %595, %594 : vector<16x16xf32>
    %597 = arith.addf %591, %596 : vector<16x16xf32>
    %c77 = arith.constant 77 : index
    %598 = memref.load %arg3[%c77] : memref<144xf32, #tpu.memory_space<smem>>
    %599 = vector.extract_strided_slice %10 {offsets = [0, 0, 0], sizes = [1, 16, 16], strides = [1, 1, 1]} : vector<4x16x16xf32> to vector<1x16x16xf32>
    %600 = vector.shape_cast %599 : vector<1x16x16xf32> to vector<16x16xf32>
    %601 = vector.broadcast %598 : f32 to vector<16x16xf32>
    %602 = arith.mulf %601, %600 : vector<16x16xf32>
    %603 = arith.addf %597, %602 : vector<16x16xf32>
    %c86 = arith.constant 86 : index
    %604 = memref.load %arg3[%c86] : memref<144xf32, #tpu.memory_space<smem>>
    %605 = vector.extract_strided_slice %10 {offsets = [1, 0, 0], sizes = [1, 16, 16], strides = [1, 1, 1]} : vector<4x16x16xf32> to vector<1x16x16xf32>
    %606 = vector.shape_cast %605 : vector<1x16x16xf32> to vector<16x16xf32>
    %607 = vector.broadcast %604 : f32 to vector<16x16xf32>
    %608 = arith.mulf %607, %606 : vector<16x16xf32>
    %609 = arith.addf %603, %608 : vector<16x16xf32>
    %c95 = arith.constant 95 : index
    %610 = memref.load %arg3[%c95] : memref<144xf32, #tpu.memory_space<smem>>
    %611 = vector.extract_strided_slice %10 {offsets = [2, 0, 0], sizes = [1, 16, 16], strides = [1, 1, 1]} : vector<4x16x16xf32> to vector<1x16x16xf32>
    %612 = vector.shape_cast %611 : vector<1x16x16xf32> to vector<16x16xf32>
    %613 = vector.broadcast %610 : f32 to vector<16x16xf32>
    %614 = arith.mulf %613, %612 : vector<16x16xf32>
    %615 = arith.addf %609, %614 : vector<16x16xf32>
    %c104 = arith.constant 104 : index
    %616 = memref.load %arg3[%c104] : memref<144xf32, #tpu.memory_space<smem>>
    %617 = vector.extract_strided_slice %10 {offsets = [3, 0, 0], sizes = [1, 16, 16], strides = [1, 1, 1]} : vector<4x16x16xf32> to vector<1x16x16xf32>
    %618 = vector.shape_cast %617 : vector<1x16x16xf32> to vector<16x16xf32>
    %619 = vector.broadcast %616 : f32 to vector<16x16xf32>
    %620 = arith.mulf %619, %618 : vector<16x16xf32>
    %621 = arith.addf %615, %620 : vector<16x16xf32>
    %c78 = arith.constant 78 : index
    %622 = memref.load %arg3[%c78] : memref<144xf32, #tpu.memory_space<smem>>
    %623 = vector.extract_strided_slice %11 {offsets = [0, 0, 0], sizes = [1, 16, 16], strides = [1, 1, 1]} : vector<4x16x16xf32> to vector<1x16x16xf32>
    %624 = vector.shape_cast %623 : vector<1x16x16xf32> to vector<16x16xf32>
    %625 = vector.broadcast %622 : f32 to vector<16x16xf32>
    %626 = arith.mulf %625, %624 : vector<16x16xf32>
    %627 = arith.addf %621, %626 : vector<16x16xf32>
    %c87 = arith.constant 87 : index
    %628 = memref.load %arg3[%c87] : memref<144xf32, #tpu.memory_space<smem>>
    %629 = vector.extract_strided_slice %11 {offsets = [1, 0, 0], sizes = [1, 16, 16], strides = [1, 1, 1]} : vector<4x16x16xf32> to vector<1x16x16xf32>
    %630 = vector.shape_cast %629 : vector<1x16x16xf32> to vector<16x16xf32>
    %631 = vector.broadcast %628 : f32 to vector<16x16xf32>
    %632 = arith.mulf %631, %630 : vector<16x16xf32>
    %633 = arith.addf %627, %632 : vector<16x16xf32>
    %c96 = arith.constant 96 : index
    %634 = memref.load %arg3[%c96] : memref<144xf32, #tpu.memory_space<smem>>
    %635 = vector.extract_strided_slice %11 {offsets = [2, 0, 0], sizes = [1, 16, 16], strides = [1, 1, 1]} : vector<4x16x16xf32> to vector<1x16x16xf32>
    %636 = vector.shape_cast %635 : vector<1x16x16xf32> to vector<16x16xf32>
    %637 = vector.broadcast %634 : f32 to vector<16x16xf32>
    %638 = arith.mulf %637, %636 : vector<16x16xf32>
    %639 = arith.addf %633, %638 : vector<16x16xf32>
    %c105 = arith.constant 105 : index
    %640 = memref.load %arg3[%c105] : memref<144xf32, #tpu.memory_space<smem>>
    %641 = vector.extract_strided_slice %11 {offsets = [3, 0, 0], sizes = [1, 16, 16], strides = [1, 1, 1]} : vector<4x16x16xf32> to vector<1x16x16xf32>
    %642 = vector.shape_cast %641 : vector<1x16x16xf32> to vector<16x16xf32>
    %643 = vector.broadcast %640 : f32 to vector<16x16xf32>
    %644 = arith.mulf %643, %642 : vector<16x16xf32>
    %645 = arith.addf %639, %644 : vector<16x16xf32>
    %c79 = arith.constant 79 : index
    %646 = memref.load %arg3[%c79] : memref<144xf32, #tpu.memory_space<smem>>
    %647 = vector.extract_strided_slice %12 {offsets = [0, 0, 0], sizes = [1, 16, 16], strides = [1, 1, 1]} : vector<4x16x16xf32> to vector<1x16x16xf32>
    %648 = vector.shape_cast %647 : vector<1x16x16xf32> to vector<16x16xf32>
    %649 = vector.broadcast %646 : f32 to vector<16x16xf32>
    %650 = arith.mulf %649, %648 : vector<16x16xf32>
    %651 = arith.addf %645, %650 : vector<16x16xf32>
    %c88 = arith.constant 88 : index
    %652 = memref.load %arg3[%c88] : memref<144xf32, #tpu.memory_space<smem>>
    %653 = vector.extract_strided_slice %12 {offsets = [1, 0, 0], sizes = [1, 16, 16], strides = [1, 1, 1]} : vector<4x16x16xf32> to vector<1x16x16xf32>
    %654 = vector.shape_cast %653 : vector<1x16x16xf32> to vector<16x16xf32>
    %655 = vector.broadcast %652 : f32 to vector<16x16xf32>
    %656 = arith.mulf %655, %654 : vector<16x16xf32>
    %657 = arith.addf %651, %656 : vector<16x16xf32>
    %c97 = arith.constant 97 : index
    %658 = memref.load %arg3[%c97] : memref<144xf32, #tpu.memory_space<smem>>
    %659 = vector.extract_strided_slice %12 {offsets = [2, 0, 0], sizes = [1, 16, 16], strides = [1, 1, 1]} : vector<4x16x16xf32> to vector<1x16x16xf32>
    %660 = vector.shape_cast %659 : vector<1x16x16xf32> to vector<16x16xf32>
    %661 = vector.broadcast %658 : f32 to vector<16x16xf32>
    %662 = arith.mulf %661, %660 : vector<16x16xf32>
    %663 = arith.addf %657, %662 : vector<16x16xf32>
    %c106 = arith.constant 106 : index
    %664 = memref.load %arg3[%c106] : memref<144xf32, #tpu.memory_space<smem>>
    %665 = vector.extract_strided_slice %12 {offsets = [3, 0, 0], sizes = [1, 16, 16], strides = [1, 1, 1]} : vector<4x16x16xf32> to vector<1x16x16xf32>
    %666 = vector.shape_cast %665 : vector<1x16x16xf32> to vector<16x16xf32>
    %667 = vector.broadcast %664 : f32 to vector<16x16xf32>
    %668 = arith.mulf %667, %666 : vector<16x16xf32>
    %669 = arith.addf %663, %668 : vector<16x16xf32>
    %c80 = arith.constant 80 : index
    %670 = memref.load %arg3[%c80] : memref<144xf32, #tpu.memory_space<smem>>
    %671 = vector.extract_strided_slice %13 {offsets = [0, 0, 0], sizes = [1, 16, 16], strides = [1, 1, 1]} : vector<4x16x16xf32> to vector<1x16x16xf32>
    %672 = vector.shape_cast %671 : vector<1x16x16xf32> to vector<16x16xf32>
    %673 = vector.broadcast %670 : f32 to vector<16x16xf32>
    %674 = arith.mulf %673, %672 : vector<16x16xf32>
    %675 = arith.addf %669, %674 : vector<16x16xf32>
    %c89 = arith.constant 89 : index
    %676 = memref.load %arg3[%c89] : memref<144xf32, #tpu.memory_space<smem>>
    %677 = vector.extract_strided_slice %13 {offsets = [1, 0, 0], sizes = [1, 16, 16], strides = [1, 1, 1]} : vector<4x16x16xf32> to vector<1x16x16xf32>
    %678 = vector.shape_cast %677 : vector<1x16x16xf32> to vector<16x16xf32>
    %679 = vector.broadcast %676 : f32 to vector<16x16xf32>
    %680 = arith.mulf %679, %678 : vector<16x16xf32>
    %681 = arith.addf %675, %680 : vector<16x16xf32>
    %c98 = arith.constant 98 : index
    %682 = memref.load %arg3[%c98] : memref<144xf32, #tpu.memory_space<smem>>
    %683 = vector.extract_strided_slice %13 {offsets = [2, 0, 0], sizes = [1, 16, 16], strides = [1, 1, 1]} : vector<4x16x16xf32> to vector<1x16x16xf32>
    %684 = vector.shape_cast %683 : vector<1x16x16xf32> to vector<16x16xf32>
    %685 = vector.broadcast %682 : f32 to vector<16x16xf32>
    %686 = arith.mulf %685, %684 : vector<16x16xf32>
    %687 = arith.addf %681, %686 : vector<16x16xf32>
    %c107 = arith.constant 107 : index
    %688 = memref.load %arg3[%c107] : memref<144xf32, #tpu.memory_space<smem>>
    %689 = vector.extract_strided_slice %13 {offsets = [3, 0, 0], sizes = [1, 16, 16], strides = [1, 1, 1]} : vector<4x16x16xf32> to vector<1x16x16xf32>
    %690 = vector.shape_cast %689 : vector<1x16x16xf32> to vector<16x16xf32>
    %691 = vector.broadcast %688 : f32 to vector<16x16xf32>
    %692 = arith.mulf %691, %690 : vector<16x16xf32>
    %693 = arith.addf %687, %692 : vector<16x16xf32>
    %694 = vector.extract_strided_slice %9 {offsets = [2, 0, 0], sizes = [1, 16, 16], strides = [1, 1, 1]} : vector<4x16x16xf32> to vector<1x16x16xf32>
    %695 = vector.shape_cast %694 : vector<1x16x16xf32> to vector<16x16xf32>
    %696 = arith.subf %693, %695 : vector<16x16xf32>
    %697 = arith.negf %696 : vector<16x16xf32>
    %698 = math.exp %697 : vector<16x16xf32>
    %cst_50 = arith.constant 1.000000e+00 : f32
    %699 = vector.broadcast %cst_50 : f32 to vector<16x16xf32>
    %700 = arith.addf %699, %698 : vector<16x16xf32>
    %701 = arith.divf %699, %700 : vector<16x16xf32>
    %702 = arith.mulf %701, %696 : vector<16x16xf32>
    %703 = arith.addf %695, %702 : vector<16x16xf32>
    %c0_51 = arith.constant 0 : index
    %c2_52 = arith.constant 2 : index
    %c0_53 = arith.constant 0 : index
    %c0_54 = arith.constant 0 : index
    %704 = vector.load %arg5[%c0_51, %c2_52, %c0_53, %c0_54] : memref<1x4x16x16xf32, #tpu.memory_space<vmem>>, vector<1x1x16x16xf32>
    %705 = vector.shape_cast %704 : vector<1x1x16x16xf32> to vector<16x16xf32>
    %706 = vector.shape_cast %703 : vector<16x16xf32> to vector<1x1x16x16xf32>
    tpu.vector_store %arg5[%c0_51, %c2_52, %c0_53, %c0_54], %706 {strides = array<i32>} : memref<1x4x16x16xf32, #tpu.memory_space<vmem>>, vector<1x1x16x16xf32>,
    %c3_55 = arith.constant 3 : index
    %707 = memref.load %arg4[%c3_55] : memref<4xf32, #tpu.memory_space<smem>>
    %708 = vector.broadcast %707 : f32 to vector<16x16xf32>
    %c108 = arith.constant 108 : index
    %709 = memref.load %arg3[%c108] : memref<144xf32, #tpu.memory_space<smem>>
    %710 = vector.extract_strided_slice %5 {offsets = [0, 0, 0], sizes = [1, 16, 16], strides = [1, 1, 1]} : vector<4x16x16xf32> to vector<1x16x16xf32>
    %711 = vector.shape_cast %710 : vector<1x16x16xf32> to vector<16x16xf32>
    %712 = vector.broadcast %709 : f32 to vector<16x16xf32>
    %713 = arith.mulf %712, %711 : vector<16x16xf32>
    %714 = arith.addf %708, %713 : vector<16x16xf32>
    %c117 = arith.constant 117 : index
    %715 = memref.load %arg3[%c117] : memref<144xf32, #tpu.memory_space<smem>>
    %716 = vector.extract_strided_slice %5 {offsets = [1, 0, 0], sizes = [1, 16, 16], strides = [1, 1, 1]} : vector<4x16x16xf32> to vector<1x16x16xf32>
    %717 = vector.shape_cast %716 : vector<1x16x16xf32> to vector<16x16xf32>
    %718 = vector.broadcast %715 : f32 to vector<16x16xf32>
    %719 = arith.mulf %718, %717 : vector<16x16xf32>
    %720 = arith.addf %714, %719 : vector<16x16xf32>
    %c126 = arith.constant 126 : index
    %721 = memref.load %arg3[%c126] : memref<144xf32, #tpu.memory_space<smem>>
    %722 = vector.extract_strided_slice %5 {offsets = [2, 0, 0], sizes = [1, 16, 16], strides = [1, 1, 1]} : vector<4x16x16xf32> to vector<1x16x16xf32>
    %723 = vector.shape_cast %722 : vector<1x16x16xf32> to vector<16x16xf32>
    %724 = vector.broadcast %721 : f32 to vector<16x16xf32>
    %725 = arith.mulf %724, %723 : vector<16x16xf32>
    %726 = arith.addf %720, %725 : vector<16x16xf32>
    %c135 = arith.constant 135 : index
    %727 = memref.load %arg3[%c135] : memref<144xf32, #tpu.memory_space<smem>>
    %728 = vector.extract_strided_slice %5 {offsets = [3, 0, 0], sizes = [1, 16, 16], strides = [1, 1, 1]} : vector<4x16x16xf32> to vector<1x16x16xf32>
    %729 = vector.shape_cast %728 : vector<1x16x16xf32> to vector<16x16xf32>
    %730 = vector.broadcast %727 : f32 to vector<16x16xf32>
    %731 = arith.mulf %730, %729 : vector<16x16xf32>
    %732 = arith.addf %726, %731 : vector<16x16xf32>
    %c109 = arith.constant 109 : index
    %733 = memref.load %arg3[%c109] : memref<144xf32, #tpu.memory_space<smem>>
    %734 = vector.extract_strided_slice %6 {offsets = [0, 0, 0], sizes = [1, 16, 16], strides = [1, 1, 1]} : vector<4x16x16xf32> to vector<1x16x16xf32>
    %735 = vector.shape_cast %734 : vector<1x16x16xf32> to vector<16x16xf32>
    %736 = vector.broadcast %733 : f32 to vector<16x16xf32>
    %737 = arith.mulf %736, %735 : vector<16x16xf32>
    %738 = arith.addf %732, %737 : vector<16x16xf32>
    %c118 = arith.constant 118 : index
    %739 = memref.load %arg3[%c118] : memref<144xf32, #tpu.memory_space<smem>>
    %740 = vector.extract_strided_slice %6 {offsets = [1, 0, 0], sizes = [1, 16, 16], strides = [1, 1, 1]} : vector<4x16x16xf32> to vector<1x16x16xf32>
    %741 = vector.shape_cast %740 : vector<1x16x16xf32> to vector<16x16xf32>
    %742 = vector.broadcast %739 : f32 to vector<16x16xf32>
    %743 = arith.mulf %742, %741 : vector<16x16xf32>
    %744 = arith.addf %738, %743 : vector<16x16xf32>
    %c127 = arith.constant 127 : index
    %745 = memref.load %arg3[%c127] : memref<144xf32, #tpu.memory_space<smem>>
    %746 = vector.extract_strided_slice %6 {offsets = [2, 0, 0], sizes = [1, 16, 16], strides = [1, 1, 1]} : vector<4x16x16xf32> to vector<1x16x16xf32>
    %747 = vector.shape_cast %746 : vector<1x16x16xf32> to vector<16x16xf32>
    %748 = vector.broadcast %745 : f32 to vector<16x16xf32>
    %749 = arith.mulf %748, %747 : vector<16x16xf32>
    %750 = arith.addf %744, %749 : vector<16x16xf32>
    %c136 = arith.constant 136 : index
    %751 = memref.load %arg3[%c136] : memref<144xf32, #tpu.memory_space<smem>>
    %752 = vector.extract_strided_slice %6 {offsets = [3, 0, 0], sizes = [1, 16, 16], strides = [1, 1, 1]} : vector<4x16x16xf32> to vector<1x16x16xf32>
    %753 = vector.shape_cast %752 : vector<1x16x16xf32> to vector<16x16xf32>
    %754 = vector.broadcast %751 : f32 to vector<16x16xf32>
    %755 = arith.mulf %754, %753 : vector<16x16xf32>
    %756 = arith.addf %750, %755 : vector<16x16xf32>
    %c110 = arith.constant 110 : index
    %757 = memref.load %arg3[%c110] : memref<144xf32, #tpu.memory_space<smem>>
    %758 = vector.extract_strided_slice %7 {offsets = [0, 0, 0], sizes = [1, 16, 16], strides = [1, 1, 1]} : vector<4x16x16xf32> to vector<1x16x16xf32>
    %759 = vector.shape_cast %758 : vector<1x16x16xf32> to vector<16x16xf32>
    %760 = vector.broadcast %757 : f32 to vector<16x16xf32>
    %761 = arith.mulf %760, %759 : vector<16x16xf32>
    %762 = arith.addf %756, %761 : vector<16x16xf32>
    %c119 = arith.constant 119 : index
    %763 = memref.load %arg3[%c119] : memref<144xf32, #tpu.memory_space<smem>>
    %764 = vector.extract_strided_slice %7 {offsets = [1, 0, 0], sizes = [1, 16, 16], strides = [1, 1, 1]} : vector<4x16x16xf32> to vector<1x16x16xf32>
    %765 = vector.shape_cast %764 : vector<1x16x16xf32> to vector<16x16xf32>
    %766 = vector.broadcast %763 : f32 to vector<16x16xf32>
    %767 = arith.mulf %766, %765 : vector<16x16xf32>
    %768 = arith.addf %762, %767 : vector<16x16xf32>
    %c128 = arith.constant 128 : index
    %769 = memref.load %arg3[%c128] : memref<144xf32, #tpu.memory_space<smem>>
    %770 = vector.extract_strided_slice %7 {offsets = [2, 0, 0], sizes = [1, 16, 16], strides = [1, 1, 1]} : vector<4x16x16xf32> to vector<1x16x16xf32>
    %771 = vector.shape_cast %770 : vector<1x16x16xf32> to vector<16x16xf32>
    %772 = vector.broadcast %769 : f32 to vector<16x16xf32>
    %773 = arith.mulf %772, %771 : vector<16x16xf32>
    %774 = arith.addf %768, %773 : vector<16x16xf32>
    %c137 = arith.constant 137 : index
    %775 = memref.load %arg3[%c137] : memref<144xf32, #tpu.memory_space<smem>>
    %776 = vector.extract_strided_slice %7 {offsets = [3, 0, 0], sizes = [1, 16, 16], strides = [1, 1, 1]} : vector<4x16x16xf32> to vector<1x16x16xf32>
    %777 = vector.shape_cast %776 : vector<1x16x16xf32> to vector<16x16xf32>
    %778 = vector.broadcast %775 : f32 to vector<16x16xf32>
    %779 = arith.mulf %778, %777 : vector<16x16xf32>
    %780 = arith.addf %774, %779 : vector<16x16xf32>
    %c111 = arith.constant 111 : index
    %781 = memref.load %arg3[%c111] : memref<144xf32, #tpu.memory_space<smem>>
    %782 = vector.extract_strided_slice %8 {offsets = [0, 0, 0], sizes = [1, 16, 16], strides = [1, 1, 1]} : vector<4x16x16xf32> to vector<1x16x16xf32>
    %783 = vector.shape_cast %782 : vector<1x16x16xf32> to vector<16x16xf32>
    %784 = vector.broadcast %781 : f32 to vector<16x16xf32>
    %785 = arith.mulf %784, %783 : vector<16x16xf32>
    %786 = arith.addf %780, %785 : vector<16x16xf32>
    %c120 = arith.constant 120 : index
    %787 = memref.load %arg3[%c120] : memref<144xf32, #tpu.memory_space<smem>>
    %788 = vector.extract_strided_slice %8 {offsets = [1, 0, 0], sizes = [1, 16, 16], strides = [1, 1, 1]} : vector<4x16x16xf32> to vector<1x16x16xf32>
    %789 = vector.shape_cast %788 : vector<1x16x16xf32> to vector<16x16xf32>
    %790 = vector.broadcast %787 : f32 to vector<16x16xf32>
    %791 = arith.mulf %790, %789 : vector<16x16xf32>
    %792 = arith.addf %786, %791 : vector<16x16xf32>
    %c129 = arith.constant 129 : index
    %793 = memref.load %arg3[%c129] : memref<144xf32, #tpu.memory_space<smem>>
    %794 = vector.extract_strided_slice %8 {offsets = [2, 0, 0], sizes = [1, 16, 16], strides = [1, 1, 1]} : vector<4x16x16xf32> to vector<1x16x16xf32>
    %795 = vector.shape_cast %794 : vector<1x16x16xf32> to vector<16x16xf32>
    %796 = vector.broadcast %793 : f32 to vector<16x16xf32>
    %797 = arith.mulf %796, %795 : vector<16x16xf32>
    %798 = arith.addf %792, %797 : vector<16x16xf32>
    %c138 = arith.constant 138 : index
    %799 = memref.load %arg3[%c138] : memref<144xf32, #tpu.memory_space<smem>>
    %800 = vector.extract_strided_slice %8 {offsets = [3, 0, 0], sizes = [1, 16, 16], strides = [1, 1, 1]} : vector<4x16x16xf32> to vector<1x16x16xf32>
    %801 = vector.shape_cast %800 : vector<1x16x16xf32> to vector<16x16xf32>
    %802 = vector.broadcast %799 : f32 to vector<16x16xf32>
    %803 = arith.mulf %802, %801 : vector<16x16xf32>
    %804 = arith.addf %798, %803 : vector<16x16xf32>
    %c112 = arith.constant 112 : index
    %805 = memref.load %arg3[%c112] : memref<144xf32, #tpu.memory_space<smem>>
    %806 = vector.extract_strided_slice %9 {offsets = [0, 0, 0], sizes = [1, 16, 16], strides = [1, 1, 1]} : vector<4x16x16xf32> to vector<1x16x16xf32>
    %807 = vector.shape_cast %806 : vector<1x16x16xf32> to vector<16x16xf32>
    %808 = vector.broadcast %805 : f32 to vector<16x16xf32>
    %809 = arith.mulf %808, %807 : vector<16x16xf32>
    %810 = arith.addf %804, %809 : vector<16x16xf32>
    %c121 = arith.constant 121 : index
    %811 = memref.load %arg3[%c121] : memref<144xf32, #tpu.memory_space<smem>>
    %812 = vector.extract_strided_slice %9 {offsets = [1, 0, 0], sizes = [1, 16, 16], strides = [1, 1, 1]} : vector<4x16x16xf32> to vector<1x16x16xf32>
    %813 = vector.shape_cast %812 : vector<1x16x16xf32> to vector<16x16xf32>
    %814 = vector.broadcast %811 : f32 to vector<16x16xf32>
    %815 = arith.mulf %814, %813 : vector<16x16xf32>
    %816 = arith.addf %810, %815 : vector<16x16xf32>
    %c130 = arith.constant 130 : index
    %817 = memref.load %arg3[%c130] : memref<144xf32, #tpu.memory_space<smem>>
    %818 = vector.extract_strided_slice %9 {offsets = [2, 0, 0], sizes = [1, 16, 16], strides = [1, 1, 1]} : vector<4x16x16xf32> to vector<1x16x16xf32>
    %819 = vector.shape_cast %818 : vector<1x16x16xf32> to vector<16x16xf32>
    %820 = vector.broadcast %817 : f32 to vector<16x16xf32>
    %821 = arith.mulf %820, %819 : vector<16x16xf32>
    %822 = arith.addf %816, %821 : vector<16x16xf32>
    %c139 = arith.constant 139 : index
    %823 = memref.load %arg3[%c139] : memref<144xf32, #tpu.memory_space<smem>>
    %824 = vector.extract_strided_slice %9 {offsets = [3, 0, 0], sizes = [1, 16, 16], strides = [1, 1, 1]} : vector<4x16x16xf32> to vector<1x16x16xf32>
    %825 = vector.shape_cast %824 : vector<1x16x16xf32> to vector<16x16xf32>
    %826 = vector.broadcast %823 : f32 to vector<16x16xf32>
    %827 = arith.mulf %826, %825 : vector<16x16xf32>
    %828 = arith.addf %822, %827 : vector<16x16xf32>
    %c113 = arith.constant 113 : index
    %829 = memref.load %arg3[%c113] : memref<144xf32, #tpu.memory_space<smem>>
    %830 = vector.extract_strided_slice %10 {offsets = [0, 0, 0], sizes = [1, 16, 16], strides = [1, 1, 1]} : vector<4x16x16xf32> to vector<1x16x16xf32>
    %831 = vector.shape_cast %830 : vector<1x16x16xf32> to vector<16x16xf32>
    %832 = vector.broadcast %829 : f32 to vector<16x16xf32>
    %833 = arith.mulf %832, %831 : vector<16x16xf32>
    %834 = arith.addf %828, %833 : vector<16x16xf32>
    %c122 = arith.constant 122 : index
    %835 = memref.load %arg3[%c122] : memref<144xf32, #tpu.memory_space<smem>>
    %836 = vector.extract_strided_slice %10 {offsets = [1, 0, 0], sizes = [1, 16, 16], strides = [1, 1, 1]} : vector<4x16x16xf32> to vector<1x16x16xf32>
    %837 = vector.shape_cast %836 : vector<1x16x16xf32> to vector<16x16xf32>
    %838 = vector.broadcast %835 : f32 to vector<16x16xf32>
    %839 = arith.mulf %838, %837 : vector<16x16xf32>
    %840 = arith.addf %834, %839 : vector<16x16xf32>
    %c131 = arith.constant 131 : index
    %841 = memref.load %arg3[%c131] : memref<144xf32, #tpu.memory_space<smem>>
    %842 = vector.extract_strided_slice %10 {offsets = [2, 0, 0], sizes = [1, 16, 16], strides = [1, 1, 1]} : vector<4x16x16xf32> to vector<1x16x16xf32>
    %843 = vector.shape_cast %842 : vector<1x16x16xf32> to vector<16x16xf32>
    %844 = vector.broadcast %841 : f32 to vector<16x16xf32>
    %845 = arith.mulf %844, %843 : vector<16x16xf32>
    %846 = arith.addf %840, %845 : vector<16x16xf32>
    %c140 = arith.constant 140 : index
    %847 = memref.load %arg3[%c140] : memref<144xf32, #tpu.memory_space<smem>>
    %848 = vector.extract_strided_slice %10 {offsets = [3, 0, 0], sizes = [1, 16, 16], strides = [1, 1, 1]} : vector<4x16x16xf32> to vector<1x16x16xf32>
    %849 = vector.shape_cast %848 : vector<1x16x16xf32> to vector<16x16xf32>
    %850 = vector.broadcast %847 : f32 to vector<16x16xf32>
    %851 = arith.mulf %850, %849 : vector<16x16xf32>
    %852 = arith.addf %846, %851 : vector<16x16xf32>
    %c114 = arith.constant 114 : index
    %853 = memref.load %arg3[%c114] : memref<144xf32, #tpu.memory_space<smem>>
    %854 = vector.extract_strided_slice %11 {offsets = [0, 0, 0], sizes = [1, 16, 16], strides = [1, 1, 1]} : vector<4x16x16xf32> to vector<1x16x16xf32>
    %855 = vector.shape_cast %854 : vector<1x16x16xf32> to vector<16x16xf32>
    %856 = vector.broadcast %853 : f32 to vector<16x16xf32>
    %857 = arith.mulf %856, %855 : vector<16x16xf32>
    %858 = arith.addf %852, %857 : vector<16x16xf32>
    %c123 = arith.constant 123 : index
    %859 = memref.load %arg3[%c123] : memref<144xf32, #tpu.memory_space<smem>>
    %860 = vector.extract_strided_slice %11 {offsets = [1, 0, 0], sizes = [1, 16, 16], strides = [1, 1, 1]} : vector<4x16x16xf32> to vector<1x16x16xf32>
    %861 = vector.shape_cast %860 : vector<1x16x16xf32> to vector<16x16xf32>
    %862 = vector.broadcast %859 : f32 to vector<16x16xf32>
    %863 = arith.mulf %862, %861 : vector<16x16xf32>
    %864 = arith.addf %858, %863 : vector<16x16xf32>
    %c132 = arith.constant 132 : index
    %865 = memref.load %arg3[%c132] : memref<144xf32, #tpu.memory_space<smem>>
    %866 = vector.extract_strided_slice %11 {offsets = [2, 0, 0], sizes = [1, 16, 16], strides = [1, 1, 1]} : vector<4x16x16xf32> to vector<1x16x16xf32>
    %867 = vector.shape_cast %866 : vector<1x16x16xf32> to vector<16x16xf32>
    %868 = vector.broadcast %865 : f32 to vector<16x16xf32>
    %869 = arith.mulf %868, %867 : vector<16x16xf32>
    %870 = arith.addf %864, %869 : vector<16x16xf32>
    %c141 = arith.constant 141 : index
    %871 = memref.load %arg3[%c141] : memref<144xf32, #tpu.memory_space<smem>>
    %872 = vector.extract_strided_slice %11 {offsets = [3, 0, 0], sizes = [1, 16, 16], strides = [1, 1, 1]} : vector<4x16x16xf32> to vector<1x16x16xf32>
    %873 = vector.shape_cast %872 : vector<1x16x16xf32> to vector<16x16xf32>
    %874 = vector.broadcast %871 : f32 to vector<16x16xf32>
    %875 = arith.mulf %874, %873 : vector<16x16xf32>
    %876 = arith.addf %870, %875 : vector<16x16xf32>
    %c115 = arith.constant 115 : index
    %877 = memref.load %arg3[%c115] : memref<144xf32, #tpu.memory_space<smem>>
    %878 = vector.extract_strided_slice %12 {offsets = [0, 0, 0], sizes = [1, 16, 16], strides = [1, 1, 1]} : vector<4x16x16xf32> to vector<1x16x16xf32>
    %879 = vector.shape_cast %878 : vector<1x16x16xf32> to vector<16x16xf32>
    %880 = vector.broadcast %877 : f32 to vector<16x16xf32>
    %881 = arith.mulf %880, %879 : vector<16x16xf32>
    %882 = arith.addf %876, %881 : vector<16x16xf32>
    %c124 = arith.constant 124 : index
    %883 = memref.load %arg3[%c124] : memref<144xf32, #tpu.memory_space<smem>>
    %884 = vector.extract_strided_slice %12 {offsets = [1, 0, 0], sizes = [1, 16, 16], strides = [1, 1, 1]} : vector<4x16x16xf32> to vector<1x16x16xf32>
    %885 = vector.shape_cast %884 : vector<1x16x16xf32> to vector<16x16xf32>
    %886 = vector.broadcast %883 : f32 to vector<16x16xf32>
    %887 = arith.mulf %886, %885 : vector<16x16xf32>
    %888 = arith.addf %882, %887 : vector<16x16xf32>
    %c133 = arith.constant 133 : index
    %889 = memref.load %arg3[%c133] : memref<144xf32, #tpu.memory_space<smem>>
    %890 = vector.extract_strided_slice %12 {offsets = [2, 0, 0], sizes = [1, 16, 16], strides = [1, 1, 1]} : vector<4x16x16xf32> to vector<1x16x16xf32>
    %891 = vector.shape_cast %890 : vector<1x16x16xf32> to vector<16x16xf32>
    %892 = vector.broadcast %889 : f32 to vector<16x16xf32>
    %893 = arith.mulf %892, %891 : vector<16x16xf32>
    %894 = arith.addf %888, %893 : vector<16x16xf32>
    %c142 = arith.constant 142 : index
    %895 = memref.load %arg3[%c142] : memref<144xf32, #tpu.memory_space<smem>>
    %896 = vector.extract_strided_slice %12 {offsets = [3, 0, 0], sizes = [1, 16, 16], strides = [1, 1, 1]} : vector<4x16x16xf32> to vector<1x16x16xf32>
    %897 = vector.shape_cast %896 : vector<1x16x16xf32> to vector<16x16xf32>
    %898 = vector.broadcast %895 : f32 to vector<16x16xf32>
    %899 = arith.mulf %898, %897 : vector<16x16xf32>
    %900 = arith.addf %894, %899 : vector<16x16xf32>
    %c116 = arith.constant 116 : index
    %901 = memref.load %arg3[%c116] : memref<144xf32, #tpu.memory_space<smem>>
    %902 = vector.extract_strided_slice %13 {offsets = [0, 0, 0], sizes = [1, 16, 16], strides = [1, 1, 1]} : vector<4x16x16xf32> to vector<1x16x16xf32>
    %903 = vector.shape_cast %902 : vector<1x16x16xf32> to vector<16x16xf32>
    %904 = vector.broadcast %901 : f32 to vector<16x16xf32>
    %905 = arith.mulf %904, %903 : vector<16x16xf32>
    %906 = arith.addf %900, %905 : vector<16x16xf32>
    %c125 = arith.constant 125 : index
    %907 = memref.load %arg3[%c125] : memref<144xf32, #tpu.memory_space<smem>>
    %908 = vector.extract_strided_slice %13 {offsets = [1, 0, 0], sizes = [1, 16, 16], strides = [1, 1, 1]} : vector<4x16x16xf32> to vector<1x16x16xf32>
    %909 = vector.shape_cast %908 : vector<1x16x16xf32> to vector<16x16xf32>
    %910 = vector.broadcast %907 : f32 to vector<16x16xf32>
    %911 = arith.mulf %910, %909 : vector<16x16xf32>
    %912 = arith.addf %906, %911 : vector<16x16xf32>
    %c134 = arith.constant 134 : index
    %913 = memref.load %arg3[%c134] : memref<144xf32, #tpu.memory_space<smem>>
    %914 = vector.extract_strided_slice %13 {offsets = [2, 0, 0], sizes = [1, 16, 16], strides = [1, 1, 1]} : vector<4x16x16xf32> to vector<1x16x16xf32>
    %915 = vector.shape_cast %914 : vector<1x16x16xf32> to vector<16x16xf32>
    %916 = vector.broadcast %913 : f32 to vector<16x16xf32>
    %917 = arith.mulf %916, %915 : vector<16x16xf32>
    %918 = arith.addf %912, %917 : vector<16x16xf32>
    %c143 = arith.constant 143 : index
    %919 = memref.load %arg3[%c143] : memref<144xf32, #tpu.memory_space<smem>>
    %920 = vector.extract_strided_slice %13 {offsets = [3, 0, 0], sizes = [1, 16, 16], strides = [1, 1, 1]} : vector<4x16x16xf32> to vector<1x16x16xf32>
    %921 = vector.shape_cast %920 : vector<1x16x16xf32> to vector<16x16xf32>
    %922 = vector.broadcast %919 : f32 to vector<16x16xf32>
    %923 = arith.mulf %922, %921 : vector<16x16xf32>
    %924 = arith.addf %918, %923 : vector<16x16xf32>
    %925 = vector.extract_strided_slice %9 {offsets = [3, 0, 0], sizes = [1, 16, 16], strides = [1, 1, 1]} : vector<4x16x16xf32> to vector<1x16x16xf32>
    %926 = vector.shape_cast %925 : vector<1x16x16xf32> to vector<16x16xf32>
    %927 = arith.subf %924, %926 : vector<16x16xf32>
    %928 = arith.negf %927 : vector<16x16xf32>
    %929 = math.exp %928 : vector<16x16xf32>
    %cst_56 = arith.constant 1.000000e+00 : f32
    %930 = vector.broadcast %cst_56 : f32 to vector<16x16xf32>
    %931 = arith.addf %930, %929 : vector<16x16xf32>
    %932 = arith.divf %930, %931 : vector<16x16xf32>
    %933 = arith.mulf %932, %927 : vector<16x16xf32>
    %934 = arith.addf %926, %933 : vector<16x16xf32>
    %c0_57 = arith.constant 0 : index
    %c3_58 = arith.constant 3 : index
    %c0_59 = arith.constant 0 : index
    %c0_60 = arith.constant 0 : index
    %935 = vector.load %arg5[%c0_57, %c3_58, %c0_59, %c0_60] : memref<1x4x16x16xf32, #tpu.memory_space<vmem>>, vector<1x1x16x16xf32>
    %936 = vector.shape_cast %935 : vector<1x1x16x16xf32> to vector<16x16xf32>
    %937 = vector.shape_cast %934 : vector<16x16xf32> to vector<1x1x16x16xf32>
    tpu.vector_store %arg5[%c0_57, %c3_58, %c0_59, %c0_60], %937 {strides = array<i32>} : memref<1x4x16x16xf32, #tpu.memory_space<vmem>>, vector<1x1x16x16xf32>,
    return
  }
  func.func @transform_0(%arg0: i32, %arg1: i32) -> (i32, i32, i32, i32) {
    %c0_i32 = arith.constant 0 : i32
    %c0_i32_0 = arith.constant 0 : i32
    %c0_i32_1 = arith.constant 0 : i32
    return %arg0, %c0_i32, %arg1, %c0_i32_0 : i32, i32, i32, i32
  }
  func.func @transform_1(%arg0: i32, %arg1: i32) -> i32 {
    %c0_i32 = arith.constant 0 : i32
    %c0_i32_0 = arith.constant 0 : i32
    return %c0_i32 : i32
  }
  func.func @transform_2(%arg0: i32, %arg1: i32) -> i32 {
    %c0_i32 = arith.constant 0 : i32
    %c0_i32_0 = arith.constant 0 : i32
    return %c0_i32 : i32
  }
  func.func @transform_3(%arg0: i32, %arg1: i32) -> (i32, i32, i32, i32) {
    %c0_i32 = arith.constant 0 : i32
    %c0_i32_0 = arith.constant 0 : i32
    %c0_i32_1 = arith.constant 0 : i32
    return %arg0, %c0_i32, %arg1, %c0_i32_0 : i32, i32, i32, i32
  }
}

</mosaic_0001>

<llo_original>
// kernel: tpu_custom_call.1
$region0: #{tpu_custom_call.1}
  #allocation0 [shape = 'u32[]', space=smem, size = 0x4, offset = 0x4, fixed_abs, tag = 'smem constant byte address 0x4 - core index']
  #allocation1 [shape = 'u32[144,128]{1,0:T(1,128)}', space=vmem, size = 0x12000, scoped, tag = 'internal scratch']
  #allocation2 [shape = 'f32[4,18,18]{2,1,0:T(8,128)}', space=vmem, size = 0xc000, scoped, tag = 'scratch operand']
  %s0 = inlined_call_operand.hbm [shape: f32[2,4,16,16], index: 0, kind: input, shape index: {}]
  %s1 = inlined_call_operand.vmem [shape: f32[144], index: 1, kind: input, shape index: {}]
  %s2 = inlined_call_operand.vmem [shape: f32[4], index: 2, kind: input, shape index: {}]
  %s3 = inlined_call_operand.hbm [shape: f32[2,4,16,16], index: 3, kind: output, shape index: {}]
  %s4 = sld [smem:[#allocation0]]
  $region57: #{tpu_custom_call.1} parent=0
    _
  %s6 = ssub.s32 1, %s4
  %s7 = scalar_select 0, %s6, %s4
  $region1: #{tpu_custom_call.1} parent=0
    #allocation3 [shape = 'u8[65536]{0}', space=vmem, size = 0x10000, scoped, tag = 'input window, operand 0']
    #allocation4 [shape = 's32[2]{0}', space=sflag, size = 0x8, scoped, tag = 'scoped memory for tpu_custom_call.1']
    #allocation5 [shape = 's32[2]{0}', space=sflag, size = 0x8, scoped, tag = 'scoped memory for tpu_custom_call.1']
    #allocation6 [shape = 's32[2]{0}', space=sflag, size = 0x8, scoped, tag = 'scoped memory for tpu_custom_call.1']
    #allocation7 [shape = 'u8[1024]{0}', space=smem, size = 0x400, scoped, tag = 'input window, operand 1, single buffered']
    #allocation8 [shape = 'u8[512]{0}', space=smem, size = 0x200, scoped, tag = 'input window, operand 2, single buffered']
    #allocation9 [shape = 's32[1]{0}', space=sflag, size = 0x4, scoped, tag = 'scoped memory for tpu_custom_call.1']
    #allocation10 [shape = 'u8[65536]{0}', space=vmem, size = 0x10000, scoped, tag = 'output window, operand 0']
    %8 = vsyncpa [#allocation4], 0
    %s9 = scalar_lea.sflag [#allocation4], 1
    %10 = vsyncpa %s9, 0
    %11 = vsyncpa [#allocation6], 0
    %12 = vsyncpa [#allocation9], 0
    %13 = vsyncpa [#allocation5], 0
    %s14 = scalar_lea.sflag [#allocation5], 1
    %15 = vsyncpa %s14, 0
    loop: start=0, step=1, limit=4
    $region2: #{tpu_custom_call.1} parent=1 // loop_pre_header
      _
    $region3: #{tpu_custom_call.1} parent=1 // loop_header
      %s17 = sphi 0, %s21
      %p18 = scmp.ge.s32.totalorder %s17, 4
      %s24 = sphi 0, %s36
      %s25 = sphi 0, %s32
      %s26 = sphi 0, %s24
      %s27 = sphi 0, %s25
      %s28 = sphi 0, %s26
      %s29 = sphi 0, %s27
      %s41 = sphi 0, %s43
      %s44 = sphi 0, %s41
      %s45 = sphi 0, %s44
      %s61 = sphi 0, %s45
      %s65 = sphi 0, %s65
      %s67 = sphi 0, %s65
      %s68 = sphi 0, %s67
      %s82 = sphi 0, %s68
      %s86 = sphi 0, %s86
      %s88 = sphi 0, %s86
      %s89 = sphi 0, %s88
      %s103 = sphi 0, %s89
      %s111 = sphi 0, %s113
      %s114 = sphi 0, %s111
      %s115 = sphi 0, %s114
      %s131 = sphi 0, %s115
    $region4: #{tpu_custom_call.1} parent=1 // loop_header_branch
      %20 = sbr.rel (%p18) target = $region8
    $region5: #{tpu_custom_call.1} parent=1 // loop_body
      %s22 = ssub.s32 %s17, 1
      %s23 = ssub.s32 %s17, 2
      %s30 = sadd.s32 1, %s25
      %p31 = scmp.ge.s32.totalorder %s30, 1
      %s32 = scalar_select %p31, 0, %s30
      %s33 = sadd.s32 1, %s24
      %s34 = scalar_select %p31, %s33, %s24
      %p35 = scmp.ge.s32.totalorder %s34, 2
      %s36 = scalar_select %p35, 0, %s34
      %s37 = ssub.s32 %s24, %s36
      %s38 = ssub.s32 %s25, %s32
      %s39 = sor.u32 %s37, %s38
      %p40 = scmp.eq.s32.totalorder %s39, 0
      %s42 = sadd.s32 %s41, 1
      %s43 = scalar_select %p40, %s41, %s42
      %p46 = pneg %p40
      %p47 = scmp.eq.s32.totalorder %s17, 1
      %p48 = por %p46, %p47
      %p49 = scmp.ne.s32.totalorder %s41, %s44
      %p50 = scmp.eq.s32.totalorder %s17, 0
      %p51 = por %p49, %p50
      %p52 = scmp.ne.s32.totalorder %s41, %s44
      %p53 = scmp.eq.s32.totalorder %s22, 1
      %p54 = por %p52, %p53
      %p55 = scmp.ne.s32.totalorder %s44, %s45
      %p56 = scmp.eq.s32.totalorder %s22, 0
      %p57 = por %p55, %p56
      %p58 = scmp.ne.s32.totalorder %s44, %s45
      %p59 = scmp.eq.s32.totalorder %s23, 1
      %p60 = por %p58, %p59
      %p62 = scmp.ne.s32.totalorder %s45, %s61
      %p63 = scmp.eq.s32.totalorder %s23, 0
      %p64 = por %p62, %p63
      %s66 = sadd.s32 %s65, 1
      %p69 = scmp.eq.s32.totalorder %s17, 1
      %p70 = scmp.ne.s32.totalorder %s65, %s67
      %p71 = scmp.eq.s32.totalorder %s17, 0
      %p72 = por %p70, %p71
      %p73 = scmp.ne.s32.totalorder %s65, %s67
      %p74 = scmp.eq.s32.totalorder %s22, 1
      %p75 = por %p73, %p74
      %p76 = scmp.ne.s32.totalorder %s67, %s68
      %p77 = scmp.eq.s32.totalorder %s22, 0
      %p78 = por %p76, %p77
      %p79 = scmp.ne.s32.totalorder %s67, %s68
      %p80 = scmp.eq.s32.totalorder %s23, 1
      %p81 = por %p79, %p80
      %p83 = scmp.ne.s32.totalorder %s68, %s82
      %p84 = scmp.eq.s32.totalorder %s23, 0
      %p85 = por %p83, %p84
      %s87 = sadd.s32 %s86, 1
      %p90 = scmp.eq.s32.totalorder %s17, 1
      %p91 = scmp.ne.s32.totalorder %s86, %s88
      %p92 = scmp.eq.s32.totalorder %s17, 0
      %p93 = por %p91, %p92
      %p94 = scmp.ne.s32.totalorder %s86, %s88
      %p95 = scmp.eq.s32.totalorder %s22, 1
      %p96 = por %p94, %p95
      %p97 = scmp.ne.s32.totalorder %s88, %s89
      %p98 = scmp.eq.s32.totalorder %s22, 0
      %p99 = por %p97, %p98
      %p100 = scmp.ne.s32.totalorder %s88, %s89
      %p101 = scmp.eq.s32.totalorder %s23, 1
      %p102 = por %p100, %p101
      %p104 = scmp.ne.s32.totalorder %s89, %s103
      %p105 = scmp.eq.s32.totalorder %s23, 0
      %p106 = por %p104, %p105
      %s107 = ssub.s32 %s24, %s36
      %s108 = ssub.s32 %s25, %s32
      %s109 = sor.u32 %s107, %s108
      %p110 = scmp.eq.s32.totalorder %s109, 0
      %s112 = sadd.s32 %s111, 1
      %s113 = scalar_select %p110, %s111, %s112
      %p116 = pneg %p110
      %p117 = scmp.eq.s32.totalorder %s17, 1
      %p118 = por %p116, %p117
      %p119 = scmp.ne.s32.totalorder %s111, %s114
      %p120 = scmp.eq.s32.totalorder %s17, 0
      %p121 = por %p119, %p120
      %p122 = scmp.ne.s32.totalorder %s111, %s114
      %p123 = scmp.eq.s32.totalorder %s22, 1
      %p124 = por %p122, %p123
      %p125 = scmp.ne.s32.totalorder %s114, %s115
      %p126 = scmp.eq.s32.totalorder %s22, 0
      %p127 = por %p125, %p126
      %p128 = scmp.ne.s32.totalorder %s114, %s115
      %p129 = scmp.eq.s32.totalorder %s23, 1
      %p130 = por %p128, %p129
      %p132 = scmp.ne.s32.totalorder %s115, %s131
      %p133 = scmp.eq.s32.totalorder %s23, 0
      %p134 = por %p132, %p133
      %p135 = scmp.le.s32.totalorder 1, %s17
      %p136 = scmp.lt.s32.totalorder %s17, 3
      %p137 = pnand %p135, %p136
      %p138 = pneg %p137
      // Predicated region
      $region9: #{tpu_custom_call.1} parent=5 // pred_check
        _
      $region10: #{tpu_custom_call.1} parent=5 // pred_check_branch
        %140 = sbr.rel (%p137) target = $region12
      $region11: #{tpu_custom_call.1} parent=5 // pred_region
        %s141 = ssub.s32 %s17, 1
        // Predicated region
        $region13: #{tpu_custom_call.1} parent=11 // pred_check
          %p142 = pneg %p78
        $region14: #{tpu_custom_call.1} parent=11 // pred_check_branch
          %144 = sbr.rel (%p142) target = $region16
        $region15: #{tpu_custom_call.1} parent=11 // pred_region
          %s146 = ssub.s32 32, 32
          %147 = vsyncadd [#allocation6], %s146
          %s149 = sshll.u32 %s1, 4
          %s150 = int_to_ptr.vmem [resolvable:$true] %s149
          %152 = dma.vmem_to_smem %s150, 32, [#allocation7], [#allocation6]
        $region16: #{tpu_custom_call.1} parent=11 // pred_fallthru
          _
        // Predicated region
        $region17: #{tpu_custom_call.1} parent=11 // pred_check
          %p153 = pneg %p99
        $region18: #{tpu_custom_call.1} parent=11 // pred_check_branch
          %155 = sbr.rel (%p153) target = $region20
        $region19: #{tpu_custom_call.1} parent=11 // pred_region
          %s157 = ssub.s32 16, 16
          %158 = vsyncadd [#allocation9], %s157
          %s160 = sshll.u32 %s2, 4
          %s161 = int_to_ptr.vmem [resolvable:$true] %s160
          %163 = dma.vmem_to_smem %s161, 16, [#allocation8], [#allocation9]
        $region20: #{tpu_custom_call.1} parent=11 // pred_fallthru
          _
      $region12: #{tpu_custom_call.1} parent=5 // pred_fallthru
        _
      %p164 = scmp.lt.s32.totalorder %s17, 2
      // Predicated region
      $region21: #{tpu_custom_call.1} parent=5 // pred_check
        %p165 = pneg %p164
      $region22: #{tpu_custom_call.1} parent=5 // pred_check_branch
        %167 = sbr.rel (%p165) target = $region24
      $region23: #{tpu_custom_call.1} parent=5 // pred_region
        // Predicated region
        $region25: #{tpu_custom_call.1} parent=23 // pred_check
          %p168 = pneg %p51
        $region26: #{tpu_custom_call.1} parent=23 // pred_check_branch
          %170 = sbr.rel (%p168) target = $region28
        $region27: #{tpu_custom_call.1} parent=23 // pred_region
          %s171 = sand.u32 %s41, 1
          %s172 = scalar_lea.sflag [#allocation4], %s171
          %s173 = sand.u32 %s41, 1
          %s174 = smul.addr %s173, 64
          %s175 = scalar_lea.vmem [#allocation3], %s174
          %s176 = smul.u32 2, %s25
          %s178 = ssub.s32 1024, 1024
          %179 = vsyncadd %s172, %s178
          %s180 = smul.addr %s24, 8
          %s181 = sadd.s32 %s176, %s180
          %s182 = smul.addr %s181, 128
          %s183 = scalar_lea.hbm %s0, %s182
          %s184 = sshll.u32 %s175, 4
          %s185 = int_to_ptr.vmem [resolvable:$true] %s184
          %190 = dma.hbm_to_vmem [thread:$0]  %s183, 1024, %s185, %s172, 128, 128, 8
        $region28: #{tpu_custom_call.1} parent=23 // pred_fallthru
          _
      $region24: #{tpu_custom_call.1} parent=5 // pred_fallthru
        _
      %p191 = scmp.le.s32.totalorder 1, %s17
      %p192 = scmp.lt.s32.totalorder %s17, 3
      %p193 = pnand %p191, %p192
      %p194 = pneg %p193
      // Predicated region
      $region29: #{tpu_custom_call.1} parent=5 // pred_check
        _
      $region30: #{tpu_custom_call.1} parent=5 // pred_check_branch
        %196 = sbr.rel (%p193) target = $region32
      $region31: #{tpu_custom_call.1} parent=5 // pred_region
        %s197 = ssub.s32 %s17, 1
        %s198 = sand.u32 %s44, 1
        %s199 = scalar_lea.sflag [#allocation4], %s198
        %s200 = sand.u32 %s44, 1
        %s201 = smul.addr %s200, 64
        %s202 = scalar_lea.vmem [#allocation3], %s201
        // Predicated region
        $region33: #{tpu_custom_call.1} parent=31 // pred_check
          %p203 = pneg %p57
        $region34: #{tpu_custom_call.1} parent=31 // pred_check_branch
          %205 = sbr.rel (%p203) target = $region36
        $region35: #{tpu_custom_call.1} parent=31 // pred_region
          %206 = dma.done %s199, 1024
        $region36: #{tpu_custom_call.1} parent=31 // pred_fallthru
          _
        // Predicated region
        $region37: #{tpu_custom_call.1} parent=31 // pred_check
          %p207 = pneg %p78
        $region38: #{tpu_custom_call.1} parent=31 // pred_check_branch
          %209 = sbr.rel (%p207) target = $region40
        $region39: #{tpu_custom_call.1} parent=31 // pred_region
          %210 = dma.done [#allocation6], 32
        $region40: #{tpu_custom_call.1} parent=31 // pred_fallthru
          _
        // Predicated region
        $region41: #{tpu_custom_call.1} parent=31 // pred_check
          %p211 = pneg %p99
        $region42: #{tpu_custom_call.1} parent=31 // pred_check_branch
          %213 = sbr.rel (%p211) target = $region44
        $region43: #{tpu_custom_call.1} parent=31 // pred_region
          %214 = dma.done [#allocation9], 16
        $region44: #{tpu_custom_call.1} parent=31 // pred_fallthru
          _
        %215 = sfence
        %s216 = sand.u32 %s44, 1
        %s217 = scalar_lea.sflag [#allocation4], %s216
        %s218 = sand.u32 %s44, 1
        %s219 = smul.addr %s218, 64
        %s220 = scalar_lea.vmem [#allocation3], %s219
        %p221 = pneg %p57
        %p222 = pneg %p54
        %p223 = pneg %p78
        %p224 = pneg %p75
        %p225 = pneg %p99
        %p226 = pneg %p96
        %p227 = pneg %p127
        %p228 = pneg %p124
        %s229 = sand.u32 %s114, 1
        %s230 = scalar_lea.sflag [#allocation5], %s229
        %s231 = sand.u32 %s114, 1
        %s232 = smul.addr %s231, 64
        %s233 = scalar_lea.vmem [#allocation10], %s232
        %s234 = smul.u32 2, %s27
        %s235 = smul.u32 2, %s27
        %vm236 = vcmask 146432
        %237 = vst.msk [vmem:[#allocation2] sm:$0xff] %vm236, 0.0
        %238 = vst.msk [vmem:[#allocation2 + $0x8] sm:$0xff] %vm236, 0.0
        %vm239 = vcmask 140288
        %240 = vst.msk [vmem:[#allocation2 + $0x10] sm:$0x3] %vm239, 0.0
        %241 = vst.msk [vmem:[#allocation2 + $0x18] sm:$0xff] %vm236, 0.0
        %242 = vst.msk [vmem:[#allocation2 + $0x20] sm:$0xff] %vm236, 0.0
        %243 = vst.msk [vmem:[#allocation2 + $0x28] sm:$0x3] %vm239, 0.0
        %244 = vst.msk [vmem:[#allocation2 + $0x30] sm:$0xff] %vm236, 0.0
        %245 = vst.msk [vmem:[#allocation2 + $0x38] sm:$0xff] %vm236, 0.0
        %246 = vst.msk [vmem:[#allocation2 + $0x40] sm:$0x3] %vm239, 0.0
        %247 = vst.msk [vmem:[#allocation2 + $0x48] sm:$0xff] %vm236, 0.0
        %248 = vst.msk [vmem:[#allocation2 + $0x50] sm:$0xff] %vm236, 0.0
        %249 = vst.msk [vmem:[#allocation2 + $0x58] sm:$0x3] %vm239, 0.0
        %v250 = vld [vmem:[%s202] sm:$0xff]
        %v251 = vld [vmem:[%s202 + $0x8] sm:$0xff]
        %v252 = vld [vmem:[%s202 + $0x10] sm:$0xff]
        %v253 = vld [vmem:[%s202 + $0x18] sm:$0xff]
        %v254 = vld [vmem:[%s202 + $0x20] sm:$0xff]
        %v255 = vld [vmem:[%s202 + $0x28] sm:$0xff]
        %v256 = vld [vmem:[%s202 + $0x30] sm:$0xff]
        %v257 = vld [vmem:[%s202 + $0x38] sm:$0xff]
        %266 = vrot.lane.b32.xlu0 %v250, 1
        %v267 = vpop.permute.xlu0 %266
        %268 = vrot.lane.b32.xlu0 %v251, 1
        %v269 = vpop.permute.xlu0 %268
        %270 = vrot.lane.b32.xlu0 %v252, 1
        %v271 = vpop.permute.xlu0 %270
        %272 = vrot.lane.b32.xlu0 %v253, 1
        %v273 = vpop.permute.xlu0 %272
        %274 = vrot.lane.b32.xlu0 %v254, 1
        %v275 = vpop.permute.xlu0 %274
        %276 = vrot.lane.b32.xlu0 %v255, 1
        %v277 = vpop.permute.xlu0 %276
        %278 = vrot.lane.b32.xlu0 %v256, 1
        %v279 = vpop.permute.xlu0 %278
        %280 = vrot.lane.b32.xlu0 %v257, 1
        %v281 = vpop.permute.xlu0 %280
        %vm290 = vcmask 138248
        %291 = vst.msk [vmem:[#allocation2 + $0x1] sm:$0xff] %vm290, %v267
        %292 = vst.msk [vmem:[#allocation2 + $0x9] sm:$0xff] %vm290, %v269
        %293 = vst.msk [vmem:[#allocation2 + $0x19] sm:$0xff] %vm290, %v271
        %294 = vst.msk [vmem:[#allocation2 + $0x21] sm:$0xff] %vm290, %v273
        %295 = vst.msk [vmem:[#allocation2 + $0x31] sm:$0xff] %vm290, %v275
        %296 = vst.msk [vmem:[#allocation2 + $0x39] sm:$0xff] %vm290, %v277
        %297 = vst.msk [vmem:[#allocation2 + $0x49] sm:$0xff] %vm290, %v279
        %298 = vst.msk [vmem:[#allocation2 + $0x51] sm:$0xff] %vm290, %v281
        %v299 = vld [vmem:[#allocation2] sm:$0xff]
        %v300 = vld [vmem:[#allocation2 + $0x8] sm:$0xff]
        %v301 = vld [vmem:[#allocation2 + $0x18] sm:$0xff]
        %v302 = vld [vmem:[#allocation2 + $0x20] sm:$0xff]
        %v303 = vld [vmem:[#allocation2 + $0x30] sm:$0xff]
        %v304 = vld [vmem:[#allocation2 + $0x38] sm:$0xff]
        %v305 = vld [vmem:[#allocation2 + $0x48] sm:$0xff]
        %v306 = vld [vmem:[#allocation2 + $0x50] sm:$0xff]
        %v307 = vld [vmem:[#allocation2 + $0x1] sm:$0xff]
        %v308 = vld [vmem:[#allocation2 + $0x9] sm:$0xff]
        %v309 = vld [vmem:[#allocation2 + $0x19] sm:$0xff]
        %v310 = vld [vmem:[#allocation2 + $0x21] sm:$0xff]
        %v311 = vld [vmem:[#allocation2 + $0x31] sm:$0xff]
        %v312 = vld [vmem:[#allocation2 + $0x39] sm:$0xff]
        %v313 = vld [vmem:[#allocation2 + $0x49] sm:$0xff]
        %v314 = vld [vmem:[#allocation2 + $0x51] sm:$0xff]
        %v315 = vld [vmem:[#allocation2 + $0x2] sm:$0xff]
        %v316 = vld [vmem:[#allocation2 + $0xa] sm:$0xff]
        %v317 = vld [vmem:[#allocation2 + $0x1a] sm:$0xff]
        %v318 = vld [vmem:[#allocation2 + $0x22] sm:$0xff]
        %v319 = vld [vmem:[#allocation2 + $0x32] sm:$0xff]
        %v320 = vld [vmem:[#allocation2 + $0x3a] sm:$0xff]
        %v321 = vld [vmem:[#allocation2 + $0x4a] sm:$0xff]
        %v322 = vld [vmem:[#allocation2 + $0x52] sm:$0xff]
        %s323 = sld [smem:[#allocation8]]
        %v324 = vstv %s323
        %s325 = sld [smem:[#allocation7]]
        %v326 = vstv %s325
        %v327 = vmul.f32 %v326, %v299
        %v328 = vmul.f32 %v326, %v300
        %v329 = vadd.f32 %v324, %v327
        %v330 = vadd.f32 %v324, %v328
        %s331 = sld [smem:[#allocation7 + $0x9]]
        %v332 = vstv %s331
        %v333 = vmul.f32 %v332, %v301
        %v334 = vmul.f32 %v332, %v302
        %v335 = vadd.f32 %v329, %v333
        %v336 = vadd.f32 %v330, %v334
        %s337 = sld [smem:[#allocation7 + $0x12]]
        %v338 = vstv %s337
        %v339 = vmul.f32 %v338, %v303
        %v340 = vmul.f32 %v338, %v304
        %v341 = vadd.f32 %v335, %v339
        %v342 = vadd.f32 %v336, %v340
        %s343 = sld [smem:[#allocation7 + $0x1b]]
        %v344 = vstv %s343
        %v345 = vmul.f32 %v344, %v305
        %v346 = vmul.f32 %v344, %v306
        %v347 = vadd.f32 %v341, %v345
        %v348 = vadd.f32 %v342, %v346
        %s349 = sld [smem:[#allocation7 + $0x1]]
        %v350 = vstv %s349
        %v351 = vmul.f32 %v350, %v299
        %v352 = vmul.f32 %v350, %v300
        %355 = vrot.lane.b32.xlu0 %v351, 127
        %v356 = vpop.permute.xlu0 %355
        %357 = vrot.lane.b32.xlu0 %v352, 127
        %v358 = vpop.permute.xlu0 %357
        %v361 = vadd.f32 %v347, %v356
        %v362 = vadd.f32 %v348, %v358
        %s363 = sld [smem:[#allocation7 + $0xa]]
        %v364 = vstv %s363
        %v365 = vmul.f32 %v364, %v301
        %v366 = vmul.f32 %v364, %v302
        %369 = vrot.lane.b32.xlu0 %v365, 127
        %v370 = vpop.permute.xlu0 %369
        %371 = vrot.lane.b32.xlu0 %v366, 127
        %v372 = vpop.permute.xlu0 %371
        %v375 = vadd.f32 %v361, %v370
        %v376 = vadd.f32 %v362, %v372
        %s377 = sld [smem:[#allocation7 + $0x13]]
        %v378 = vstv %s377
        %v379 = vmul.f32 %v378, %v303
        %v380 = vmul.f32 %v378, %v304
        %383 = vrot.lane.b32.xlu0 %v379, 127
        %v384 = vpop.permute.xlu0 %383
        %385 = vrot.lane.b32.xlu0 %v380, 127
        %v386 = vpop.permute.xlu0 %385
        %v389 = vadd.f32 %v375, %v384
        %v390 = vadd.f32 %v376, %v386
        %s391 = sld [smem:[#allocation7 + $0x1c]]
        %v392 = vstv %s391
        %v393 = vmul.f32 %v392, %v305
        %v394 = vmul.f32 %v392, %v306
        %397 = vrot.lane.b32.xlu0 %v393, 127
        %v398 = vpop.permute.xlu0 %397
        %399 = vrot.lane.b32.xlu0 %v394, 127
        %v400 = vpop.permute.xlu0 %399
        %v403 = vadd.f32 %v389, %v398
        %v404 = vadd.f32 %v390, %v400
        %s405 = sld [smem:[#allocation7 + $0x2]]
        %v406 = vstv %s405
        %v407 = vmul.f32 %v406, %v299
        %v408 = vmul.f32 %v406, %v300
        %411 = vrot.lane.b32.xlu0 %v407, 126
        %v412 = vpop.permute.xlu0 %411
        %413 = vrot.lane.b32.xlu0 %v408, 126
        %v414 = vpop.permute.xlu0 %413
        %v417 = vadd.f32 %v403, %v412
        %v418 = vadd.f32 %v404, %v414
        %s419 = sld [smem:[#allocation7 + $0xb]]
        %v420 = vstv %s419
        %v421 = vmul.f32 %v420, %v301
        %v422 = vmul.f32 %v420, %v302
        %425 = vrot.lane.b32.xlu0 %v421, 126
        %v426 = vpop.permute.xlu0 %425
        %427 = vrot.lane.b32.xlu0 %v422, 126
        %v428 = vpop.permute.xlu0 %427
        %v431 = vadd.f32 %v417, %v426
        %v432 = vadd.f32 %v418, %v428
        %s433 = sld [smem:[#allocation7 + $0x14]]
        %v434 = vstv %s433
        %v435 = vmul.f32 %v434, %v303
        %v436 = vmul.f32 %v434, %v304
        %439 = vrot.lane.b32.xlu0 %v435, 126
        %v440 = vpop.permute.xlu0 %439
        %441 = vrot.lane.b32.xlu0 %v436, 126
        %v442 = vpop.permute.xlu0 %441
        %v445 = vadd.f32 %v431, %v440
        %v446 = vadd.f32 %v432, %v442
        %s447 = sld [smem:[#allocation7 + $0x1d]]
        %v448 = vstv %s447
        %v449 = vmul.f32 %v448, %v305
        %v450 = vmul.f32 %v448, %v306
        %453 = vrot.lane.b32.xlu0 %v449, 126
        %v454 = vpop.permute.xlu0 %453
        %455 = vrot.lane.b32.xlu0 %v450, 126
        %v456 = vpop.permute.xlu0 %455
        %v459 = vadd.f32 %v445, %v454
        %v460 = vadd.f32 %v446, %v456
        %s461 = sld [smem:[#allocation7 + $0x3]]
        %v462 = vstv %s461
        %v463 = vmul.f32 %v462, %v307
        %v464 = vmul.f32 %v462, %v308
        %v465 = vadd.f32 %v459, %v463
        %v466 = vadd.f32 %v460, %v464
        %s467 = sld [smem:[#allocation7 + $0xc]]
        %v468 = vstv %s467
        %v469 = vmul.f32 %v468, %v309
        %v470 = vmul.f32 %v468, %v310
        %v471 = vadd.f32 %v465, %v469
        %v472 = vadd.f32 %v466, %v470
        %s473 = sld [smem:[#allocation7 + $0x15]]
        %v474 = vstv %s473
        %v475 = vmul.f32 %v474, %v311
        %v476 = vmul.f32 %v474, %v312
        %v477 = vadd.f32 %v471, %v475
        %v478 = vadd.f32 %v472, %v476
        %s479 = sld [smem:[#allocation7 + $0x1e]]
        %v480 = vstv %s479
        %v481 = vmul.f32 %v480, %v313
        %v482 = vmul.f32 %v480, %v314
        %v483 = vadd.f32 %v477, %v481
        %v484 = vadd.f32 %v478, %v482
        %s485 = sld [smem:[#allocation7 + $0x4]]
        %v486 = vstv %s485
        %v487 = vmul.f32 %v486, %v307
        %v488 = vmul.f32 %v486, %v308
        %491 = vrot.lane.b32.xlu0 %v487, 127
        %v492 = vpop.permute.xlu0 %491
        %493 = vrot.lane.b32.xlu0 %v488, 127
        %v494 = vpop.permute.xlu0 %493
        %v497 = vadd.f32 %v483, %v492
        %v498 = vadd.f32 %v484, %v494
        %s499 = sld [smem:[#allocation7 + $0xd]]
        %v500 = vstv %s499
        %v501 = vmul.f32 %v500, %v309
        %v502 = vmul.f32 %v500, %v310
        %505 = vrot.lane.b32.xlu0 %v501, 127
        %v506 = vpop.permute.xlu0 %505
        %507 = vrot.lane.b32.xlu0 %v502, 127
        %v508 = vpop.permute.xlu0 %507
        %v511 = vadd.f32 %v497, %v506
        %v512 = vadd.f32 %v498, %v508
        %s513 = sld [smem:[#allocation7 + $0x16]]
        %v514 = vstv %s513
        %v515 = vmul.f32 %v514, %v311
        %v516 = vmul.f32 %v514, %v312
        %519 = vrot.lane.b32.xlu0 %v515, 127
        %v520 = vpop.permute.xlu0 %519
        %521 = vrot.lane.b32.xlu0 %v516, 127
        %v522 = vpop.permute.xlu0 %521
        %v525 = vadd.f32 %v511, %v520
        %v526 = vadd.f32 %v512, %v522
        %s527 = sld [smem:[#allocation7 + $0x1f]]
        %v528 = vstv %s527
        %v529 = vmul.f32 %v528, %v313
        %v530 = vmul.f32 %v528, %v314
        %533 = vrot.lane.b32.xlu0 %v529, 127
        %v534 = vpop.permute.xlu0 %533
        %535 = vrot.lane.b32.xlu0 %v530, 127
        %v536 = vpop.permute.xlu0 %535
        %v539 = vadd.f32 %v525, %v534
        %v540 = vadd.f32 %v526, %v536
        %s541 = sld [smem:[#allocation7 + $0x5]]
        %v542 = vstv %s541
        %v543 = vmul.f32 %v542, %v307
        %v544 = vmul.f32 %v542, %v308
        %547 = vrot.lane.b32.xlu0 %v543, 126
        %v548 = vpop.permute.xlu0 %547
        %549 = vrot.lane.b32.xlu0 %v544, 126
        %v550 = vpop.permute.xlu0 %549
        %v553 = vadd.f32 %v539, %v548
        %v554 = vadd.f32 %v540, %v550
        %s555 = sld [smem:[#allocation7 + $0xe]]
        %v556 = vstv %s555
        %v557 = vmul.f32 %v556, %v309
        %v558 = vmul.f32 %v556, %v310
        %561 = vrot.lane.b32.xlu0 %v557, 126
        %v562 = vpop.permute.xlu0 %561
        %563 = vrot.lane.b32.xlu0 %v558, 126
        %v564 = vpop.permute.xlu0 %563
        %v567 = vadd.f32 %v553, %v562
        %v568 = vadd.f32 %v554, %v564
        %s569 = sld [smem:[#allocation7 + $0x17]]
        %v570 = vstv %s569
        %v571 = vmul.f32 %v570, %v311
        %v572 = vmul.f32 %v570, %v312
        %575 = vrot.lane.b32.xlu0 %v571, 126
        %v576 = vpop.permute.xlu0 %575
        %577 = vrot.lane.b32.xlu0 %v572, 126
        %v578 = vpop.permute.xlu0 %577
        %v581 = vadd.f32 %v567, %v576
        %v582 = vadd.f32 %v568, %v578
        %s583 = sld [smem:[#allocation7 + $0x20]]
        %v584 = vstv %s583
        %v585 = vmul.f32 %v584, %v313
        %v586 = vmul.f32 %v584, %v314
        %589 = vrot.lane.b32.xlu0 %v585, 126
        %v590 = vpop.permute.xlu0 %589
        %591 = vrot.lane.b32.xlu0 %v586, 126
        %v592 = vpop.permute.xlu0 %591
        %v595 = vadd.f32 %v581, %v590
        %v596 = vadd.f32 %v582, %v592
        %s597 = sld [smem:[#allocation7 + $0x6]]
        %v598 = vstv %s597
        %v599 = vmul.f32 %v598, %v315
        %v600 = vmul.f32 %v598, %v316
        %v601 = vadd.f32 %v595, %v599
        %v602 = vadd.f32 %v596, %v600
        %s603 = sld [smem:[#allocation7 + $0xf]]
        %v604 = vstv %s603
        %v605 = vmul.f32 %v604, %v317
        %v606 = vmul.f32 %v604, %v318
        %v607 = vadd.f32 %v601, %v605
        %v608 = vadd.f32 %v602, %v606
        %s609 = sld [smem:[#allocation7 + $0x18]]
        %v610 = vstv %s609
        %v611 = vmul.f32 %v610, %v319
        %v612 = vmul.f32 %v610, %v320
        %v613 = vadd.f32 %v607, %v611
        %v614 = vadd.f32 %v608, %v612
        %s615 = sld [smem:[#allocation7 + $0x21]]
        %v616 = vstv %s615
        %v617 = vmul.f32 %v616, %v321
        %v618 = vmul.f32 %v616, %v322
        %v619 = vadd.f32 %v613, %v617
        %v620 = vadd.f32 %v614, %v618
        %s621 = sld [smem:[#allocation7 + $0x7]]
        %v622 = vstv %s621
        %v623 = vmul.f32 %v622, %v315
        %v624 = vmul.f32 %v622, %v316
        %627 = vrot.lane.b32.xlu0 %v623, 127
        %v628 = vpop.permute.xlu0 %627
        %629 = vrot.lane.b32.xlu0 %v624, 127
        %v630 = vpop.permute.xlu0 %629
        %v633 = vadd.f32 %v619, %v628
        %v634 = vadd.f32 %v620, %v630
        %s635 = sld [smem:[#allocation7 + $0x10]]
        %v636 = vstv %s635
        %v637 = vmul.f32 %v636, %v317
        %v638 = vmul.f32 %v636, %v318
        %641 = vrot.lane.b32.xlu0 %v637, 127
        %v642 = vpop.permute.xlu0 %641
        %643 = vrot.lane.b32.xlu0 %v638, 127
        %v644 = vpop.permute.xlu0 %643
        %v647 = vadd.f32 %v633, %v642
        %v648 = vadd.f32 %v634, %v644
        %s649 = sld [smem:[#allocation7 + $0x19]]
        %v650 = vstv %s649
        %v651 = vmul.f32 %v650, %v319
        %v652 = vmul.f32 %v650, %v320
        %655 = vrot.lane.b32.xlu0 %v651, 127
        %v656 = vpop.permute.xlu0 %655
        %657 = vrot.lane.b32.xlu0 %v652, 127
        %v658 = vpop.permute.xlu0 %657
        %v661 = vadd.f32 %v647, %v656
        %v662 = vadd.f32 %v648, %v658
        %s663 = sld [smem:[#allocation7 + $0x22]]
        %v664 = vstv %s663
        %v665 = vmul.f32 %v664, %v321
        %v666 = vmul.f32 %v664, %v322
        %669 = vrot.lane.b32.xlu0 %v665, 127
        %v670 = vpop.permute.xlu0 %669
        %671 = vrot.lane.b32.xlu0 %v666, 127
        %v672 = vpop.permute.xlu0 %671
        %v675 = vadd.f32 %v661, %v670
        %v676 = vadd.f32 %v662, %v672
        %s677 = sld [smem:[#allocation7 + $0x8]]
        %v678 = vstv %s677
        %v679 = vmul.f32 %v678, %v315
        %v680 = vmul.f32 %v678, %v316
        %683 = vrot.lane.b32.xlu0 %v679, 126
        %v684 = vpop.permute.xlu0 %683
        %685 = vrot.lane.b32.xlu0 %v680, 126
        %v686 = vpop.permute.xlu0 %685
        %v689 = vadd.f32 %v675, %v684
        %v690 = vadd.f32 %v676, %v686
        %s691 = sld [smem:[#allocation7 + $0x11]]
        %v692 = vstv %s691
        %v693 = vmul.f32 %v692, %v317
        %v694 = vmul.f32 %v692, %v318
        %697 = vrot.lane.b32.xlu0 %v693, 126
        %v698 = vpop.permute.xlu0 %697
        %699 = vrot.lane.b32.xlu0 %v694, 126
        %v700 = vpop.permute.xlu0 %699
        %v703 = vadd.f32 %v689, %v698
        %v704 = vadd.f32 %v690, %v700
        %s705 = sld [smem:[#allocation7 + $0x1a]]
        %v706 = vstv %s705
        %v707 = vmul.f32 %v706, %v319
        %v708 = vmul.f32 %v706, %v320
        %711 = vrot.lane.b32.xlu0 %v707, 126
        %v712 = vpop.permute.xlu0 %711
        %713 = vrot.lane.b32.xlu0 %v708, 126
        %v714 = vpop.permute.xlu0 %713
        %v717 = vadd.f32 %v703, %v712
        %v718 = vadd.f32 %v704, %v714
        %s719 = sld [smem:[#allocation7 + $0x23]]
        %v720 = vstv %s719
        %v721 = vmul.f32 %v720, %v321
        %v722 = vmul.f32 %v720, %v322
        %725 = vrot.lane.b32.xlu0 %v721, 126
        %v726 = vpop.permute.xlu0 %725
        %727 = vrot.lane.b32.xlu0 %v722, 126
        %v728 = vpop.permute.xlu0 %727
        %v731 = vadd.f32 %v717, %v726
        %v732 = vadd.f32 %v718, %v728
        %735 = vrot.lane.b32.xlu0 %v307, 127
        %v736 = vpop.permute.xlu0 %735
        %737 = vrot.lane.b32.xlu0 %v308, 127
        %v738 = vpop.permute.xlu0 %737
        %v741 = vsub.f32 %v731, %v736
        %v742 = vsub.f32 %v732, %v738
        %v743 = vxor.u32 %v741, 2147483648
        %v744 = vxor.u32 %v742, 2147483648
        %v745 = vmul.f32 %v743, 1.442695
        %v746 = vpow.pop %v745
        %v747 = vmul.f32 %v744, 1.442695
        %v748 = vpow.pop %v747
        %v749 = vadd.f32 %v746, 1.0
        %v750 = vadd.f32 %v748, 1.0
        %v751 = vrcp.pop %v749
        %v752 = vmul.f32 1.0, %v751
        %v753 = vrcp.pop %v750
        %v754 = vmul.f32 1.0, %v753
        %v755 = vmul.f32 %v752, %v741
        %v756 = vmul.f32 %v754, %v742
        %759 = vrot.lane.b32.xlu0 %v755, 1
        %v760 = vpop.permute.xlu0 %759
        %761 = vrot.lane.b32.xlu0 %v756, 1
        %v762 = vpop.permute.xlu0 %761
        %v765 = vadd.f32 %v307, %v760
        %v766 = vadd.f32 %v308, %v762
        %769 = vrot.lane.b32.xlu0 %v765, 127
        %v770 = vpop.permute.xlu0 %769
        %771 = vrot.lane.b32.xlu0 %v766, 127
        %v772 = vpop.permute.xlu0 %771
        %vm775 = vcmask 130048
        %776 = vst.msk [vmem:[%s233] sm:$0xff] %vm775, %v770
        %777 = vst.msk [vmem:[%s233 + $0x8] sm:$0xff] %vm775, %v772
        %s778 = sld [smem:[#allocation8 + $0x1]]
        %v779 = vstv %s778
        %s780 = sld [smem:[#allocation7 + $0x24]]
        %v781 = vstv %s780
        %v782 = vmul.f32 %v781, %v299
        %v783 = vmul.f32 %v781, %v300
        %v784 = vadd.f32 %v779, %v782
        %v785 = vadd.f32 %v779, %v783
        %s786 = sld [smem:[#allocation7 + $0x2d]]
        %v787 = vstv %s786
        %v788 = vmul.f32 %v787, %v301
        %v789 = vmul.f32 %v787, %v302
        %v790 = vadd.f32 %v784, %v788
        %v791 = vadd.f32 %v785, %v789
        %s792 = sld [smem:[#allocation7 + $0x36]]
        %v793 = vstv %s792
        %v794 = vmul.f32 %v793, %v303
        %v795 = vmul.f32 %v793, %v304
        %v796 = vadd.f32 %v790, %v794
        %v797 = vadd.f32 %v791, %v795
        %s798 = sld [smem:[#allocation7 + $0x3f]]
        %v799 = vstv %s798
        %v800 = vmul.f32 %v799, %v305
        %v801 = vmul.f32 %v799, %v306
        %v802 = vadd.f32 %v796, %v800
        %v803 = vadd.f32 %v797, %v801
        %s804 = sld [smem:[#allocation7 + $0x25]]
        %v805 = vstv %s804
        %v806 = vmul.f32 %v805, %v299
        %v807 = vmul.f32 %v805, %v300
        %810 = vrot.lane.b32.xlu0 %v806, 127
        %v811 = vpop.permute.xlu0 %810
        %812 = vrot.lane.b32.xlu0 %v807, 127
        %v813 = vpop.permute.xlu0 %812
        %v816 = vadd.f32 %v802, %v811
        %v817 = vadd.f32 %v803, %v813
        %s818 = sld [smem:[#allocation7 + $0x2e]]
        %v819 = vstv %s818
        %v820 = vmul.f32 %v819, %v301
        %v821 = vmul.f32 %v819, %v302
        %824 = vrot.lane.b32.xlu0 %v820, 127
        %v825 = vpop.permute.xlu0 %824
        %826 = vrot.lane.b32.xlu0 %v821, 127
        %v827 = vpop.permute.xlu0 %826
        %v830 = vadd.f32 %v816, %v825
        %v831 = vadd.f32 %v817, %v827
        %s832 = sld [smem:[#allocation7 + $0x37]]
        %v833 = vstv %s832
        %v834 = vmul.f32 %v833, %v303
        %v835 = vmul.f32 %v833, %v304
        %838 = vrot.lane.b32.xlu0 %v834, 127
        %v839 = vpop.permute.xlu0 %838
        %840 = vrot.lane.b32.xlu0 %v835, 127
        %v841 = vpop.permute.xlu0 %840
        %v844 = vadd.f32 %v830, %v839
        %v845 = vadd.f32 %v831, %v841
        %s846 = sld [smem:[#allocation7 + $0x40]]
        %v847 = vstv %s846
        %v848 = vmul.f32 %v847, %v305
        %v849 = vmul.f32 %v847, %v306
        %852 = vrot.lane.b32.xlu0 %v848, 127
        %v853 = vpop.permute.xlu0 %852
        %854 = vrot.lane.b32.xlu0 %v849, 127
        %v855 = vpop.permute.xlu0 %854
        %v858 = vadd.f32 %v844, %v853
        %v859 = vadd.f32 %v845, %v855
        %s860 = sld [smem:[#allocation7 + $0x26]]
        %v861 = vstv %s860
        %v862 = vmul.f32 %v861, %v299
        %v863 = vmul.f32 %v861, %v300
        %866 = vrot.lane.b32.xlu0 %v862, 126
        %v867 = vpop.permute.xlu0 %866
        %868 = vrot.lane.b32.xlu0 %v863, 126
        %v869 = vpop.permute.xlu0 %868
        %v872 = vadd.f32 %v858, %v867
        %v873 = vadd.f32 %v859, %v869
        %s874 = sld [smem:[#allocation7 + $0x2f]]
        %v875 = vstv %s874
        %v876 = vmul.f32 %v875, %v301
        %v877 = vmul.f32 %v875, %v302
        %880 = vrot.lane.b32.xlu0 %v876, 126
        %v881 = vpop.permute.xlu0 %880
        %882 = vrot.lane.b32.xlu0 %v877, 126
        %v883 = vpop.permute.xlu0 %882
        %v886 = vadd.f32 %v872, %v881
        %v887 = vadd.f32 %v873, %v883
        %s888 = sld [smem:[#allocation7 + $0x38]]
        %v889 = vstv %s888
        %v890 = vmul.f32 %v889, %v303
        %v891 = vmul.f32 %v889, %v304
        %894 = vrot.lane.b32.xlu0 %v890, 126
        %v895 = vpop.permute.xlu0 %894
        %896 = vrot.lane.b32.xlu0 %v891, 126
        %v897 = vpop.permute.xlu0 %896
        %v900 = vadd.f32 %v886, %v895
        %v901 = vadd.f32 %v887, %v897
        %s902 = sld [smem:[#allocation7 + $0x41]]
        %v903 = vstv %s902
        %v904 = vmul.f32 %v903, %v305
        %v905 = vmul.f32 %v903, %v306
        %908 = vrot.lane.b32.xlu0 %v904, 126
        %v909 = vpop.permute.xlu0 %908
        %910 = vrot.lane.b32.xlu0 %v905, 126
        %v911 = vpop.permute.xlu0 %910
        %v914 = vadd.f32 %v900, %v909
        %v915 = vadd.f32 %v901, %v911
        %s916 = sld [smem:[#allocation7 + $0x27]]
        %v917 = vstv %s916
        %v918 = vmul.f32 %v917, %v307
        %v919 = vmul.f32 %v917, %v308
        %v920 = vadd.f32 %v914, %v918
        %v921 = vadd.f32 %v915, %v919
        %s922 = sld [smem:[#allocation7 + $0x30]]
        %v923 = vstv %s922
        %v924 = vmul.f32 %v923, %v309
        %v925 = vmul.f32 %v923, %v310
        %v926 = vadd.f32 %v920, %v924
        %v927 = vadd.f32 %v921, %v925
        %s928 = sld [smem:[#allocation7 + $0x39]]
        %v929 = vstv %s928
        %v930 = vmul.f32 %v929, %v311
        %v931 = vmul.f32 %v929, %v312
        %v932 = vadd.f32 %v926, %v930
        %v933 = vadd.f32 %v927, %v931
        %s934 = sld [smem:[#allocation7 + $0x42]]
        %v935 = vstv %s934
        %v936 = vmul.f32 %v935, %v313
        %v937 = vmul.f32 %v935, %v314
        %v938 = vadd.f32 %v932, %v936
        %v939 = vadd.f32 %v933, %v937
        %s940 = sld [smem:[#allocation7 + $0x28]]
        %v941 = vstv %s940
        %v942 = vmul.f32 %v941, %v307
        %v943 = vmul.f32 %v941, %v308
        %946 = vrot.lane.b32.xlu0 %v942, 127
        %v947 = vpop.permute.xlu0 %946
        %948 = vrot.lane.b32.xlu0 %v943, 127
        %v949 = vpop.permute.xlu0 %948
        %v952 = vadd.f32 %v938, %v947
        %v953 = vadd.f32 %v939, %v949
        %s954 = sld [smem:[#allocation7 + $0x31]]
        %v955 = vstv %s954
        %v956 = vmul.f32 %v955, %v309
        %v957 = vmul.f32 %v955, %v310
        %960 = vrot.lane.b32.xlu0 %v956, 127
        %v961 = vpop.permute.xlu0 %960
        %962 = vrot.lane.b32.xlu0 %v957, 127
        %v963 = vpop.permute.xlu0 %962
        %v966 = vadd.f32 %v952, %v961
        %v967 = vadd.f32 %v953, %v963
        %s968 = sld [smem:[#allocation7 + $0x3a]]
        %v969 = vstv %s968
        %v970 = vmul.f32 %v969, %v311
        %v971 = vmul.f32 %v969, %v312
        %974 = vrot.lane.b32.xlu0 %v970, 127
        %v975 = vpop.permute.xlu0 %974
        %976 = vrot.lane.b32.xlu0 %v971, 127
        %v977 = vpop.permute.xlu0 %976
        %v980 = vadd.f32 %v966, %v975
        %v981 = vadd.f32 %v967, %v977
        %s982 = sld [smem:[#allocation7 + $0x43]]
        %v983 = vstv %s982
        %v984 = vmul.f32 %v983, %v313
        %v985 = vmul.f32 %v983, %v314
        %988 = vrot.lane.b32.xlu0 %v984, 127
        %v989 = vpop.permute.xlu0 %988
        %990 = vrot.lane.b32.xlu0 %v985, 127
        %v991 = vpop.permute.xlu0 %990
        %v994 = vadd.f32 %v980, %v989
        %v995 = vadd.f32 %v981, %v991
        %s996 = sld [smem:[#allocation7 + $0x29]]
        %v997 = vstv %s996
        %v998 = vmul.f32 %v997, %v307
        %v999 = vmul.f32 %v997, %v308
        %1002 = vrot.lane.b32.xlu0 %v998, 126
        %v1003 = vpop.permute.xlu0 %1002
        %1004 = vrot.lane.b32.xlu0 %v999, 126
        %v1005 = vpop.permute.xlu0 %1004
        %v1008 = vadd.f32 %v994, %v1003
        %v1009 = vadd.f32 %v995, %v1005
        %s1010 = sld [smem:[#allocation7 + $0x32]]
        %v1011 = vstv %s1010
        %v1012 = vmul.f32 %v1011, %v309
        %v1013 = vmul.f32 %v1011, %v310
        %1016 = vrot.lane.b32.xlu0 %v1012, 126
        %v1017 = vpop.permute.xlu0 %1016
        %1018 = vrot.lane.b32.xlu0 %v1013, 126
        %v1019 = vpop.permute.xlu0 %1018
        %v1022 = vadd.f32 %v1008, %v1017
        %v1023 = vadd.f32 %v1009, %v1019
        %s1024 = sld [smem:[#allocation7 + $0x3b]]
        %v1025 = vstv %s1024
        %v1026 = vmul.f32 %v1025, %v311
        %v1027 = vmul.f32 %v1025, %v312
        %1030 = vrot.lane.b32.xlu0 %v1026, 126
        %v1031 = vpop.permute.xlu0 %1030
        %1032 = vrot.lane.b32.xlu0 %v1027, 126
        %v1033 = vpop.permute.xlu0 %1032
        %v1036 = vadd.f32 %v1022, %v1031
        %v1037 = vadd.f32 %v1023, %v1033
        %s1038 = sld [smem:[#allocation7 + $0x44]]
        %v1039 = vstv %s1038
        %v1040 = vmul.f32 %v1039, %v313
        %v1041 = vmul.f32 %v1039, %v314
        %1044 = vrot.lane.b32.xlu0 %v1040, 126
        %v1045 = vpop.permute.xlu0 %1044
        %1046 = vrot.lane.b32.xlu0 %v1041, 126
        %v1047 = vpop.permute.xlu0 %1046
        %v1050 = vadd.f32 %v1036, %v1045
        %v1051 = vadd.f32 %v1037, %v1047
        %s1052 = sld [smem:[#allocation7 + $0x2a]]
        %v1053 = vstv %s1052
        %v1054 = vmul.f32 %v1053, %v315
        %v1055 = vmul.f32 %v1053, %v316
        %v1056 = vadd.f32 %v1050, %v1054
        %v1057 = vadd.f32 %v1051, %v1055
        %s1058 = sld [smem:[#allocation7 + $0x33]]
        %v1059 = vstv %s1058
        %v1060 = vmul.f32 %v1059, %v317
        %v1061 = vmul.f32 %v1059, %v318
        %v1062 = vadd.f32 %v1056, %v1060
        %v1063 = vadd.f32 %v1057, %v1061
        %s1064 = sld [smem:[#allocation7 + $0x3c]]
        %v1065 = vstv %s1064
        %v1066 = vmul.f32 %v1065, %v319
        %v1067 = vmul.f32 %v1065, %v320
        %v1068 = vadd.f32 %v1062, %v1066
        %v1069 = vadd.f32 %v1063, %v1067
        %s1070 = sld [smem:[#allocation7 + $0x45]]
        %v1071 = vstv %s1070
        %v1072 = vmul.f32 %v1071, %v321
        %v1073 = vmul.f32 %v1071, %v322
        %v1074 = vadd.f32 %v1068, %v1072
        %v1075 = vadd.f32 %v1069, %v1073
        %s1076 = sld [smem:[#allocation7 + $0x2b]]
        %v1077 = vstv %s1076
        %v1078 = vmul.f32 %v1077, %v315
        %v1079 = vmul.f32 %v1077, %v316
        %1082 = vrot.lane.b32.xlu0 %v1078, 127
        %v1083 = vpop.permute.xlu0 %1082
        %1084 = vrot.lane.b32.xlu0 %v1079, 127
        %v1085 = vpop.permute.xlu0 %1084
        %v1088 = vadd.f32 %v1074, %v1083
        %v1089 = vadd.f32 %v1075, %v1085
        %s1090 = sld [smem:[#allocation7 + $0x34]]
        %v1091 = vstv %s1090
        %v1092 = vmul.f32 %v1091, %v317
        %v1093 = vmul.f32 %v1091, %v318
        %1096 = vrot.lane.b32.xlu0 %v1092, 127
        %v1097 = vpop.permute.xlu0 %1096
        %1098 = vrot.lane.b32.xlu0 %v1093, 127
        %v1099 = vpop.permute.xlu0 %1098
        %v1102 = vadd.f32 %v1088, %v1097
        %v1103 = vadd.f32 %v1089, %v1099
        %s1104 = sld [smem:[#allocation7 + $0x3d]]
        %v1105 = vstv %s1104
        %v1106 = vmul.f32 %v1105, %v319
        %v1107 = vmul.f32 %v1105, %v320
        %1110 = vrot.lane.b32.xlu0 %v1106, 127
        %v1111 = vpop.permute.xlu0 %1110
        %1112 = vrot.lane.b32.xlu0 %v1107, 127
        %v1113 = vpop.permute.xlu0 %1112
        %v1116 = vadd.f32 %v1102, %v1111
        %v1117 = vadd.f32 %v1103, %v1113
        %s1118 = sld [smem:[#allocation7 + $0x46]]
        %v1119 = vstv %s1118
        %v1120 = vmul.f32 %v1119, %v321
        %v1121 = vmul.f32 %v1119, %v322
        %1124 = vrot.lane.b32.xlu0 %v1120, 127
        %v1125 = vpop.permute.xlu0 %1124
        %1126 = vrot.lane.b32.xlu0 %v1121, 127
        %v1127 = vpop.permute.xlu0 %1126
        %v1130 = vadd.f32 %v1116, %v1125
        %v1131 = vadd.f32 %v1117, %v1127
        %s1132 = sld [smem:[#allocation7 + $0x2c]]
        %v1133 = vstv %s1132
        %v1134 = vmul.f32 %v1133, %v315
        %v1135 = vmul.f32 %v1133, %v316
        %1138 = vrot.lane.b32.xlu0 %v1134, 126
        %v1139 = vpop.permute.xlu0 %1138
        %1140 = vrot.lane.b32.xlu0 %v1135, 126
        %v1141 = vpop.permute.xlu0 %1140
        %v1144 = vadd.f32 %v1130, %v1139
        %v1145 = vadd.f32 %v1131, %v1141
        %s1146 = sld [smem:[#allocation7 + $0x35]]
        %v1147 = vstv %s1146
        %v1148 = vmul.f32 %v1147, %v317
        %v1149 = vmul.f32 %v1147, %v318
        %1152 = vrot.lane.b32.xlu0 %v1148, 126
        %v1153 = vpop.permute.xlu0 %1152
        %1154 = vrot.lane.b32.xlu0 %v1149, 126
        %v1155 = vpop.permute.xlu0 %1154
        %v1158 = vadd.f32 %v1144, %v1153
        %v1159 = vadd.f32 %v1145, %v1155
        %s1160 = sld [smem:[#allocation7 + $0x3e]]
        %v1161 = vstv %s1160
        %v1162 = vmul.f32 %v1161, %v319
        %v1163 = vmul.f32 %v1161, %v320
        %1166 = vrot.lane.b32.xlu0 %v1162, 126
        %v1167 = vpop.permute.xlu0 %1166
        %1168 = vrot.lane.b32.xlu0 %v1163, 126
        %v1169 = vpop.permute.xlu0 %1168
        %v1172 = vadd.f32 %v1158, %v1167
        %v1173 = vadd.f32 %v1159, %v1169
        %s1174 = sld [smem:[#allocation7 + $0x47]]
        %v1175 = vstv %s1174
        %v1176 = vmul.f32 %v1175, %v321
        %v1177 = vmul.f32 %v1175, %v322
        %1180 = vrot.lane.b32.xlu0 %v1176, 126
        %v1181 = vpop.permute.xlu0 %1180
        %1182 = vrot.lane.b32.xlu0 %v1177, 126
        %v1183 = vpop.permute.xlu0 %1182
        %v1186 = vadd.f32 %v1172, %v1181
        %v1187 = vadd.f32 %v1173, %v1183
        %1190 = vrot.lane.b32.xlu0 %v309, 127
        %v1191 = vpop.permute.xlu0 %1190
        %1192 = vrot.lane.b32.xlu0 %v310, 127
        %v1193 = vpop.permute.xlu0 %1192
        %v1196 = vsub.f32 %v1186, %v1191
        %v1197 = vsub.f32 %v1187, %v1193
        %v1198 = vxor.u32 %v1196, 2147483648
        %v1199 = vxor.u32 %v1197, 2147483648
        %v1200 = vmul.f32 %v1198, 1.442695
        %v1201 = vpow.pop %v1200
        %v1202 = vmul.f32 %v1199, 1.442695
        %v1203 = vpow.pop %v1202
        %v1204 = vadd.f32 %v1201, 1.0
        %v1205 = vadd.f32 %v1203, 1.0
        %v1206 = vrcp.pop %v1204
        %v1207 = vmul.f32 1.0, %v1206
        %v1208 = vrcp.pop %v1205
        %v1209 = vmul.f32 1.0, %v1208
        %v1210 = vmul.f32 %v1207, %v1196
        %v1211 = vmul.f32 %v1209, %v1197
        %1214 = vrot.lane.b32.xlu0 %v1210, 1
        %v1215 = vpop.permute.xlu0 %1214
        %1216 = vrot.lane.b32.xlu0 %v1211, 1
        %v1217 = vpop.permute.xlu0 %1216
        %v1220 = vadd.f32 %v309, %v1215
        %v1221 = vadd.f32 %v310, %v1217
        %1224 = vrot.lane.b32.xlu0 %v1220, 127
        %v1225 = vpop.permute.xlu0 %1224
        %1226 = vrot.lane.b32.xlu0 %v1221, 127
        %v1227 = vpop.permute.xlu0 %1226
        %s1230 = scalar_lea.vmem %s233, 16 [#allocation10]
        %1231 = vst.msk [vmem:[%s1230] sm:$0xff] %vm775, %v1225
        %1232 = vst.msk [vmem:[%s1230 + $0x8] sm:$0xff] %vm775, %v1227
        %s1233 = sld [smem:[#allocation8 + $0x2]]
        %v1234 = vstv %s1233
        %s1235 = sld [smem:[#allocation7 + $0x48]]
        %v1236 = vstv %s1235
        %v1237 = vmul.f32 %v1236, %v299
        %v1238 = vmul.f32 %v1236, %v300
        %v1239 = vadd.f32 %v1234, %v1237
        %v1240 = vadd.f32 %v1234, %v1238
        %s1241 = sld [smem:[#allocation7 + $0x51]]
        %v1242 = vstv %s1241
        %v1243 = vmul.f32 %v1242, %v301
        %v1244 = vmul.f32 %v1242, %v302
        %v1245 = vadd.f32 %v1239, %v1243
        %v1246 = vadd.f32 %v1240, %v1244
        %s1247 = sld [smem:[#allocation7 + $0x5a]]
        %v1248 = vstv %s1247
        %v1249 = vmul.f32 %v1248, %v303
        %v1250 = vmul.f32 %v1248, %v304
        %v1251 = vadd.f32 %v1245, %v1249
        %v1252 = vadd.f32 %v1246, %v1250
        %s1253 = sld [smem:[#allocation7 + $0x63]]
        %v1254 = vstv %s1253
        %v1255 = vmul.f32 %v1254, %v305
        %v1256 = vmul.f32 %v1254, %v306
        %v1257 = vadd.f32 %v1251, %v1255
        %v1258 = vadd.f32 %v1252, %v1256
        %s1259 = sld [smem:[#allocation7 + $0x49]]
        %v1260 = vstv %s1259
        %v1261 = vmul.f32 %v1260, %v299
        %v1262 = vmul.f32 %v1260, %v300
        %1265 = vrot.lane.b32.xlu0 %v1261, 127
        %v1266 = vpop.permute.xlu0 %1265
        %1267 = vrot.lane.b32.xlu0 %v1262, 127
        %v1268 = vpop.permute.xlu0 %1267
        %v1271 = vadd.f32 %v1257, %v1266
        %v1272 = vadd.f32 %v1258, %v1268
        %s1273 = sld [smem:[#allocation7 + $0x52]]
        %v1274 = vstv %s1273
        %v1275 = vmul.f32 %v1274, %v301
        %v1276 = vmul.f32 %v1274, %v302
        %1279 = vrot.lane.b32.xlu0 %v1275, 127
        %v1280 = vpop.permute.xlu0 %1279
        %1281 = vrot.lane.b32.xlu0 %v1276, 127
        %v1282 = vpop.permute.xlu0 %1281
        %v1285 = vadd.f32 %v1271, %v1280
        %v1286 = vadd.f32 %v1272, %v1282
        %s1287 = sld [smem:[#allocation7 + $0x5b]]
        %v1288 = vstv %s1287
        %v1289 = vmul.f32 %v1288, %v303
        %v1290 = vmul.f32 %v1288, %v304
        %1293 = vrot.lane.b32.xlu0 %v1289, 127
        %v1294 = vpop.permute.xlu0 %1293
        %1295 = vrot.lane.b32.xlu0 %v1290, 127
        %v1296 = vpop.permute.xlu0 %1295
        %v1299 = vadd.f32 %v1285, %v1294
        %v1300 = vadd.f32 %v1286, %v1296
        %s1301 = sld [smem:[#allocation7 + $0x64]]
        %v1302 = vstv %s1301
        %v1303 = vmul.f32 %v1302, %v305
        %v1304 = vmul.f32 %v1302, %v306
        %1307 = vrot.lane.b32.xlu0 %v1303, 127
        %v1308 = vpop.permute.xlu0 %1307
        %1309 = vrot.lane.b32.xlu0 %v1304, 127
        %v1310 = vpop.permute.xlu0 %1309
        %v1313 = vadd.f32 %v1299, %v1308
        %v1314 = vadd.f32 %v1300, %v1310
        %s1315 = sld [smem:[#allocation7 + $0x4a]]
        %v1316 = vstv %s1315
        %v1317 = vmul.f32 %v1316, %v299
        %v1318 = vmul.f32 %v1316, %v300
        %1321 = vrot.lane.b32.xlu0 %v1317, 126
        %v1322 = vpop.permute.xlu0 %1321
        %1323 = vrot.lane.b32.xlu0 %v1318, 126
        %v1324 = vpop.permute.xlu0 %1323
        %v1327 = vadd.f32 %v1313, %v1322
        %v1328 = vadd.f32 %v1314, %v1324
        %s1329 = sld [smem:[#allocation7 + $0x53]]
        %v1330 = vstv %s1329
        %v1331 = vmul.f32 %v1330, %v301
        %v1332 = vmul.f32 %v1330, %v302
        %1335 = vrot.lane.b32.xlu0 %v1331, 126
        %v1336 = vpop.permute.xlu0 %1335
        %1337 = vrot.lane.b32.xlu0 %v1332, 126
        %v1338 = vpop.permute.xlu0 %1337
        %v1341 = vadd.f32 %v1327, %v1336
        %v1342 = vadd.f32 %v1328, %v1338
        %s1343 = sld [smem:[#allocation7 + $0x5c]]
        %v1344 = vstv %s1343
        %v1345 = vmul.f32 %v1344, %v303
        %v1346 = vmul.f32 %v1344, %v304
        %1349 = vrot.lane.b32.xlu0 %v1345, 126
        %v1350 = vpop.permute.xlu0 %1349
        %1351 = vrot.lane.b32.xlu0 %v1346, 126
        %v1352 = vpop.permute.xlu0 %1351
        %v1355 = vadd.f32 %v1341, %v1350
        %v1356 = vadd.f32 %v1342, %v1352
        %s1357 = sld [smem:[#allocation7 + $0x65]]
        %v1358 = vstv %s1357
        %v1359 = vmul.f32 %v1358, %v305
        %v1360 = vmul.f32 %v1358, %v306
        %1363 = vrot.lane.b32.xlu0 %v1359, 126
        %v1364 = vpop.permute.xlu0 %1363
        %1365 = vrot.lane.b32.xlu0 %v1360, 126
        %v1366 = vpop.permute.xlu0 %1365
        %v1369 = vadd.f32 %v1355, %v1364
        %v1370 = vadd.f32 %v1356, %v1366
        %s1371 = sld [smem:[#allocation7 + $0x4b]]
        %v1372 = vstv %s1371
        %v1373 = vmul.f32 %v1372, %v307
        %v1374 = vmul.f32 %v1372, %v308
        %v1375 = vadd.f32 %v1369, %v1373
        %v1376 = vadd.f32 %v1370, %v1374
        %s1377 = sld [smem:[#allocation7 + $0x54]]
        %v1378 = vstv %s1377
        %v1379 = vmul.f32 %v1378, %v309
        %v1380 = vmul.f32 %v1378, %v310
        %v1381 = vadd.f32 %v1375, %v1379
        %v1382 = vadd.f32 %v1376, %v1380
        %s1383 = sld [smem:[#allocation7 + $0x5d]]
        %v1384 = vstv %s1383
        %v1385 = vmul.f32 %v1384, %v311
        %v1386 = vmul.f32 %v1384, %v312
        %v1387 = vadd.f32 %v1381, %v1385
        %v1388 = vadd.f32 %v1382, %v1386
        %s1389 = sld [smem:[#allocation7 + $0x66]]
        %v1390 = vstv %s1389
        %v1391 = vmul.f32 %v1390, %v313
        %v1392 = vmul.f32 %v1390, %v314
        %v1393 = vadd.f32 %v1387, %v1391
        %v1394 = vadd.f32 %v1388, %v1392
        %s1395 = sld [smem:[#allocation7 + $0x4c]]
        %v1396 = vstv %s1395
        %v1397 = vmul.f32 %v1396, %v307
        %v1398 = vmul.f32 %v1396, %v308
        %1401 = vrot.lane.b32.xlu0 %v1397, 127
        %v1402 = vpop.permute.xlu0 %1401
        %1403 = vrot.lane.b32.xlu0 %v1398, 127
        %v1404 = vpop.permute.xlu0 %1403
        %v1407 = vadd.f32 %v1393, %v1402
        %v1408 = vadd.f32 %v1394, %v1404
        %s1409 = sld [smem:[#allocation7 + $0x55]]
        %v1410 = vstv %s1409
        %v1411 = vmul.f32 %v1410, %v309
        %v1412 = vmul.f32 %v1410, %v310
        %1415 = vrot.lane.b32.xlu0 %v1411, 127
        %v1416 = vpop.permute.xlu0 %1415
        %1417 = vrot.lane.b32.xlu0 %v1412, 127
        %v1418 = vpop.permute.xlu0 %1417
        %v1421 = vadd.f32 %v1407, %v1416
        %v1422 = vadd.f32 %v1408, %v1418
        %s1423 = sld [smem:[#allocation7 + $0x5e]]
        %v1424 = vstv %s1423
        %v1425 = vmul.f32 %v1424, %v311
        %v1426 = vmul.f32 %v1424, %v312
        %1429 = vrot.lane.b32.xlu0 %v1425, 127
        %v1430 = vpop.permute.xlu0 %1429
        %1431 = vrot.lane.b32.xlu0 %v1426, 127
        %v1432 = vpop.permute.xlu0 %1431
        %v1435 = vadd.f32 %v1421, %v1430
        %v1436 = vadd.f32 %v1422, %v1432
        %s1437 = sld [smem:[#allocation7 + $0x67]]
        %v1438 = vstv %s1437
        %v1439 = vmul.f32 %v1438, %v313
        %v1440 = vmul.f32 %v1438, %v314
        %1443 = vrot.lane.b32.xlu0 %v1439, 127
        %v1444 = vpop.permute.xlu0 %1443
        %1445 = vrot.lane.b32.xlu0 %v1440, 127
        %v1446 = vpop.permute.xlu0 %1445
        %v1449 = vadd.f32 %v1435, %v1444
        %v1450 = vadd.f32 %v1436, %v1446
        %s1451 = sld [smem:[#allocation7 + $0x4d]]
        %v1452 = vstv %s1451
        %v1453 = vmul.f32 %v1452, %v307
        %v1454 = vmul.f32 %v1452, %v308
        %1457 = vrot.lane.b32.xlu0 %v1453, 126
        %v1458 = vpop.permute.xlu0 %1457
        %1459 = vrot.lane.b32.xlu0 %v1454, 126
        %v1460 = vpop.permute.xlu0 %1459
        %v1463 = vadd.f32 %v1449, %v1458
        %v1464 = vadd.f32 %v1450, %v1460
        %s1465 = sld [smem:[#allocation7 + $0x56]]
        %v1466 = vstv %s1465
        %v1467 = vmul.f32 %v1466, %v309
        %v1468 = vmul.f32 %v1466, %v310
        %1471 = vrot.lane.b32.xlu0 %v1467, 126
        %v1472 = vpop.permute.xlu0 %1471
        %1473 = vrot.lane.b32.xlu0 %v1468, 126
        %v1474 = vpop.permute.xlu0 %1473
        %v1477 = vadd.f32 %v1463, %v1472
        %v1478 = vadd.f32 %v1464, %v1474
        %s1479 = sld [smem:[#allocation7 + $0x5f]]
        %v1480 = vstv %s1479
        %v1481 = vmul.f32 %v1480, %v311
        %v1482 = vmul.f32 %v1480, %v312
        %1485 = vrot.lane.b32.xlu0 %v1481, 126
        %v1486 = vpop.permute.xlu0 %1485
        %1487 = vrot.lane.b32.xlu0 %v1482, 126
        %v1488 = vpop.permute.xlu0 %1487
        %v1491 = vadd.f32 %v1477, %v1486
        %v1492 = vadd.f32 %v1478, %v1488
        %s1493 = sld [smem:[#allocation7 + $0x68]]
        %v1494 = vstv %s1493
        %v1495 = vmul.f32 %v1494, %v313
        %v1496 = vmul.f32 %v1494, %v314
        %1499 = vrot.lane.b32.xlu0 %v1495, 126
        %v1500 = vpop.permute.xlu0 %1499
        %1501 = vrot.lane.b32.xlu0 %v1496, 126
        %v1502 = vpop.permute.xlu0 %1501
        %v1505 = vadd.f32 %v1491, %v1500
        %v1506 = vadd.f32 %v1492, %v1502
        %s1507 = sld [smem:[#allocation7 + $0x4e]]
        %v1508 = vstv %s1507
        %v1509 = vmul.f32 %v1508, %v315
        %v1510 = vmul.f32 %v1508, %v316
        %v1511 = vadd.f32 %v1505, %v1509
        %v1512 = vadd.f32 %v1506, %v1510
        %s1513 = sld [smem:[#allocation7 + $0x57]]
        %v1514 = vstv %s1513
        %v1515 = vmul.f32 %v1514, %v317
        %v1516 = vmul.f32 %v1514, %v318
        %v1517 = vadd.f32 %v1511, %v1515
        %v1518 = vadd.f32 %v1512, %v1516
        %s1519 = sld [smem:[#allocation7 + $0x60]]
        %v1520 = vstv %s1519
        %v1521 = vmul.f32 %v1520, %v319
        %v1522 = vmul.f32 %v1520, %v320
        %v1523 = vadd.f32 %v1517, %v1521
        %v1524 = vadd.f32 %v1518, %v1522
        %s1525 = sld [smem:[#allocation7 + $0x69]]
        %v1526 = vstv %s1525
        %v1527 = vmul.f32 %v1526, %v321
        %v1528 = vmul.f32 %v1526, %v322
        %v1529 = vadd.f32 %v1523, %v1527
        %v1530 = vadd.f32 %v1524, %v1528
        %s1531 = sld [smem:[#allocation7 + $0x4f]]
        %v1532 = vstv %s1531
        %v1533 = vmul.f32 %v1532, %v315
        %v1534 = vmul.f32 %v1532, %v316
        %1537 = vrot.lane.b32.xlu0 %v1533, 127
        %v1538 = vpop.permute.xlu0 %1537
        %1539 = vrot.lane.b32.xlu0 %v1534, 127
        %v1540 = vpop.permute.xlu0 %1539
        %v1543 = vadd.f32 %v1529, %v1538
        %v1544 = vadd.f32 %v1530, %v1540
        %s1545 = sld [smem:[#allocation7 + $0x58]]
        %v1546 = vstv %s1545
        %v1547 = vmul.f32 %v1546, %v317
        %v1548 = vmul.f32 %v1546, %v318
        %1551 = vrot.lane.b32.xlu0 %v1547, 127
        %v1552 = vpop.permute.xlu0 %1551
        %1553 = vrot.lane.b32.xlu0 %v1548, 127
        %v1554 = vpop.permute.xlu0 %1553
        %v1557 = vadd.f32 %v1543, %v1552
        %v1558 = vadd.f32 %v1544, %v1554
        %s1559 = sld [smem:[#allocation7 + $0x61]]
        %v1560 = vstv %s1559
        %v1561 = vmul.f32 %v1560, %v319
        %v1562 = vmul.f32 %v1560, %v320
        %1565 = vrot.lane.b32.xlu0 %v1561, 127
        %v1566 = vpop.permute.xlu0 %1565
        %1567 = vrot.lane.b32.xlu0 %v1562, 127
        %v1568 = vpop.permute.xlu0 %1567
        %v1571 = vadd.f32 %v1557, %v1566
        %v1572 = vadd.f32 %v1558, %v1568
        %s1573 = sld [smem:[#allocation7 + $0x6a]]
        %v1574 = vstv %s1573
        %v1575 = vmul.f32 %v1574, %v321
        %v1576 = vmul.f32 %v1574, %v322
        %1579 = vrot.lane.b32.xlu0 %v1575, 127
        %v1580 = vpop.permute.xlu0 %1579
        %1581 = vrot.lane.b32.xlu0 %v1576, 127
        %v1582 = vpop.permute.xlu0 %1581
        %v1585 = vadd.f32 %v1571, %v1580
        %v1586 = vadd.f32 %v1572, %v1582
        %s1587 = sld [smem:[#allocation7 + $0x50]]
        %v1588 = vstv %s1587
        %v1589 = vmul.f32 %v1588, %v315
        %v1590 = vmul.f32 %v1588, %v316
        %1593 = vrot.lane.b32.xlu0 %v1589, 126
        %v1594 = vpop.permute.xlu0 %1593
        %1595 = vrot.lane.b32.xlu0 %v1590, 126
        %v1596 = vpop.permute.xlu0 %1595
        %v1599 = vadd.f32 %v1585, %v1594
        %v1600 = vadd.f32 %v1586, %v1596
        %s1601 = sld [smem:[#allocation7 + $0x59]]
        %v1602 = vstv %s1601
        %v1603 = vmul.f32 %v1602, %v317
        %v1604 = vmul.f32 %v1602, %v318
        %1607 = vrot.lane.b32.xlu0 %v1603, 126
        %v1608 = vpop.permute.xlu0 %1607
        %1609 = vrot.lane.b32.xlu0 %v1604, 126
        %v1610 = vpop.permute.xlu0 %1609
        %v1613 = vadd.f32 %v1599, %v1608
        %v1614 = vadd.f32 %v1600, %v1610
        %s1615 = sld [smem:[#allocation7 + $0x62]]
        %v1616 = vstv %s1615
        %v1617 = vmul.f32 %v1616, %v319
        %v1618 = vmul.f32 %v1616, %v320
        %1621 = vrot.lane.b32.xlu0 %v1617, 126
        %v1622 = vpop.permute.xlu0 %1621
        %1623 = vrot.lane.b32.xlu0 %v1618, 126
        %v1624 = vpop.permute.xlu0 %1623
        %v1627 = vadd.f32 %v1613, %v1622
        %v1628 = vadd.f32 %v1614, %v1624
        %s1629 = sld [smem:[#allocation7 + $0x6b]]
        %v1630 = vstv %s1629
        %v1631 = vmul.f32 %v1630, %v321
        %v1632 = vmul.f32 %v1630, %v322
        %1635 = vrot.lane.b32.xlu0 %v1631, 126
        %v1636 = vpop.permute.xlu0 %1635
        %1637 = vrot.lane.b32.xlu0 %v1632, 126
        %v1638 = vpop.permute.xlu0 %1637
        %v1641 = vadd.f32 %v1627, %v1636
        %v1642 = vadd.f32 %v1628, %v1638
        %1645 = vrot.lane.b32.xlu0 %v311, 127
        %v1646 = vpop.permute.xlu0 %1645
        %1647 = vrot.lane.b32.xlu0 %v312, 127
        %v1648 = vpop.permute.xlu0 %1647
        %v1651 = vsub.f32 %v1641, %v1646
        %v1652 = vsub.f32 %v1642, %v1648
        %v1653 = vxor.u32 %v1651, 2147483648
        %v1654 = vxor.u32 %v1652, 2147483648
        %v1655 = vmul.f32 %v1653, 1.442695
        %v1656 = vpow.pop %v1655
        %v1657 = vmul.f32 %v1654, 1.442695
        %v1658 = vpow.pop %v1657
        %v1659 = vadd.f32 %v1656, 1.0
        %v1660 = vadd.f32 %v1658, 1.0
        %v1661 = vrcp.pop %v1659
        %v1662 = vmul.f32 1.0, %v1661
        %v1663 = vrcp.pop %v1660
        %v1664 = vmul.f32 1.0, %v1663
        %v1665 = vmul.f32 %v1662, %v1651
        %v1666 = vmul.f32 %v1664, %v1652
        %1669 = vrot.lane.b32.xlu0 %v1665, 1
        %v1670 = vpop.permute.xlu0 %1669
        %1671 = vrot.lane.b32.xlu0 %v1666, 1
        %v1672 = vpop.permute.xlu0 %1671
        %v1675 = vadd.f32 %v311, %v1670
        %v1676 = vadd.f32 %v312, %v1672
        %1679 = vrot.lane.b32.xlu0 %v1675, 127
        %v1680 = vpop.permute.xlu0 %1679
        %1681 = vrot.lane.b32.xlu0 %v1676, 127
        %v1682 = vpop.permute.xlu0 %1681
        %s1685 = scalar_lea.vmem %s233, 32 [#allocation10]
        %1686 = vst.msk [vmem:[%s1685] sm:$0xff] %vm775, %v1680
        %1687 = vst.msk [vmem:[%s1685 + $0x8] sm:$0xff] %vm775, %v1682
        %s1688 = sld [smem:[#allocation8 + $0x3]]
        %v1689 = vstv %s1688
        %s1690 = sld [smem:[#allocation7 + $0x6c]]
        %v1691 = vstv %s1690
        %v1692 = vmul.f32 %v1691, %v299
        %v1693 = vmul.f32 %v1691, %v300
        %v1694 = vadd.f32 %v1689, %v1692
        %v1695 = vadd.f32 %v1689, %v1693
        %s1696 = sld [smem:[#allocation7 + $0x75]]
        %v1697 = vstv %s1696
        %v1698 = vmul.f32 %v1697, %v301
        %v1699 = vmul.f32 %v1697, %v302
        %v1700 = vadd.f32 %v1694, %v1698
        %v1701 = vadd.f32 %v1695, %v1699
        %s1702 = sld [smem:[#allocation7 + $0x7e]]
        %v1703 = vstv %s1702
        %v1704 = vmul.f32 %v1703, %v303
        %v1705 = vmul.f32 %v1703, %v304
        %v1706 = vadd.f32 %v1700, %v1704
        %v1707 = vadd.f32 %v1701, %v1705
        %s1708 = sld [smem:[#allocation7 + $0x87]]
        %v1709 = vstv %s1708
        %v1710 = vmul.f32 %v1709, %v305
        %v1711 = vmul.f32 %v1709, %v306
        %v1712 = vadd.f32 %v1706, %v1710
        %v1713 = vadd.f32 %v1707, %v1711
        %s1714 = sld [smem:[#allocation7 + $0x6d]]
        %v1715 = vstv %s1714
        %v1716 = vmul.f32 %v1715, %v299
        %v1717 = vmul.f32 %v1715, %v300
        %1720 = vrot.lane.b32.xlu0 %v1716, 127
        %v1721 = vpop.permute.xlu0 %1720
        %1722 = vrot.lane.b32.xlu0 %v1717, 127
        %v1723 = vpop.permute.xlu0 %1722
        %v1726 = vadd.f32 %v1712, %v1721
        %v1727 = vadd.f32 %v1713, %v1723
        %s1728 = sld [smem:[#allocation7 + $0x76]]
        %v1729 = vstv %s1728
        %v1730 = vmul.f32 %v1729, %v301
        %v1731 = vmul.f32 %v1729, %v302
        %1734 = vrot.lane.b32.xlu0 %v1730, 127
        %v1735 = vpop.permute.xlu0 %1734
        %1736 = vrot.lane.b32.xlu0 %v1731, 127
        %v1737 = vpop.permute.xlu0 %1736
        %v1740 = vadd.f32 %v1726, %v1735
        %v1741 = vadd.f32 %v1727, %v1737
        %s1742 = sld [smem:[#allocation7 + $0x7f]]
        %v1743 = vstv %s1742
        %v1744 = vmul.f32 %v1743, %v303
        %v1745 = vmul.f32 %v1743, %v304
        %1748 = vrot.lane.b32.xlu0 %v1744, 127
        %v1749 = vpop.permute.xlu0 %1748
        %1750 = vrot.lane.b32.xlu0 %v1745, 127
        %v1751 = vpop.permute.xlu0 %1750
        %v1754 = vadd.f32 %v1740, %v1749
        %v1755 = vadd.f32 %v1741, %v1751
        %s1756 = sld [smem:[#allocation7 + $0x88]]
        %v1757 = vstv %s1756
        %v1758 = vmul.f32 %v1757, %v305
        %v1759 = vmul.f32 %v1757, %v306
        %1762 = vrot.lane.b32.xlu0 %v1758, 127
        %v1763 = vpop.permute.xlu0 %1762
        %1764 = vrot.lane.b32.xlu0 %v1759, 127
        %v1765 = vpop.permute.xlu0 %1764
        %v1768 = vadd.f32 %v1754, %v1763
        %v1769 = vadd.f32 %v1755, %v1765
        %s1770 = sld [smem:[#allocation7 + $0x6e]]
        %v1771 = vstv %s1770
        %v1772 = vmul.f32 %v1771, %v299
        %v1773 = vmul.f32 %v1771, %v300
        %1776 = vrot.lane.b32.xlu0 %v1772, 126
        %v1777 = vpop.permute.xlu0 %1776
        %1778 = vrot.lane.b32.xlu0 %v1773, 126
        %v1779 = vpop.permute.xlu0 %1778
        %v1782 = vadd.f32 %v1768, %v1777
        %v1783 = vadd.f32 %v1769, %v1779
        %s1784 = sld [smem:[#allocation7 + $0x77]]
        %v1785 = vstv %s1784
        %v1786 = vmul.f32 %v1785, %v301
        %v1787 = vmul.f32 %v1785, %v302
        %1790 = vrot.lane.b32.xlu0 %v1786, 126
        %v1791 = vpop.permute.xlu0 %1790
        %1792 = vrot.lane.b32.xlu0 %v1787, 126
        %v1793 = vpop.permute.xlu0 %1792
        %v1796 = vadd.f32 %v1782, %v1791
        %v1797 = vadd.f32 %v1783, %v1793
        %s1798 = sld [smem:[#allocation7 + $0x80]]
        %v1799 = vstv %s1798
        %v1800 = vmul.f32 %v1799, %v303
        %v1801 = vmul.f32 %v1799, %v304
        %1804 = vrot.lane.b32.xlu0 %v1800, 126
        %v1805 = vpop.permute.xlu0 %1804
        %1806 = vrot.lane.b32.xlu0 %v1801, 126
        %v1807 = vpop.permute.xlu0 %1806
        %v1810 = vadd.f32 %v1796, %v1805
        %v1811 = vadd.f32 %v1797, %v1807
        %s1812 = sld [smem:[#allocation7 + $0x89]]
        %v1813 = vstv %s1812
        %v1814 = vmul.f32 %v1813, %v305
        %v1815 = vmul.f32 %v1813, %v306
        %1818 = vrot.lane.b32.xlu0 %v1814, 126
        %v1819 = vpop.permute.xlu0 %1818
        %1820 = vrot.lane.b32.xlu0 %v1815, 126
        %v1821 = vpop.permute.xlu0 %1820
        %v1824 = vadd.f32 %v1810, %v1819
        %v1825 = vadd.f32 %v1811, %v1821
        %s1826 = sld [smem:[#allocation7 + $0x6f]]
        %v1827 = vstv %s1826
        %v1828 = vmul.f32 %v1827, %v307
        %v1829 = vmul.f32 %v1827, %v308
        %v1830 = vadd.f32 %v1824, %v1828
        %v1831 = vadd.f32 %v1825, %v1829
        %s1832 = sld [smem:[#allocation7 + $0x78]]
        %v1833 = vstv %s1832
        %v1834 = vmul.f32 %v1833, %v309
        %v1835 = vmul.f32 %v1833, %v310
        %v1836 = vadd.f32 %v1830, %v1834
        %v1837 = vadd.f32 %v1831, %v1835
        %s1838 = sld [smem:[#allocation7 + $0x81]]
        %v1839 = vstv %s1838
        %v1840 = vmul.f32 %v1839, %v311
        %v1841 = vmul.f32 %v1839, %v312
        %v1842 = vadd.f32 %v1836, %v1840
        %v1843 = vadd.f32 %v1837, %v1841
        %s1844 = sld [smem:[#allocation7 + $0x8a]]
        %v1845 = vstv %s1844
        %v1846 = vmul.f32 %v1845, %v313
        %v1847 = vmul.f32 %v1845, %v314
        %v1848 = vadd.f32 %v1842, %v1846
        %v1849 = vadd.f32 %v1843, %v1847
        %s1850 = sld [smem:[#allocation7 + $0x70]]
        %v1851 = vstv %s1850
        %v1852 = vmul.f32 %v1851, %v307
        %v1853 = vmul.f32 %v1851, %v308
        %1856 = vrot.lane.b32.xlu0 %v1852, 127
        %v1857 = vpop.permute.xlu0 %1856
        %1858 = vrot.lane.b32.xlu0 %v1853, 127
        %v1859 = vpop.permute.xlu0 %1858
        %v1862 = vadd.f32 %v1848, %v1857
        %v1863 = vadd.f32 %v1849, %v1859
        %s1864 = sld [smem:[#allocation7 + $0x79]]
        %v1865 = vstv %s1864
        %v1866 = vmul.f32 %v1865, %v309
        %v1867 = vmul.f32 %v1865, %v310
        %1870 = vrot.lane.b32.xlu0 %v1866, 127
        %v1871 = vpop.permute.xlu0 %1870
        %1872 = vrot.lane.b32.xlu0 %v1867, 127
        %v1873 = vpop.permute.xlu0 %1872
        %v1876 = vadd.f32 %v1862, %v1871
        %v1877 = vadd.f32 %v1863, %v1873
        %s1878 = sld [smem:[#allocation7 + $0x82]]
        %v1879 = vstv %s1878
        %v1880 = vmul.f32 %v1879, %v311
        %v1881 = vmul.f32 %v1879, %v312
        %1884 = vrot.lane.b32.xlu0 %v1880, 127
        %v1885 = vpop.permute.xlu0 %1884
        %1886 = vrot.lane.b32.xlu0 %v1881, 127
        %v1887 = vpop.permute.xlu0 %1886
        %v1890 = vadd.f32 %v1876, %v1885
        %v1891 = vadd.f32 %v1877, %v1887
        %s1892 = sld [smem:[#allocation7 + $0x8b]]
        %v1893 = vstv %s1892
        %v1894 = vmul.f32 %v1893, %v313
        %v1895 = vmul.f32 %v1893, %v314
        %1898 = vrot.lane.b32.xlu0 %v1894, 127
        %v1899 = vpop.permute.xlu0 %1898
        %1900 = vrot.lane.b32.xlu0 %v1895, 127
        %v1901 = vpop.permute.xlu0 %1900
        %v1904 = vadd.f32 %v1890, %v1899
        %v1905 = vadd.f32 %v1891, %v1901
        %s1906 = sld [smem:[#allocation7 + $0x71]]
        %v1907 = vstv %s1906
        %v1908 = vmul.f32 %v1907, %v307
        %v1909 = vmul.f32 %v1907, %v308
        %1912 = vrot.lane.b32.xlu0 %v1908, 126
        %v1913 = vpop.permute.xlu0 %1912
        %1914 = vrot.lane.b32.xlu0 %v1909, 126
        %v1915 = vpop.permute.xlu0 %1914
        %v1918 = vadd.f32 %v1904, %v1913
        %v1919 = vadd.f32 %v1905, %v1915
        %s1920 = sld [smem:[#allocation7 + $0x7a]]
        %v1921 = vstv %s1920
        %v1922 = vmul.f32 %v1921, %v309
        %v1923 = vmul.f32 %v1921, %v310
        %1926 = vrot.lane.b32.xlu0 %v1922, 126
        %v1927 = vpop.permute.xlu0 %1926
        %1928 = vrot.lane.b32.xlu0 %v1923, 126
        %v1929 = vpop.permute.xlu0 %1928
        %v1932 = vadd.f32 %v1918, %v1927
        %v1933 = vadd.f32 %v1919, %v1929
        %s1934 = sld [smem:[#allocation7 + $0x83]]
        %v1935 = vstv %s1934
        %v1936 = vmul.f32 %v1935, %v311
        %v1937 = vmul.f32 %v1935, %v312
        %1940 = vrot.lane.b32.xlu0 %v1936, 126
        %v1941 = vpop.permute.xlu0 %1940
        %1942 = vrot.lane.b32.xlu0 %v1937, 126
        %v1943 = vpop.permute.xlu0 %1942
        %v1946 = vadd.f32 %v1932, %v1941
        %v1947 = vadd.f32 %v1933, %v1943
        %s1948 = sld [smem:[#allocation7 + $0x8c]]
        %v1949 = vstv %s1948
        %v1950 = vmul.f32 %v1949, %v313
        %v1951 = vmul.f32 %v1949, %v314
        %1954 = vrot.lane.b32.xlu0 %v1950, 126
        %v1955 = vpop.permute.xlu0 %1954
        %1956 = vrot.lane.b32.xlu0 %v1951, 126
        %v1957 = vpop.permute.xlu0 %1956
        %v1960 = vadd.f32 %v1946, %v1955
        %v1961 = vadd.f32 %v1947, %v1957
        %s1962 = sld [smem:[#allocation7 + $0x72]]
        %v1963 = vstv %s1962
        %v1964 = vmul.f32 %v1963, %v315
        %v1965 = vmul.f32 %v1963, %v316
        %v1966 = vadd.f32 %v1960, %v1964
        %v1967 = vadd.f32 %v1961, %v1965
        %s1968 = sld [smem:[#allocation7 + $0x7b]]
        %v1969 = vstv %s1968
        %v1970 = vmul.f32 %v1969, %v317
        %v1971 = vmul.f32 %v1969, %v318
        %v1972 = vadd.f32 %v1966, %v1970
        %v1973 = vadd.f32 %v1967, %v1971
        %s1974 = sld [smem:[#allocation7 + $0x84]]
        %v1975 = vstv %s1974
        %v1976 = vmul.f32 %v1975, %v319
        %v1977 = vmul.f32 %v1975, %v320
        %v1978 = vadd.f32 %v1972, %v1976
        %v1979 = vadd.f32 %v1973, %v1977
        %s1980 = sld [smem:[#allocation7 + $0x8d]]
        %v1981 = vstv %s1980
        %v1982 = vmul.f32 %v1981, %v321
        %v1983 = vmul.f32 %v1981, %v322
        %v1984 = vadd.f32 %v1978, %v1982
        %v1985 = vadd.f32 %v1979, %v1983
        %s1986 = sld [smem:[#allocation7 + $0x73]]
        %v1987 = vstv %s1986
        %v1988 = vmul.f32 %v1987, %v315
        %v1989 = vmul.f32 %v1987, %v316
        %1992 = vrot.lane.b32.xlu0 %v1988, 127
        %v1993 = vpop.permute.xlu0 %1992
        %1994 = vrot.lane.b32.xlu0 %v1989, 127
        %v1995 = vpop.permute.xlu0 %1994
        %v1998 = vadd.f32 %v1984, %v1993
        %v1999 = vadd.f32 %v1985, %v1995
        %s2000 = sld [smem:[#allocation7 + $0x7c]]
        %v2001 = vstv %s2000
        %v2002 = vmul.f32 %v2001, %v317
        %v2003 = vmul.f32 %v2001, %v318
        %2006 = vrot.lane.b32.xlu0 %v2002, 127
        %v2007 = vpop.permute.xlu0 %2006
        %2008 = vrot.lane.b32.xlu0 %v2003, 127
        %v2009 = vpop.permute.xlu0 %2008
        %v2012 = vadd.f32 %v1998, %v2007
        %v2013 = vadd.f32 %v1999, %v2009
        %s2014 = sld [smem:[#allocation7 + $0x85]]
        %v2015 = vstv %s2014
        %v2016 = vmul.f32 %v2015, %v319
        %v2017 = vmul.f32 %v2015, %v320
        %2020 = vrot.lane.b32.xlu0 %v2016, 127
        %v2021 = vpop.permute.xlu0 %2020
        %2022 = vrot.lane.b32.xlu0 %v2017, 127
        %v2023 = vpop.permute.xlu0 %2022
        %v2026 = vadd.f32 %v2012, %v2021
        %v2027 = vadd.f32 %v2013, %v2023
        %s2028 = sld [smem:[#allocation7 + $0x8e]]
        %v2029 = vstv %s2028
        %v2030 = vmul.f32 %v2029, %v321
        %v2031 = vmul.f32 %v2029, %v322
        %2034 = vrot.lane.b32.xlu0 %v2030, 127
        %v2035 = vpop.permute.xlu0 %2034
        %2036 = vrot.lane.b32.xlu0 %v2031, 127
        %v2037 = vpop.permute.xlu0 %2036
        %v2040 = vadd.f32 %v2026, %v2035
        %v2041 = vadd.f32 %v2027, %v2037
        %s2042 = sld [smem:[#allocation7 + $0x74]]
        %v2043 = vstv %s2042
        %v2044 = vmul.f32 %v2043, %v315
        %v2045 = vmul.f32 %v2043, %v316
        %2048 = vrot.lane.b32.xlu0 %v2044, 126
        %v2049 = vpop.permute.xlu0 %2048
        %2050 = vrot.lane.b32.xlu0 %v2045, 126
        %v2051 = vpop.permute.xlu0 %2050
        %v2054 = vadd.f32 %v2040, %v2049
        %v2055 = vadd.f32 %v2041, %v2051
        %s2056 = sld [smem:[#allocation7 + $0x7d]]
        %v2057 = vstv %s2056
        %v2058 = vmul.f32 %v2057, %v317
        %v2059 = vmul.f32 %v2057, %v318
        %2062 = vrot.lane.b32.xlu0 %v2058, 126
        %v2063 = vpop.permute.xlu0 %2062
        %2064 = vrot.lane.b32.xlu0 %v2059, 126
        %v2065 = vpop.permute.xlu0 %2064
        %v2068 = vadd.f32 %v2054, %v2063
        %v2069 = vadd.f32 %v2055, %v2065
        %s2070 = sld [smem:[#allocation7 + $0x86]]
        %v2071 = vstv %s2070
        %v2072 = vmul.f32 %v2071, %v319
        %v2073 = vmul.f32 %v2071, %v320
        %2076 = vrot.lane.b32.xlu0 %v2072, 126
        %v2077 = vpop.permute.xlu0 %2076
        %2078 = vrot.lane.b32.xlu0 %v2073, 126
        %v2079 = vpop.permute.xlu0 %2078
        %v2082 = vadd.f32 %v2068, %v2077
        %v2083 = vadd.f32 %v2069, %v2079
        %s2084 = sld [smem:[#allocation7 + $0x8f]]
        %v2085 = vstv %s2084
        %v2086 = vmul.f32 %v2085, %v321
        %v2087 = vmul.f32 %v2085, %v322
        %2090 = vrot.lane.b32.xlu0 %v2086, 126
        %v2091 = vpop.permute.xlu0 %2090
        %2092 = vrot.lane.b32.xlu0 %v2087, 126
        %v2093 = vpop.permute.xlu0 %2092
        %v2096 = vadd.f32 %v2082, %v2091
        %v2097 = vadd.f32 %v2083, %v2093
        %2100 = vrot.lane.b32.xlu0 %v313, 127
        %v2101 = vpop.permute.xlu0 %2100
        %2102 = vrot.lane.b32.xlu0 %v314, 127
        %v2103 = vpop.permute.xlu0 %2102
        %v2106 = vsub.f32 %v2096, %v2101
        %v2107 = vsub.f32 %v2097, %v2103
        %v2108 = vxor.u32 %v2106, 2147483648
        %v2109 = vxor.u32 %v2107, 2147483648
        %v2110 = vmul.f32 %v2108, 1.442695
        %v2111 = vpow.pop %v2110
        %v2112 = vmul.f32 %v2109, 1.442695
        %v2113 = vpow.pop %v2112
        %v2114 = vadd.f32 %v2111, 1.0
        %v2115 = vadd.f32 %v2113, 1.0
        %v2116 = vrcp.pop %v2114
        %v2117 = vmul.f32 1.0, %v2116
        %v2118 = vrcp.pop %v2115
        %v2119 = vmul.f32 1.0, %v2118
        %v2120 = vmul.f32 %v2117, %v2106
        %v2121 = vmul.f32 %v2119, %v2107
        %2124 = vrot.lane.b32.xlu0 %v2120, 1
        %v2125 = vpop.permute.xlu0 %2124
        %2126 = vrot.lane.b32.xlu0 %v2121, 1
        %v2127 = vpop.permute.xlu0 %2126
        %v2130 = vadd.f32 %v313, %v2125
        %v2131 = vadd.f32 %v314, %v2127
        %2134 = vrot.lane.b32.xlu0 %v2130, 127
        %v2135 = vpop.permute.xlu0 %2134
        %2136 = vrot.lane.b32.xlu0 %v2131, 127
        %v2137 = vpop.permute.xlu0 %2136
        %s2140 = scalar_lea.vmem %s233, 48 [#allocation10]
        %2141 = vst.msk [vmem:[%s2140] sm:$0xff] %vm775, %v2135
        %2142 = vst.msk [vmem:[%s2140 + $0x8] sm:$0xff] %vm775, %v2137
        %s2143 = sand.u32 %s114, 1
        %s2144 = scalar_lea.sflag [#allocation5], %s2143
        %s2145 = sand.u32 %s114, 1
        %s2146 = smul.addr %s2145, 64
        %s2147 = scalar_lea.vmem [#allocation10], %s2146
        // Predicated region
        $region45: #{tpu_custom_call.1} parent=31 // pred_check
          %p2148 = pneg %p124
        $region46: #{tpu_custom_call.1} parent=31 // pred_check_branch
          %2150 = sbr.rel (%p2148) target = $region48
        $region47: #{tpu_custom_call.1} parent=31 // pred_region
          %s2151 = smul.u32 2, %s27
          %s2153 = ssub.s32 1024, 1024
          %2154 = vsyncadd %s2144, %s2153
          %s2155 = smul.addr %s26, 8
          %s2156 = sadd.s32 %s2151, %s2155
          %s2157 = smul.addr %s2156, 128
          %s2158 = scalar_lea.hbm %s3, %s2157
          %s2159 = sshll.u32 %s2147, 4
          %s2160 = int_to_ptr.vmem [resolvable:$true] %s2159
          %2165 = dma.vmem_to_hbm [thread:$0]  %s2160, 1024, %s2158, %s2144, 128, 128, 8
        $region48: #{tpu_custom_call.1} parent=31 // pred_fallthru
          _
      $region32: #{tpu_custom_call.1} parent=5 // pred_fallthru
        _
      %p2166 = scmp.le.s32.totalorder 2, %s17
      // Predicated region
      $region49: #{tpu_custom_call.1} parent=5 // pred_check
        %p2167 = pneg %p2166
      $region50: #{tpu_custom_call.1} parent=5 // pred_check_branch
        %2169 = sbr.rel (%p2167) target = $region52
      $region51: #{tpu_custom_call.1} parent=5 // pred_region
        %s2170 = ssub.s32 %s17, 2
        // Predicated region
        $region53: #{tpu_custom_call.1} parent=51 // pred_check
          %p2171 = pneg %p130
        $region54: #{tpu_custom_call.1} parent=51 // pred_check_branch
          %2173 = sbr.rel (%p2171) target = $region56
        $region55: #{tpu_custom_call.1} parent=51 // pred_region
          %s2174 = sand.u32 %s115, 1
          %s2175 = scalar_lea.sflag [#allocation5], %s2174
          %s2176 = sand.u32 %s115, 1
          %s2177 = smul.addr %s2176, 64
          %s2178 = scalar_lea.vmem [#allocation10], %s2177
          %2179 = dma.done %s2175, 1024
        $region56: #{tpu_custom_call.1} parent=51 // pred_fallthru
          _
      $region52: #{tpu_custom_call.1} parent=5 // pred_fallthru
        _
    $region6: #{tpu_custom_call.1} parent=1 // loop_footer
      %s21 = sadd.s32 1, %s17
    $region7: #{tpu_custom_call.1} parent=1 // loop_footer_branch
      %16 = sbr.rel target = $region3
    $region8: #{tpu_custom_call.1} parent=1 // loop_exit
      _
    %2180 = vsyncpa [#allocation4], 1
    %s2181 = scalar_lea.sflag [#allocation4], 1
    %2182 = vsyncpa %s2181, 1
    %2183 = vsyncpa [#allocation5], 1
    %s2184 = scalar_lea.sflag [#allocation5], 1
    %2185 = vsyncpa %s2184, 1
    %2186 = vsyncpa [#allocation6], 1
    %s2187 = scalar_lea.sflag [#allocation6], 1
    %2188 = vsyncpa %s2187, 1
    %2189 = vsyncpa [#allocation9], 1

</llo_original>
